<compile_context>
chip_gen: v7x
topology: tpu7x:2x2x1
jax: 0.10.0
libtpu: 0.0.40
codegen_flags: <defaults>
</compile_context>

<pallas_src>
import numpy as np
import jax
import jax.numpy as jnp
from jax.experimental import pallas as pl
from jax.experimental.pallas import tpu as pltpu

# ----------------------------- config ---------------------------------------
BATCH = 2
IMG_C, IMG_H, IMG_W = 3, 16, 16
LATENT_DIM = 16
HIDDEN_DIM = 32            # small stand-in for the default 256
ACTION_DIM = 4
TCP_POS = 3                # robot_obs position dims
TARGET_POS = 3             # detected_target_pos dims
DIST = 1                   # target_distance dims

CONV1_OUT, CONV2_OUT = 8, 16
OH1 = (IMG_H + 2 - 3) // 2 + 1                 # 8
OW1 = (IMG_W + 2 - 3) // 2 + 1                 # 8
OH2 = (OH1 + 2 - 3) // 2 + 1                   # 4
OW2 = (OW1 + 2 - 3) // 2 + 1                   # 4
IMG_FLAT = IMG_C * IMG_H * IMG_W               # 768
CONV1_FLAT = OH1 * OW1 * CONV1_OUT             # 512
CONV2_FLAT = OH2 * OW2 * CONV2_OUT             # 256

OUT_FEAT = 2 * LATENT_DIM + TCP_POS + TARGET_POS + DIST     # 39
FA_DIM = OUT_FEAT + ACTION_DIM                               # 43
OUT_SIZE = HIDDEN_DIM + FA_DIM                               # 75 (rows of fc1..3)
OBS_DIM = TCP_POS + TARGET_POS + DIST + ACTION_DIM           # 11
OBS_PAD = 16                                                 # contraction dim pad


# ----------------------------- shared math -----------------------------------
def _elu(z):
    # ELU (alpha=1); exp argument clamped so the dead where-branch can't overflow.
    return jnp.where(z > 0, z, jnp.exp(jnp.minimum(z, 0.0)) - 1.0)


# ----------------------------- fused kernel ----------------------------------
def _fused_critic_kernel(img_ref, obs_ref,
                         ew1_ref, eb1_ref, ew2_ref, eb2_ref, ewfc_ref, ebfc_ref,
                         w0s_ref, w0g_ref, w0o_ref, b0_ref,
                         w1x_ref, w1s_ref, w1g_ref, w1o_ref, b1_ref,
                         w2x_ref, w2s_ref, w2g_ref, w2o_ref, b2_ref,
                         w3x_ref, w3s_ref, w3g_ref, w3o_ref, b3_ref,
                         wq_ref, bq_ref,
                         o_ref):
    f32 = jnp.float32

    def dot(a, b):
        return jnp.dot(a, b, preferred_element_type=f32)

    # --- image encoders (static, gripper): convs folded into dense GEMMs -----
    lats = []
    for c in range(2):
        x = img_ref[c]                                               # (B, 768)
        h1 = jnp.maximum(dot(x, ew1_ref[c]) + eb1_ref[c], 0.0)       # (B, 512)
        h2 = jnp.maximum(dot(h1, ew2_ref[c]) + eb2_ref[c], 0.0)      # (B, 256)
        lats.append(jnp.maximum(dot(h2, ewfc_ref[c]) + ebfc_ref[c], 0.0))  # (B,16)
    lat_s, lat_g = lats
    obs = obs_ref[...]                                               # (B, 16)

    # --- residual-concat MLP ---------------------------------------------------
    # cat([x, fa]) @ W == x @ Wx + lat_s @ Ws + lat_g @ Wg + obs @ Wo
    def fa_term(ws, wg, wo, b):
        return dot(lat_s, ws[...]) + dot(lat_g, wg[...]) + dot(obs, wo[...]) + b[...]

    x = _elu(fa_term(w0s_ref, w0g_ref, w0o_ref, b0_ref))
    x = _elu(dot(x, w1x_ref[...]) + fa_term(w1s_ref, w1g_ref, w1o_ref, b1_ref))
    x = _elu(dot(x, w2x_ref[...]) + fa_term(w2s_ref, w2g_ref, w2o_ref, b2_ref))
    x = _elu(dot(x, w3x_ref[...]) + fa_term(w3s_ref, w3g_ref, w3o_ref, b3_ref))

    # --- q head: N=1, use a lane reduction instead of an MXU pass -------------
    q = jnp.sum(x * wq_ref[...], axis=-1, keepdims=True) + bq_ref[...]
    o_ref[...] = q.astype(o_ref.dtype)


# ---------------- host-side, one-time parameter preparation ------------------
def conv_to_dense(w_patch, cin, cout, h, w, k=3, stride=2, pad=1,
                  input_order="chw"):
    """Unroll a conv into the equivalent dense matrix on the flattened image.

    w_patch: (k*k*cin, cout), row index (ki*k + kj)*cin + ci  (im2col order).
    input_order 'chw': flat input index ci*h*w + y*w + x (NCHW per-image flatten)
    input_order 'hwc': flat input index (y*w + x)*cin + ci
    Output flat index: (oy*OW + ox)*cout + co  (HWC order).
    """
    kk = np.asarray(w_patch, np.float32).reshape(k, k, cin, cout)
    oh = (h + 2 * pad - k) // stride + 1
    ow = (w + 2 * pad - k) // stride + 1
    m = np.zeros((h * w * cin, oh * ow * cout), np.float32)
    for oy in range(oh):
        for ox in range(ow):
            col = (oy * ow + ox) * cout
            for ki in range(k):
                y = oy * stride + ki - pad
                if not (0 <= y < h):
                    continue
                for kj in range(k):
                    xx = ox * stride + kj - pad
                    if not (0 <= xx < w):
                        continue
                    for ci in range(cin):
                        if input_order == "chw":
                            row = ci * h * w + y * w + xx
                        else:
                            row = (y * w + xx) * cin + ci
                        m[row, col:col + cout] += kk[ki, kj, ci]
    return m, oh, ow


def prepare_fused_params(params):
    """Fold each encoder's convs into dense matrices, split the MLP weights
    into their [x | lat_static | lat_gripper | obs] row blocks (obs block
    zero-padded to 16 rows), stack the two cameras.  Runs once at init time."""
    def encoder(p):
        w1, oh1, ow1 = conv_to_dense(p["w_c1"], IMG_C, CONV1_OUT, IMG_H, IMG_W,
                                     input_order="chw")
        w2, oh2, ow2 = conv_to_dense(p["w_c2"], CONV1_OUT, CONV2_OUT, oh1, ow1,
                                     input_order="hwc")
        b1 = np.tile(np.asarray(p["b_c1"], np.float32), oh1 * ow1)[None, :]
        b2 = np.tile(np.asarray(p["b_c2"], np.float32), oh2 * ow2)[None, :]
        wfc = np.asarray(p["w_fc"], np.float32)
        bfc = np.asarray(p["b_fc"], np.float32)[None, :]
        return w1, b1, w2, b2, wfc, bfc

    enc_s = encoder(params["cnn_img"])
    enc_g = encoder(params["cnn_gripper"])
    ew1, eb1, ew2, eb2, ewfc, ebfc = [
        jnp.asarray(np.stack([a, b], axis=0)) for a, b in zip(enc_s, enc_g)]

    def pad_rows(w, rows):
        w = np.asarray(w, np.float32)
        out = np.zeros((rows, w.shape[1]), np.float32)
        out[: w.shape[0]] = w
        return jnp.asarray(out)

    m = params["mlp"]
    w0 = np.asarray(m["w0"], np.float32)                 # (43, 32)
    fused = {
        "ew1": ew1, "eb1": eb1, "ew2": ew2, "eb2": eb2,
        "ewfc": ewfc, "ebfc": ebfc,
        "w0s": jnp.asarray(w0[:LATENT_DIM]),
        "w0g": jnp.asarray(w0[LATENT_DIM:2 * LATENT_DIM]),
        "w0o": pad_rows(w0[2 * LATENT_DIM:], OBS_PAD),
        "b0": jnp.asarray(m["b0"])[None, :],
        "wq": jnp.asarray(m["wq"]).reshape(1, HIDDEN_DIM),
        "bq": jnp.asarray(m["bq"]).reshape(1, 1),
    }
    for i in (1, 2, 3):
        w = np.asarray(m[f"w{i}"], np.float32)           # (75, 32)
        fused[f"w{i}x"] = jnp.asarray(w[:HIDDEN_DIM])
        fused[f"w{i}s"] = jnp.asarray(w[HIDDEN_DIM:HIDDEN_DIM + LATENT_DIM])
        fused[f"w{i}g"] = jnp.asarray(
            w[HIDDEN_DIM + LATENT_DIM:HIDDEN_DIM + 2 * LATENT_DIM])
        fused[f"w{i}o"] = pad_rows(w[HIDDEN_DIM + 2 * LATENT_DIM:], OBS_PAD)
        fused[f"b{i}"] = jnp.asarray(m[f"b{i}"])[None, :]
    return fused


# ----------------------------- forward (Pallas) -------------------------------
def cnn_critic_res_forward(fused, states, actions):
    b = actions.shape[0]
    # Flatten both camera images (NCHW per-image flatten -- the dense conv1
    # matrix was built for exactly this ordering) and stack cameras.
    imgs = jnp.stack([states["rgb_static"].reshape(b, -1),
                      states["rgb_gripper"].reshape(b, -1)],
                     axis=0).astype(jnp.float32)                    # (2, B, 768)
    # Proprioceptive / action part of fa (input plumbing only), padded to 16.
    obs = jnp.concatenate(
        [states["robot_obs"], states["detected_target_pos"],
         states["target_distance"], actions,
         jnp.zeros((b, OBS_PAD - OBS_DIM), jnp.float32)],
        axis=-1).astype(jnp.float32)                                # (B, 16)

    args = (imgs, obs,
            fused["ew1"], fused["eb1"], fused["ew2"], fused["eb2"],
            fused["ewfc"], fused["ebfc"],
            fused["w0s"], fused["w0g"], fused["w0o"], fused["b0"],
            fused["w1x"], fused["w1s"], fused["w1g"], fused["w1o"], fused["b1"],
            fused["w2x"], fused["w2s"], fused["w2g"], fused["w2o"], fused["b2"],
            fused["w3x"], fused["w3s"], fused["w3g"], fused["w3o"], fused["b3"],
            fused["wq"], fused["bq"])

    flops = 2 * b * (2 * (IMG_FLAT * CONV1_FLAT + CONV1_FLAT * CONV2_FLAT
                          + CONV2_FLAT * LATENT_DIM)
                     + 4 * (2 * LATENT_DIM + OBS_PAD) * HIDDEN_DIM
                     + 3 * HIDDEN_DIM * HIDDEN_DIM
                     + HIDDEN_DIM)
    bytes_accessed = sum(int(a.size) * a.dtype.itemsize for a in args) + b * 4

    out = pl.pallas_call(
        _fused_critic_kernel,
        out_shape=jax.ShapeDtypeStruct((b, 1), jnp.float32),
        in_specs=[pl.BlockSpec(memory_space=pltpu.MemorySpace.VMEM)] * len(args),
        out_specs=pl.BlockSpec(memory_space=pltpu.MemorySpace.VMEM),
        cost_estimate=pl.CostEstimate(flops=int(flops),
                                      transcendentals=4 * b * HIDDEN_DIM,
                                      bytes_accessed=int(bytes_accessed)),
    )(*args)
    return jnp.squeeze(out, axis=-1)                    # torch .squeeze() -> (B,)


# ----------------------- pure-JAX reference (unfused) -------------------------
def _im2col(x_nhwc, k, stride, pad):
    b, h, w, c = x_nhwc.shape
    xp = jnp.pad(x_nhwc, ((0, 0), (pad, pad), (pad, pad), (0, 0)))
    oh = (h + 2 * pad - k) // stride + 1
    ow = (w + 2 * pad - k) // stride + 1
    cols = []
    for i in range(k):
        for j in range(k):
            cols.append(xp[:, i:i + stride * oh:stride,
                           j:j + stride * ow:stride, :])
    patches = jnp.concatenate(cols, axis=-1)            # (B, OH, OW, k*k*C)
    return patches.reshape(b * oh * ow, k * k * c), oh, ow


def _ref_encoder(x_nchw, p):
    b = x_nchw.shape[0]
    x = jnp.transpose(x_nchw, (0, 2, 3, 1))             # NCHW -> NHWC
    pc, oh, ow = _im2col(x, 3, 2, 1)
    h = jnp.maximum(pc @ p["w_c1"] + p["b_c1"], 0.0).reshape(b, oh, ow, -1)
    pc2, oh2, ow2 = _im2col(h, 3, 2, 1)
    h2 = jnp.maximum(pc2 @ p["w_c2"] + p["b_c2"], 0.0).reshape(b, oh2, ow2, -1)
    return jnp.maximum(h2.reshape(b, -1) @ p["w_fc"] + p["b_fc"], 0.0)


def reference_forward(params, states, actions):
    lat_s = _ref_encoder(states["rgb_static"], params["cnn_img"])
    lat_g = _ref_encoder(states["rgb_gripper"], params["cnn_gripper"])
    features = jnp.concatenate(
        [lat_s, lat_g, states["robot_obs"], states["detected_target_pos"],
         states["target_distance"]], axis=-1)
    fa = jnp.concatenate([features, actions], axis=-1)
    p = params["mlp"]
    x = _elu(fa @ p["w0"] + p["b0"])
    x = _elu(jnp.concatenate([x, fa], -1) @ p["w1"] + p["b1"])
    x = _elu(jnp.concatenate([x, fa], -1) @ p["w2"] + p["b2"])
    x = _elu(jnp.concatenate([x, fa], -1) @ p["w3"] + p["b3"])
    return jnp.squeeze(x @ p["wq"] + p["bq"])


# ----------------------- deterministic params ---------------------------------
def init_params(key):
    def nrm(k, shape, scale=0.1):
        return (scale * jax.random.normal(k, shape)).astype(jnp.float32)

    keys = iter(jax.random.split(key, 32))

    def encoder_params():
        return {
            "w_c1": nrm(next(keys), (3 * 3 * IMG_C, CONV1_OUT)),
            "b_c1": nrm(next(keys), (CONV1_OUT,)),
            "w_c2": nrm(next(keys), (3 * 3 * CONV1_OUT, CONV2_OUT)),
            "b_c2": nrm(next(keys), (CONV2_OUT,)),
            "w_fc": nrm(next(keys), (CONV2_FLAT, LATENT_DIM)),
            "b_fc": nrm(next(keys), (LATENT_DIM,)),
        }

    mlp = {
        "w0": nrm(next(keys), (FA_DIM, HIDDEN_DIM)),
        "b0": nrm(next(keys), (HIDDEN_DIM,)),
        "w1": nrm(next(keys), (OUT_SIZE, HIDDEN_DIM)),
        "b1": nrm(next(keys), (HIDDEN_DIM,)),
        "w2": nrm(next(keys), (OUT_SIZE, HIDDEN_DIM)),
        "b2": nrm(next(keys), (HIDDEN_DIM,)),
        "w3": nrm(next(keys), (OUT_SIZE, HIDDEN_DIM)),
        "b3": nrm(next(keys), (HIDDEN_DIM,)),
        "wq": nrm(next(keys), (HIDDEN_DIM, 1)),
        "bq": nrm(next(keys), (1,)),
    }
    return {"cnn_img": encoder_params(),
            "cnn_gripper": encoder_params(),
            "mlp": mlp}


# ----------------------------- main -------------------------------------------
if __name__ == "__main__":
    key = jax.random.PRNGKey(0)
    kp, k1, k2, k3, k4, k5, k6 = jax.random.split(key, 7)
    params = init_params(kp)
    fused_params = prepare_fused_params(params)          # one-time host-side fold

    states = {
        "rgb_static": jax.random.normal(k1, (BATCH, IMG_C, IMG_H, IMG_W), jnp.float32),
        "rgb_gripper": jax.random.normal(k2, (BATCH, IMG_C, IMG_H, IMG_W), jnp.float32),
        "robot_obs": jax.random.normal(k3, (BATCH, TCP_POS), jnp.float32),
        "detected_target_pos": jax.random.normal(k4, (BATCH, TARGET_POS), jnp.float32),
        "target_distance": jax.random.normal(k5, (BATCH, DIST), jnp.float32),
    }
    actions = jax.random.normal(k6, (BATCH, ACTION_DIM), jnp.float32)

    q = jax.block_until_ready(cnn_critic_res_forward(fused_params, states, actions))
    q_ref = jax.block_until_ready(reference_forward(params, states, actions))

    assert q.shape == (BATCH,), q.shape
    # Kernel and reference perform identical products; only accumulation order
    # (and MXU bf16-pass rounding of intermediates) differs -> loose tolerance.
    assert jnp.allclose(q, q_ref, atol=2e-3, rtol=2e-3), (q, q_ref)
    print("KERNEL_OK")
</pallas_src>

<mosaic_0001>
module attributes {stable_mosaic.version = 11 : i64} {
  func.func @_fused_critic_kernel(%arg0: memref<2x2x768xf32, #tpu.memory_space<vmem>>, %arg1: memref<2x16xf32, #tpu.memory_space<vmem>>, %arg2: memref<2x768x512xf32, #tpu.memory_space<vmem>>, %arg3: memref<2x1x512xf32, #tpu.memory_space<vmem>>, %arg4: memref<2x512x256xf32, #tpu.memory_space<vmem>>, %arg5: memref<2x1x256xf32, #tpu.memory_space<vmem>>, %arg6: memref<2x256x16xf32, #tpu.memory_space<vmem>>, %arg7: memref<2x1x16xf32, #tpu.memory_space<vmem>>, %arg8: memref<16x32xf32, #tpu.memory_space<vmem>>, %arg9: memref<16x32xf32, #tpu.memory_space<vmem>>, %arg10: memref<16x32xf32, #tpu.memory_space<vmem>>, %arg11: memref<1x32xf32, #tpu.memory_space<vmem>>, %arg12: memref<32x32xf32, #tpu.memory_space<vmem>>, %arg13: memref<16x32xf32, #tpu.memory_space<vmem>>, %arg14: memref<16x32xf32, #tpu.memory_space<vmem>>, %arg15: memref<16x32xf32, #tpu.memory_space<vmem>>, %arg16: memref<1x32xf32, #tpu.memory_space<vmem>>, %arg17: memref<32x32xf32, #tpu.memory_space<vmem>>, %arg18: memref<16x32xf32, #tpu.memory_space<vmem>>, %arg19: memref<16x32xf32, #tpu.memory_space<vmem>>, %arg20: memref<16x32xf32, #tpu.memory_space<vmem>>, %arg21: memref<1x32xf32, #tpu.memory_space<vmem>>, %arg22: memref<32x32xf32, #tpu.memory_space<vmem>>, %arg23: memref<16x32xf32, #tpu.memory_space<vmem>>, %arg24: memref<16x32xf32, #tpu.memory_space<vmem>>, %arg25: memref<16x32xf32, #tpu.memory_space<vmem>>, %arg26: memref<1x32xf32, #tpu.memory_space<vmem>>, %arg27: memref<1x32xf32, #tpu.memory_space<vmem>>, %arg28: memref<1x1xf32, #tpu.memory_space<vmem>>, %arg29: memref<2x1xf32, #tpu.memory_space<vmem>>) attributes {dimension_semantics = [], scalar_prefetch = 0 : i64, scratch_operands = 0 : i64, tpu.core_type = #tpu.core_type<tc>} {
    %c0 = arith.constant 0 : index
    %c0_0 = arith.constant 0 : index
    %c0_1 = arith.constant 0 : index
    %0 = vector.load %arg0[%c0, %c0_0, %c0_1] : memref<2x2x768xf32, #tpu.memory_space<vmem>>, vector<1x2x768xf32>
    %1 = vector.shape_cast %0 : vector<1x2x768xf32> to vector<2x768xf32>
    %c0_2 = arith.constant 0 : index
    %c0_3 = arith.constant 0 : index
    %c0_4 = arith.constant 0 : index
    %2 = vector.load %arg2[%c0_2, %c0_3, %c0_4] : memref<2x768x512xf32, #tpu.memory_space<vmem>>, vector<1x768x512xf32>
    %3 = vector.shape_cast %2 : vector<1x768x512xf32> to vector<768x512xf32>
    %cst = arith.constant dense<0.000000e+00> : vector<2x512xf32>
    %4 = tpu.matmul %1, %3, %cst {dimension_numbers = #tpu.dot_dimension_numbers<[1], [0], [0], [1], [0, 0, 1, 1], [], []>} : vector<2x768xf32>, vector<768x512xf32>, vector<2x512xf32> -> vector<2x512xf32>
    %c0_5 = arith.constant 0 : index
    %c0_6 = arith.constant 0 : index
    %c0_7 = arith.constant 0 : index
    %5 = vector.load %arg3[%c0_5, %c0_6, %c0_7] : memref<2x1x512xf32, #tpu.memory_space<vmem>>, vector<1x1x512xf32>
    %6 = vector.shape_cast %5 : vector<1x1x512xf32> to vector<1x512xf32>
    %7 = vector.broadcast %6 : vector<1x512xf32> to vector<2x512xf32>
    %8 = arith.addf %4, %7 : vector<2x512xf32>
    %cst_8 = arith.constant 0.000000e+00 : f32
    %9 = vector.broadcast %cst_8 : f32 to vector<2x512xf32>
    %10 = arith.maximumf %8, %9 : vector<2x512xf32>
    %c0_9 = arith.constant 0 : index
    %c0_10 = arith.constant 0 : index
    %c0_11 = arith.constant 0 : index
    %11 = vector.load %arg4[%c0_9, %c0_10, %c0_11] : memref<2x512x256xf32, #tpu.memory_space<vmem>>, vector<1x512x256xf32>
    %12 = vector.shape_cast %11 : vector<1x512x256xf32> to vector<512x256xf32>
    %cst_12 = arith.constant dense<0.000000e+00> : vector<2x256xf32>
    %13 = tpu.matmul %10, %12, %cst_12 {dimension_numbers = #tpu.dot_dimension_numbers<[1], [0], [0], [1], [0, 0, 1, 1], [], []>} : vector<2x512xf32>, vector<512x256xf32>, vector<2x256xf32> -> vector<2x256xf32>
    %c0_13 = arith.constant 0 : index
    %c0_14 = arith.constant 0 : index
    %c0_15 = arith.constant 0 : index
    %14 = vector.load %arg5[%c0_13, %c0_14, %c0_15] : memref<2x1x256xf32, #tpu.memory_space<vmem>>, vector<1x1x256xf32>
    %15 = vector.shape_cast %14 : vector<1x1x256xf32> to vector<1x256xf32>
    %16 = vector.broadcast %15 : vector<1x256xf32> to vector<2x256xf32>
    %17 = arith.addf %13, %16 : vector<2x256xf32>
    %cst_16 = arith.constant 0.000000e+00 : f32
    %18 = vector.broadcast %cst_16 : f32 to vector<2x256xf32>
    %19 = arith.maximumf %17, %18 : vector<2x256xf32>
    %c0_17 = arith.constant 0 : index
    %c0_18 = arith.constant 0 : index
    %c0_19 = arith.constant 0 : index
    %20 = vector.load %arg6[%c0_17, %c0_18, %c0_19] : memref<2x256x16xf32, #tpu.memory_space<vmem>>, vector<1x256x16xf32>
    %21 = vector.shape_cast %20 : vector<1x256x16xf32> to vector<256x16xf32>
    %cst_20 = arith.constant dense<0.000000e+00> : vector<2x16xf32>
    %22 = tpu.matmul %19, %21, %cst_20 {dimension_numbers = #tpu.dot_dimension_numbers<[1], [0], [0], [1], [0, 0, 1, 1], [], []>} : vector<2x256xf32>, vector<256x16xf32>, vector<2x16xf32> -> vector<2x16xf32>
    %c0_21 = arith.constant 0 : index
    %c0_22 = arith.constant 0 : index
    %c0_23 = arith.constant 0 : index
    %23 = vector.load %arg7[%c0_21, %c0_22, %c0_23] : memref<2x1x16xf32, #tpu.memory_space<vmem>>, vector<1x1x16xf32>
    %24 = vector.shape_cast %23 : vector<1x1x16xf32> to vector<1x16xf32>
    %25 = vector.broadcast %24 : vector<1x16xf32> to vector<2x16xf32>
    %26 = arith.addf %22, %25 : vector<2x16xf32>
    %cst_24 = arith.constant 0.000000e+00 : f32
    %27 = vector.broadcast %cst_24 : f32 to vector<2x16xf32>
    %28 = arith.maximumf %26, %27 : vector<2x16xf32>
    %c1 = arith.constant 1 : index
    %c0_25 = arith.constant 0 : index
    %c0_26 = arith.constant 0 : index
    %29 = vector.load %arg0[%c1, %c0_25, %c0_26] : memref<2x2x768xf32, #tpu.memory_space<vmem>>, vector<1x2x768xf32>
    %30 = vector.shape_cast %29 : vector<1x2x768xf32> to vector<2x768xf32>
    %c1_27 = arith.constant 1 : index
    %c0_28 = arith.constant 0 : index
    %c0_29 = arith.constant 0 : index
    %31 = vector.load %arg2[%c1_27, %c0_28, %c0_29] : memref<2x768x512xf32, #tpu.memory_space<vmem>>, vector<1x768x512xf32>
    %32 = vector.shape_cast %31 : vector<1x768x512xf32> to vector<768x512xf32>
    %cst_30 = arith.constant dense<0.000000e+00> : vector<2x512xf32>
    %33 = tpu.matmul %30, %32, %cst_30 {dimension_numbers = #tpu.dot_dimension_numbers<[1], [0], [0], [1], [0, 0, 1, 1], [], []>} : vector<2x768xf32>, vector<768x512xf32>, vector<2x512xf32> -> vector<2x512xf32>
    %c1_31 = arith.constant 1 : index
    %c0_32 = arith.constant 0 : index
    %c0_33 = arith.constant 0 : index
    %34 = vector.load %arg3[%c1_31, %c0_32, %c0_33] : memref<2x1x512xf32, #tpu.memory_space<vmem>>, vector<1x1x512xf32>
    %35 = vector.shape_cast %34 : vector<1x1x512xf32> to vector<1x512xf32>
    %36 = vector.broadcast %35 : vector<1x512xf32> to vector<2x512xf32>
    %37 = arith.addf %33, %36 : vector<2x512xf32>
    %cst_34 = arith.constant 0.000000e+00 : f32
    %38 = vector.broadcast %cst_34 : f32 to vector<2x512xf32>
    %39 = arith.maximumf %37, %38 : vector<2x512xf32>
    %c1_35 = arith.constant 1 : index
    %c0_36 = arith.constant 0 : index
    %c0_37 = arith.constant 0 : index
    %40 = vector.load %arg4[%c1_35, %c0_36, %c0_37] : memref<2x512x256xf32, #tpu.memory_space<vmem>>, vector<1x512x256xf32>
    %41 = vector.shape_cast %40 : vector<1x512x256xf32> to vector<512x256xf32>
    %cst_38 = arith.constant dense<0.000000e+00> : vector<2x256xf32>
    %42 = tpu.matmul %39, %41, %cst_38 {dimension_numbers = #tpu.dot_dimension_numbers<[1], [0], [0], [1], [0, 0, 1, 1], [], []>} : vector<2x512xf32>, vector<512x256xf32>, vector<2x256xf32> -> vector<2x256xf32>
    %c1_39 = arith.constant 1 : index
    %c0_40 = arith.constant 0 : index
    %c0_41 = arith.constant 0 : index
    %43 = vector.load %arg5[%c1_39, %c0_40, %c0_41] : memref<2x1x256xf32, #tpu.memory_space<vmem>>, vector<1x1x256xf32>
    %44 = vector.shape_cast %43 : vector<1x1x256xf32> to vector<1x256xf32>
    %45 = vector.broadcast %44 : vector<1x256xf32> to vector<2x256xf32>
    %46 = arith.addf %42, %45 : vector<2x256xf32>
    %cst_42 = arith.constant 0.000000e+00 : f32
    %47 = vector.broadcast %cst_42 : f32 to vector<2x256xf32>
    %48 = arith.maximumf %46, %47 : vector<2x256xf32>
    %c1_43 = arith.constant 1 : index
    %c0_44 = arith.constant 0 : index
    %c0_45 = arith.constant 0 : index
    %49 = vector.load %arg6[%c1_43, %c0_44, %c0_45] : memref<2x256x16xf32, #tpu.memory_space<vmem>>, vector<1x256x16xf32>
    %50 = vector.shape_cast %49 : vector<1x256x16xf32> to vector<256x16xf32>
    %cst_46 = arith.constant dense<0.000000e+00> : vector<2x16xf32>
    %51 = tpu.matmul %48, %50, %cst_46 {dimension_numbers = #tpu.dot_dimension_numbers<[1], [0], [0], [1], [0, 0, 1, 1], [], []>} : vector<2x256xf32>, vector<256x16xf32>, vector<2x16xf32> -> vector<2x16xf32>
    %c1_47 = arith.constant 1 : index
    %c0_48 = arith.constant 0 : index
    %c0_49 = arith.constant 0 : index
    %52 = vector.load %arg7[%c1_47, %c0_48, %c0_49] : memref<2x1x16xf32, #tpu.memory_space<vmem>>, vector<1x1x16xf32>
    %53 = vector.shape_cast %52 : vector<1x1x16xf32> to vector<1x16xf32>
    %54 = vector.broadcast %53 : vector<1x16xf32> to vector<2x16xf32>
    %55 = arith.addf %51, %54 : vector<2x16xf32>
    %cst_50 = arith.constant 0.000000e+00 : f32
    %56 = vector.broadcast %cst_50 : f32 to vector<2x16xf32>
    %57 = arith.maximumf %55, %56 : vector<2x16xf32>
    %c0_51 = arith.constant 0 : index
    %c0_52 = arith.constant 0 : index
    %58 = vector.load %arg1[%c0_51, %c0_52] : memref<2x16xf32, #tpu.memory_space<vmem>>, vector<2x16xf32>
    %c0_53 = arith.constant 0 : index
    %c0_54 = arith.constant 0 : index
    %59 = vector.load %arg8[%c0_53, %c0_54] : memref<16x32xf32, #tpu.memory_space<vmem>>, vector<16x32xf32>
    %cst_55 = arith.constant dense<0.000000e+00> : vector<2x32xf32>
    %60 = tpu.matmul %28, %59, %cst_55 {dimension_numbers = #tpu.dot_dimension_numbers<[1], [0], [0], [1], [0, 0, 1, 1], [], []>} : vector<2x16xf32>, vector<16x32xf32>, vector<2x32xf32> -> vector<2x32xf32>
    %c0_56 = arith.constant 0 : index
    %c0_57 = arith.constant 0 : index
    %61 = vector.load %arg9[%c0_56, %c0_57] : memref<16x32xf32, #tpu.memory_space<vmem>>, vector<16x32xf32>
    %cst_58 = arith.constant dense<0.000000e+00> : vector<2x32xf32>
    %62 = tpu.matmul %57, %61, %cst_58 {dimension_numbers = #tpu.dot_dimension_numbers<[1], [0], [0], [1], [0, 0, 1, 1], [], []>} : vector<2x16xf32>, vector<16x32xf32>, vector<2x32xf32> -> vector<2x32xf32>
    %63 = arith.addf %60, %62 : vector<2x32xf32>
    %c0_59 = arith.constant 0 : index
    %c0_60 = arith.constant 0 : index
    %64 = vector.load %arg10[%c0_59, %c0_60] : memref<16x32xf32, #tpu.memory_space<vmem>>, vector<16x32xf32>
    %cst_61 = arith.constant dense<0.000000e+00> : vector<2x32xf32>
    %65 = tpu.matmul %58, %64, %cst_61 {dimension_numbers = #tpu.dot_dimension_numbers<[1], [0], [0], [1], [0, 0, 1, 1], [], []>} : vector<2x16xf32>, vector<16x32xf32>, vector<2x32xf32> -> vector<2x32xf32>
    %66 = arith.addf %63, %65 : vector<2x32xf32>
    %c0_62 = arith.constant 0 : index
    %c0_63 = arith.constant 0 : index
    %67 = vector.load %arg11[%c0_62, %c0_63] : memref<1x32xf32, #tpu.memory_space<vmem>>, vector<1x32xf32>
    %68 = vector.broadcast %67 : vector<1x32xf32> to vector<2x32xf32>
    %69 = arith.addf %66, %68 : vector<2x32xf32>
    %cst_64 = arith.constant 0.000000e+00 : f32
    %70 = vector.broadcast %cst_64 : f32 to vector<2x32xf32>
    %71 = arith.cmpf ogt, %69, %70 : vector<2x32xf32>
    %cst_65 = arith.constant 0.000000e+00 : f32
    %72 = vector.broadcast %cst_65 : f32 to vector<2x32xf32>
    %73 = arith.minimumf %69, %72 : vector<2x32xf32>
    %74 = math.exp %73 : vector<2x32xf32>
    %cst_66 = arith.constant 1.000000e+00 : f32
    %75 = vector.broadcast %cst_66 : f32 to vector<2x32xf32>
    %76 = arith.subf %74, %75 : vector<2x32xf32>
    %77 = arith.select %71, %69, %76 : vector<2x32xi1>, vector<2x32xf32>
    %c0_67 = arith.constant 0 : index
    %c0_68 = arith.constant 0 : index
    %78 = vector.load %arg12[%c0_67, %c0_68] : memref<32x32xf32, #tpu.memory_space<vmem>>, vector<32x32xf32>
    %cst_69 = arith.constant dense<0.000000e+00> : vector<2x32xf32>
    %79 = tpu.matmul %77, %78, %cst_69 {dimension_numbers = #tpu.dot_dimension_numbers<[1], [0], [0], [1], [0, 0, 1, 1], [], []>} : vector<2x32xf32>, vector<32x32xf32>, vector<2x32xf32> -> vector<2x32xf32>
    %c0_70 = arith.constant 0 : index
    %c0_71 = arith.constant 0 : index
    %80 = vector.load %arg13[%c0_70, %c0_71] : memref<16x32xf32, #tpu.memory_space<vmem>>, vector<16x32xf32>
    %cst_72 = arith.constant dense<0.000000e+00> : vector<2x32xf32>
    %81 = tpu.matmul %28, %80, %cst_72 {dimension_numbers = #tpu.dot_dimension_numbers<[1], [0], [0], [1], [0, 0, 1, 1], [], []>} : vector<2x16xf32>, vector<16x32xf32>, vector<2x32xf32> -> vector<2x32xf32>
    %c0_73 = arith.constant 0 : index
    %c0_74 = arith.constant 0 : index
    %82 = vector.load %arg14[%c0_73, %c0_74] : memref<16x32xf32, #tpu.memory_space<vmem>>, vector<16x32xf32>
    %cst_75 = arith.constant dense<0.000000e+00> : vector<2x32xf32>
    %83 = tpu.matmul %57, %82, %cst_75 {dimension_numbers = #tpu.dot_dimension_numbers<[1], [0], [0], [1], [0, 0, 1, 1], [], []>} : vector<2x16xf32>, vector<16x32xf32>, vector<2x32xf32> -> vector<2x32xf32>
    %84 = arith.addf %81, %83 : vector<2x32xf32>
    %c0_76 = arith.constant 0 : index
    %c0_77 = arith.constant 0 : index
    %85 = vector.load %arg15[%c0_76, %c0_77] : memref<16x32xf32, #tpu.memory_space<vmem>>, vector<16x32xf32>
    %cst_78 = arith.constant dense<0.000000e+00> : vector<2x32xf32>
    %86 = tpu.matmul %58, %85, %cst_78 {dimension_numbers = #tpu.dot_dimension_numbers<[1], [0], [0], [1], [0, 0, 1, 1], [], []>} : vector<2x16xf32>, vector<16x32xf32>, vector<2x32xf32> -> vector<2x32xf32>
    %87 = arith.addf %84, %86 : vector<2x32xf32>
    %c0_79 = arith.constant 0 : index
    %c0_80 = arith.constant 0 : index
    %88 = vector.load %arg16[%c0_79, %c0_80] : memref<1x32xf32, #tpu.memory_space<vmem>>, vector<1x32xf32>
    %89 = vector.broadcast %88 : vector<1x32xf32> to vector<2x32xf32>
    %90 = arith.addf %87, %89 : vector<2x32xf32>
    %91 = arith.addf %79, %90 : vector<2x32xf32>
    %cst_81 = arith.constant 0.000000e+00 : f32
    %92 = vector.broadcast %cst_81 : f32 to vector<2x32xf32>
    %93 = arith.cmpf ogt, %91, %92 : vector<2x32xf32>
    %cst_82 = arith.constant 0.000000e+00 : f32
    %94 = vector.broadcast %cst_82 : f32 to vector<2x32xf32>
    %95 = arith.minimumf %91, %94 : vector<2x32xf32>
    %96 = math.exp %95 : vector<2x32xf32>
    %cst_83 = arith.constant 1.000000e+00 : f32
    %97 = vector.broadcast %cst_83 : f32 to vector<2x32xf32>
    %98 = arith.subf %96, %97 : vector<2x32xf32>
    %99 = arith.select %93, %91, %98 : vector<2x32xi1>, vector<2x32xf32>
    %c0_84 = arith.constant 0 : index
    %c0_85 = arith.constant 0 : index
    %100 = vector.load %arg17[%c0_84, %c0_85] : memref<32x32xf32, #tpu.memory_space<vmem>>, vector<32x32xf32>
    %cst_86 = arith.constant dense<0.000000e+00> : vector<2x32xf32>
    %101 = tpu.matmul %99, %100, %cst_86 {dimension_numbers = #tpu.dot_dimension_numbers<[1], [0], [0], [1], [0, 0, 1, 1], [], []>} : vector<2x32xf32>, vector<32x32xf32>, vector<2x32xf32> -> vector<2x32xf32>
    %c0_87 = arith.constant 0 : index
    %c0_88 = arith.constant 0 : index
    %102 = vector.load %arg18[%c0_87, %c0_88] : memref<16x32xf32, #tpu.memory_space<vmem>>, vector<16x32xf32>
    %cst_89 = arith.constant dense<0.000000e+00> : vector<2x32xf32>
    %103 = tpu.matmul %28, %102, %cst_89 {dimension_numbers = #tpu.dot_dimension_numbers<[1], [0], [0], [1], [0, 0, 1, 1], [], []>} : vector<2x16xf32>, vector<16x32xf32>, vector<2x32xf32> -> vector<2x32xf32>
    %c0_90 = arith.constant 0 : index
    %c0_91 = arith.constant 0 : index
    %104 = vector.load %arg19[%c0_90, %c0_91] : memref<16x32xf32, #tpu.memory_space<vmem>>, vector<16x32xf32>
    %cst_92 = arith.constant dense<0.000000e+00> : vector<2x32xf32>
    %105 = tpu.matmul %57, %104, %cst_92 {dimension_numbers = #tpu.dot_dimension_numbers<[1], [0], [0], [1], [0, 0, 1, 1], [], []>} : vector<2x16xf32>, vector<16x32xf32>, vector<2x32xf32> -> vector<2x32xf32>
    %106 = arith.addf %103, %105 : vector<2x32xf32>
    %c0_93 = arith.constant 0 : index
    %c0_94 = arith.constant 0 : index
    %107 = vector.load %arg20[%c0_93, %c0_94] : memref<16x32xf32, #tpu.memory_space<vmem>>, vector<16x32xf32>
    %cst_95 = arith.constant dense<0.000000e+00> : vector<2x32xf32>
    %108 = tpu.matmul %58, %107, %cst_95 {dimension_numbers = #tpu.dot_dimension_numbers<[1], [0], [0], [1], [0, 0, 1, 1], [], []>} : vector<2x16xf32>, vector<16x32xf32>, vector<2x32xf32> -> vector<2x32xf32>
    %109 = arith.addf %106, %108 : vector<2x32xf32>
    %c0_96 = arith.constant 0 : index
    %c0_97 = arith.constant 0 : index
    %110 = vector.load %arg21[%c0_96, %c0_97] : memref<1x32xf32, #tpu.memory_space<vmem>>, vector<1x32xf32>
    %111 = vector.broadcast %110 : vector<1x32xf32> to vector<2x32xf32>
    %112 = arith.addf %109, %111 : vector<2x32xf32>
    %113 = arith.addf %101, %112 : vector<2x32xf32>
    %cst_98 = arith.constant 0.000000e+00 : f32
    %114 = vector.broadcast %cst_98 : f32 to vector<2x32xf32>
    %115 = arith.cmpf ogt, %113, %114 : vector<2x32xf32>
    %cst_99 = arith.constant 0.000000e+00 : f32
    %116 = vector.broadcast %cst_99 : f32 to vector<2x32xf32>
    %117 = arith.minimumf %113, %116 : vector<2x32xf32>
    %118 = math.exp %117 : vector<2x32xf32>
    %cst_100 = arith.constant 1.000000e+00 : f32
    %119 = vector.broadcast %cst_100 : f32 to vector<2x32xf32>
    %120 = arith.subf %118, %119 : vector<2x32xf32>
    %121 = arith.select %115, %113, %120 : vector<2x32xi1>, vector<2x32xf32>
    %c0_101 = arith.constant 0 : index
    %c0_102 = arith.constant 0 : index
    %122 = vector.load %arg22[%c0_101, %c0_102] : memref<32x32xf32, #tpu.memory_space<vmem>>, vector<32x32xf32>
    %cst_103 = arith.constant dense<0.000000e+00> : vector<2x32xf32>
    %123 = tpu.matmul %121, %122, %cst_103 {dimension_numbers = #tpu.dot_dimension_numbers<[1], [0], [0], [1], [0, 0, 1, 1], [], []>} : vector<2x32xf32>, vector<32x32xf32>, vector<2x32xf32> -> vector<2x32xf32>
    %c0_104 = arith.constant 0 : index
    %c0_105 = arith.constant 0 : index
    %124 = vector.load %arg23[%c0_104, %c0_105] : memref<16x32xf32, #tpu.memory_space<vmem>>, vector<16x32xf32>
    %cst_106 = arith.constant dense<0.000000e+00> : vector<2x32xf32>
    %125 = tpu.matmul %28, %124, %cst_106 {dimension_numbers = #tpu.dot_dimension_numbers<[1], [0], [0], [1], [0, 0, 1, 1], [], []>} : vector<2x16xf32>, vector<16x32xf32>, vector<2x32xf32> -> vector<2x32xf32>
    %c0_107 = arith.constant 0 : index
    %c0_108 = arith.constant 0 : index
    %126 = vector.load %arg24[%c0_107, %c0_108] : memref<16x32xf32, #tpu.memory_space<vmem>>, vector<16x32xf32>
    %cst_109 = arith.constant dense<0.000000e+00> : vector<2x32xf32>
    %127 = tpu.matmul %57, %126, %cst_109 {dimension_numbers = #tpu.dot_dimension_numbers<[1], [0], [0], [1], [0, 0, 1, 1], [], []>} : vector<2x16xf32>, vector<16x32xf32>, vector<2x32xf32> -> vector<2x32xf32>
    %128 = arith.addf %125, %127 : vector<2x32xf32>
    %c0_110 = arith.constant 0 : index
    %c0_111 = arith.constant 0 : index
    %129 = vector.load %arg25[%c0_110, %c0_111] : memref<16x32xf32, #tpu.memory_space<vmem>>, vector<16x32xf32>
    %cst_112 = arith.constant dense<0.000000e+00> : vector<2x32xf32>
    %130 = tpu.matmul %58, %129, %cst_112 {dimension_numbers = #tpu.dot_dimension_numbers<[1], [0], [0], [1], [0, 0, 1, 1], [], []>} : vector<2x16xf32>, vector<16x32xf32>, vector<2x32xf32> -> vector<2x32xf32>
    %131 = arith.addf %128, %130 : vector<2x32xf32>
    %c0_113 = arith.constant 0 : index
    %c0_114 = arith.constant 0 : index
    %132 = vector.load %arg26[%c0_113, %c0_114] : memref<1x32xf32, #tpu.memory_space<vmem>>, vector<1x32xf32>
    %133 = vector.broadcast %132 : vector<1x32xf32> to vector<2x32xf32>
    %134 = arith.addf %131, %133 : vector<2x32xf32>
    %135 = arith.addf %123, %134 : vector<2x32xf32>
    %cst_115 = arith.constant 0.000000e+00 : f32
    %136 = vector.broadcast %cst_115 : f32 to vector<2x32xf32>
    %137 = arith.cmpf ogt, %135, %136 : vector<2x32xf32>
    %cst_116 = arith.constant 0.000000e+00 : f32
    %138 = vector.broadcast %cst_116 : f32 to vector<2x32xf32>
    %139 = arith.minimumf %135, %138 : vector<2x32xf32>
    %140 = math.exp %139 : vector<2x32xf32>
    %cst_117 = arith.constant 1.000000e+00 : f32
    %141 = vector.broadcast %cst_117 : f32 to vector<2x32xf32>
    %142 = arith.subf %140, %141 : vector<2x32xf32>
    %143 = arith.select %137, %135, %142 : vector<2x32xi1>, vector<2x32xf32>
    %c0_118 = arith.constant 0 : index
    %c0_119 = arith.constant 0 : index
    %144 = vector.load %arg27[%c0_118, %c0_119] : memref<1x32xf32, #tpu.memory_space<vmem>>, vector<1x32xf32>
    %145 = vector.broadcast %144 : vector<1x32xf32> to vector<2x32xf32>
    %146 = arith.mulf %143, %145 : vector<2x32xf32>
    %cst_120 = arith.constant dense<0.000000e+00> : vector<2xf32>
    %147 = vector.multi_reduction <add>, %146, %cst_120 [1] : vector<2x32xf32> to vector<2xf32>
    %148 = vector.shape_cast %147 : vector<2xf32> to vector<2x1xf32>
    %c0_121 = arith.constant 0 : index
    %c0_122 = arith.constant 0 : index
    %149 = vector.load %arg28[%c0_121, %c0_122] : memref<1x1xf32, #tpu.memory_space<vmem>>, vector<1x1xf32>
    %150 = vector.broadcast %149 : vector<1x1xf32> to vector<2x1xf32>
    %151 = arith.addf %148, %150 : vector<2x1xf32>
    %c0_123 = arith.constant 0 : index
    %c0_124 = arith.constant 0 : index
    %152 = vector.load %arg29[%c0_123, %c0_124] : memref<2x1xf32, #tpu.memory_space<vmem>>, vector<2x1xf32>
    tpu.vector_store %arg29[%c0_123, %c0_124], %151 {strides = array<i32>} : memref<2x1xf32, #tpu.memory_space<vmem>>, vector<2x1xf32>,
    return
  }
}

</mosaic_0001>

<llo_original>
// kernel: tpu_custom_call.1
$region0: #{tpu_custom_call.1}
  #allocation0 [shape = 'u32[]', space=smem, size = 0x4, offset = 0x4, fixed_abs, tag = 'smem constant byte address 0x4 - core index']
  #allocation1 [shape = 'u32[144,128]{1,0:T(1,128)}', space=vmem, size = 0x12000, scoped, tag = 'internal scratch']
  #allocation2 [shape = 'f32[1,1]{1,0:T(1,128)S(1)}', space=vmem, size = 0x200, scoped, tag = 'scoped memory for tpu_custom_call.1']
  %s0 = inlined_call_operand.smem [shape: u32[30], index: -1, kind: input, shape index: {}]
  %s1 = sld [smem:[%s0]]
  %s2 = scalar_lea.smem %s0, 1
  %s3 = sld [smem:[%s2]]
  %s4 = scalar_lea.smem %s0, 2
  %s5 = sld [smem:[%s4]]
  %s6 = scalar_lea.smem %s0, 3
  %s7 = sld [smem:[%s6]]
  %s8 = scalar_lea.smem %s0, 4
  %s9 = sld [smem:[%s8]]
  %s10 = scalar_lea.smem %s0, 5
  %s11 = sld [smem:[%s10]]
  %s12 = scalar_lea.smem %s0, 6
  %s13 = sld [smem:[%s12]]
  %s14 = scalar_lea.smem %s0, 7
  %s15 = sld [smem:[%s14]]
  %s16 = scalar_lea.smem %s0, 8
  %s17 = sld [smem:[%s16]]
  %s18 = scalar_lea.smem %s0, 9
  %s19 = sld [smem:[%s18]]
  %s20 = scalar_lea.smem %s0, 10
  %s21 = sld [smem:[%s20]]
  %s22 = scalar_lea.smem %s0, 11
  %s23 = sld [smem:[%s22]]
  %s24 = scalar_lea.smem %s0, 12
  %s25 = sld [smem:[%s24]]
  %s26 = scalar_lea.smem %s0, 13
  %s27 = sld [smem:[%s26]]
  %s28 = scalar_lea.smem %s0, 14
  %s29 = sld [smem:[%s28]]
  %s30 = scalar_lea.smem %s0, 15
  %s31 = sld [smem:[%s30]]
  %s32 = scalar_lea.smem %s0, 16
  %s33 = sld [smem:[%s32]]
  %s34 = scalar_lea.smem %s0, 17
  %s35 = sld [smem:[%s34]]
  %s36 = scalar_lea.smem %s0, 18
  %s37 = sld [smem:[%s36]]
  %s38 = scalar_lea.smem %s0, 19
  %s39 = sld [smem:[%s38]]
  %s40 = scalar_lea.smem %s0, 20
  %s41 = sld [smem:[%s40]]
  %s42 = scalar_lea.smem %s0, 21
  %s43 = sld [smem:[%s42]]
  %s44 = scalar_lea.smem %s0, 22
  %s45 = sld [smem:[%s44]]
  %s46 = scalar_lea.smem %s0, 23
  %s47 = sld [smem:[%s46]]
  %s48 = scalar_lea.smem %s0, 24
  %s49 = sld [smem:[%s48]]
  %s50 = scalar_lea.smem %s0, 25
  %s51 = sld [smem:[%s50]]
  %s52 = scalar_lea.smem %s0, 26
  %s53 = sld [smem:[%s52]]
  %s54 = scalar_lea.smem %s0, 27
  %s55 = sld [smem:[%s54]]
  %s56 = scalar_lea.smem %s0, 28
  %s57 = sld [smem:[%s56]]
  %s58 = scalar_lea.smem %s0, 29
  %s59 = sld [smem:[%s58]]
  %s60 = sld [smem:[#allocation0]]
  $region234: #{tpu_custom_call.1} parent=0
    _
  %s62 = ssub.s32 1, %s60
  %s63 = scalar_select 0, %s62, %s60
  %v64 = vstv %s57
  %65 = vst [vmem:[#allocation2] sm:$0x1] %v64
  $region1: #{tpu_custom_call.1} parent=0
    #allocation3 [shape = 'u8[12288]{0}', space=vmem, size = 0x3000, scoped, tag = 'input window, operand 0, single buffered']
    #allocation4 [shape = 's32[1]{0}', space=sflag, size = 0x4, scoped, tag = 'scoped memory for tpu_custom_call.1']
    #allocation5 [shape = 'u8[1024]{0}', space=vmem, size = 0x400, scoped, tag = 'input window, operand 1, single buffered']
    #allocation6 [shape = 's32[1]{0}', space=sflag, size = 0x4, scoped, tag = 'scoped memory for tpu_custom_call.1']
    #allocation7 [shape = 'u8[3145728]{0}', space=vmem, size = 0x300000, scoped, tag = 'input window, operand 2, single buffered']
    #allocation8 [shape = 'u8[4096]{0}', space=vmem, size = 0x1000, scoped, tag = 'input window, operand 3, single buffered']
    #allocation9 [shape = 's32[1]{0}', space=sflag, size = 0x4, scoped, tag = 'scoped memory for tpu_custom_call.1']
    #allocation10 [shape = 'u8[1048576]{0}', space=vmem, size = 0x100000, scoped, tag = 'input window, operand 4, single buffered']
    #allocation11 [shape = 'u8[2048]{0}', space=vmem, size = 0x800, scoped, tag = 'input window, operand 5, single buffered']
    #allocation12 [shape = 's32[1]{0}', space=sflag, size = 0x4, scoped, tag = 'scoped memory for tpu_custom_call.1']
    #allocation13 [shape = 'u8[1024]{0}', space=vmem, size = 0x400, scoped, tag = 'input window, operand 7, single buffered']
    #allocation14 [shape = 'u8[8192]{0}', space=vmem, size = 0x2000, scoped, tag = 'input window, operand 8, single buffered']
    #allocation15 [shape = 's32[1]{0}', space=sflag, size = 0x4, scoped, tag = 'scoped memory for tpu_custom_call.1']
    #allocation16 [shape = 'u8[8192]{0}', space=vmem, size = 0x2000, scoped, tag = 'input window, operand 9, single buffered']
    #allocation17 [shape = 'u8[8192]{0}', space=vmem, size = 0x2000, scoped, tag = 'input window, operand 10, single buffered']
    #allocation18 [shape = 's32[1]{0}', space=sflag, size = 0x4, scoped, tag = 'scoped memory for tpu_custom_call.1']
    #allocation19 [shape = 'u8[512]{0}', space=vmem, size = 0x400, scoped, tag = 'input window, operand 11, single buffered']
    #allocation20 [shape = 'u8[16384]{0}', space=vmem, size = 0x4000, scoped, tag = 'input window, operand 12, single buffered']
    #allocation21 [shape = 's32[1]{0}', space=sflag, size = 0x4, scoped, tag = 'scoped memory for tpu_custom_call.1']
    #allocation22 [shape = 'u8[8192]{0}', space=vmem, size = 0x2000, scoped, tag = 'input window, operand 13, single buffered']
    #allocation23 [shape = 'u8[8192]{0}', space=vmem, size = 0x2000, scoped, tag = 'input window, operand 14, single buffered']
    #allocation24 [shape = 's32[1]{0}', space=sflag, size = 0x4, scoped, tag = 'scoped memory for tpu_custom_call.1']
    #allocation25 [shape = 'u8[8192]{0}', space=vmem, size = 0x2000, scoped, tag = 'input window, operand 15, single buffered']
    #allocation26 [shape = 'u8[512]{0}', space=vmem, size = 0x400, scoped, tag = 'input window, operand 16, single buffered']
    #allocation27 [shape = 's32[1]{0}', space=sflag, size = 0x4, scoped, tag = 'scoped memory for tpu_custom_call.1']
    #allocation28 [shape = 'u8[16384]{0}', space=vmem, size = 0x4000, scoped, tag = 'input window, operand 17, single buffered']
    #allocation29 [shape = 'u8[8192]{0}', space=vmem, size = 0x2000, scoped, tag = 'input window, operand 18, single buffered']
    #allocation30 [shape = 's32[1]{0}', space=sflag, size = 0x4, scoped, tag = 'scoped memory for tpu_custom_call.1']
    #allocation31 [shape = 'u8[8192]{0}', space=vmem, size = 0x2000, scoped, tag = 'input window, operand 19, single buffered']
    #allocation32 [shape = 'u8[8192]{0}', space=vmem, size = 0x2000, scoped, tag = 'input window, operand 20, single buffered']
    #allocation33 [shape = 's32[1]{0}', space=sflag, size = 0x4, scoped, tag = 'scoped memory for tpu_custom_call.1']
    #allocation34 [shape = 'u8[512]{0}', space=vmem, size = 0x400, scoped, tag = 'input window, operand 21, single buffered']
    #allocation35 [shape = 'u8[16384]{0}', space=vmem, size = 0x4000, scoped, tag = 'input window, operand 22, single buffered']
    #allocation36 [shape = 's32[1]{0}', space=sflag, size = 0x4, scoped, tag = 'scoped memory for tpu_custom_call.1']
    #allocation37 [shape = 'u8[8192]{0}', space=vmem, size = 0x2000, scoped, tag = 'input window, operand 23, single buffered']
    #allocation38 [shape = 'u8[8192]{0}', space=vmem, size = 0x2000, scoped, tag = 'input window, operand 24, single buffered']
    #allocation39 [shape = 's32[1]{0}', space=sflag, size = 0x4, scoped, tag = 'scoped memory for tpu_custom_call.1']
    #allocation40 [shape = 'u8[8192]{0}', space=vmem, size = 0x2000, scoped, tag = 'input window, operand 25, single buffered']
    #allocation41 [shape = 'u8[512]{0}', space=vmem, size = 0x400, scoped, tag = 'input window, operand 26, single buffered']
    #allocation42 [shape = 's32[1]{0}', space=sflag, size = 0x4, scoped, tag = 'scoped memory for tpu_custom_call.1']
    #allocation43 [shape = 'u8[512]{0}', space=vmem, size = 0x400, scoped, tag = 'input window, operand 27, single buffered']
    %66 = vsyncpa [#allocation4], 0
    %67 = vsyncpa [#allocation6], 0
    %68 = vsyncpa [#allocation9], 0
    %69 = vsyncpa [#allocation12], 0
    %70 = vsyncpa [#allocation15], 0
    %71 = vsyncpa [#allocation18], 0
    %72 = vsyncpa [#allocation21], 0
    %73 = vsyncpa [#allocation24], 0
    %74 = vsyncpa [#allocation27], 0
    %75 = vsyncpa [#allocation30], 0
    %76 = vsyncpa [#allocation33], 0
    %77 = vsyncpa [#allocation36], 0
    %78 = vsyncpa [#allocation39], 0
    %79 = vsyncpa [#allocation42], 0
    // Predicated region
    $region2: #{tpu_custom_call.1} parent=1 // pred_check
      _
    $region3: #{tpu_custom_call.1} parent=1 // pred_check_branch
      %81 = sbr.rel (0) target = $region5
    $region4: #{tpu_custom_call.1} parent=1 // pred_region
      %s83 = ssub.s32 384, 384
      %84 = vsyncadd [#allocation4], %s83
      %s85 = sshll.u32 [#allocation3], 4
      %s86 = int_to_ptr.vmem [resolvable:$true] %s85
      %91 = dma.hbm_to_vmem [thread:$0]  %s1, 384, %s86, [#allocation4], 192, 192, 12
    $region5: #{tpu_custom_call.1} parent=1 // pred_fallthru
      _
    // Predicated region
    $region6: #{tpu_custom_call.1} parent=1 // pred_check
      _
    $region7: #{tpu_custom_call.1} parent=1 // pred_check_branch
      %93 = sbr.rel (0) target = $region9
    $region8: #{tpu_custom_call.1} parent=1 // pred_region
      %s95 = ssub.s32 32, 32
      %96 = vsyncadd [#allocation6], %s95
      %s98 = sshll.u32 [#allocation5], 4
      %s99 = int_to_ptr.vmem [resolvable:$true] %s98
      %101 = dma.hbm_to_vmem [thread:$0]  %s3, 32, %s99, [#allocation6]
    $region9: #{tpu_custom_call.1} parent=1 // pred_fallthru
      _
    // Predicated region
    $region10: #{tpu_custom_call.1} parent=1 // pred_check
      _
    $region11: #{tpu_custom_call.1} parent=1 // pred_check_branch
      %103 = sbr.rel (0) target = $region13
    $region12: #{tpu_custom_call.1} parent=1 // pred_region
      %s105 = ssub.s32 98304, 98304
      %106 = vsyncadd [#allocation6], %s105
      %s107 = sshll.u32 [#allocation7], 4
      %s108 = int_to_ptr.vmem [resolvable:$true] %s107
      %113 = dma.hbm_to_vmem [thread:$0]  %s5, 98304, %s108, [#allocation6], 512, 512, 32
    $region13: #{tpu_custom_call.1} parent=1 // pred_fallthru
      _
    // Predicated region
    $region14: #{tpu_custom_call.1} parent=1 // pred_check
      _
    $region15: #{tpu_custom_call.1} parent=1 // pred_check_branch
      %115 = sbr.rel (0) target = $region17
    $region16: #{tpu_custom_call.1} parent=1 // pred_region
      %s117 = ssub.s32 128, 128
      %118 = vsyncadd [#allocation9], %s117
      %s119 = sshll.u32 [#allocation8], 4
      %s120 = int_to_ptr.vmem [resolvable:$true] %s119
      %125 = dma.hbm_to_vmem [thread:$0]  %s7, 128, %s120, [#allocation9], 64, 64, 4
    $region17: #{tpu_custom_call.1} parent=1 // pred_fallthru
      _
    // Predicated region
    $region18: #{tpu_custom_call.1} parent=1 // pred_check
      _
    $region19: #{tpu_custom_call.1} parent=1 // pred_check_branch
      %127 = sbr.rel (0) target = $region21
    $region20: #{tpu_custom_call.1} parent=1 // pred_region
      %s129 = ssub.s32 32768, 32768
      %130 = vsyncadd [#allocation9], %s129
      %s131 = sshll.u32 [#allocation10], 4
      %s132 = int_to_ptr.vmem [resolvable:$true] %s131
      %137 = dma.hbm_to_vmem [thread:$0]  %s9, 32768, %s132, [#allocation9], 256, 256, 16
    $region21: #{tpu_custom_call.1} parent=1 // pred_fallthru
      _
    // Predicated region
    $region22: #{tpu_custom_call.1} parent=1 // pred_check
      _
    $region23: #{tpu_custom_call.1} parent=1 // pred_check_branch
      %139 = sbr.rel (0) target = $region25
    $region24: #{tpu_custom_call.1} parent=1 // pred_region
      %s141 = ssub.s32 64, 64
      %142 = vsyncadd [#allocation12], %s141
      %s143 = sshll.u32 [#allocation11], 4
      %s144 = int_to_ptr.vmem [resolvable:$true] %s143
      %149 = dma.hbm_to_vmem [thread:$0]  %s11, 64, %s144, [#allocation12], 32, 32, 2
    $region25: #{tpu_custom_call.1} parent=1 // pred_fallthru
      _
    // Predicated region
    $region26: #{tpu_custom_call.1} parent=1 // pred_check
      _
    $region27: #{tpu_custom_call.1} parent=1 // pred_check_branch
      %151 = sbr.rel (0) target = $region29
    $region28: #{tpu_custom_call.1} parent=1 // pred_region
      _
    $region29: #{tpu_custom_call.1} parent=1 // pred_fallthru
      _
    // Predicated region
    $region30: #{tpu_custom_call.1} parent=1 // pred_check
      _
    $region31: #{tpu_custom_call.1} parent=1 // pred_check_branch
      %153 = sbr.rel (0) target = $region33
    $region32: #{tpu_custom_call.1} parent=1 // pred_region
      %s155 = ssub.s32 32, 32
      %156 = vsyncadd [#allocation12], %s155
      %s157 = sshll.u32 [#allocation13], 4
      %s158 = int_to_ptr.vmem [resolvable:$true] %s157
      %163 = dma.hbm_to_vmem [thread:$0]  %s15, 32, %s158, [#allocation12], 16, 16, 1
    $region33: #{tpu_custom_call.1} parent=1 // pred_fallthru
      _
    // Predicated region
    $region34: #{tpu_custom_call.1} parent=1 // pred_check
      _
    $region35: #{tpu_custom_call.1} parent=1 // pred_check_branch
      %165 = sbr.rel (0) target = $region37
    $region36: #{tpu_custom_call.1} parent=1 // pred_region
      %s167 = ssub.s32 256, 256
      %168 = vsyncadd [#allocation15], %s167
      %s169 = sshll.u32 [#allocation14], 4
      %s170 = int_to_ptr.vmem [resolvable:$true] %s169
      %175 = dma.hbm_to_vmem [thread:$0]  %s17, 256, %s170, [#allocation15], 128, 128, 8
    $region37: #{tpu_custom_call.1} parent=1 // pred_fallthru
      _
    // Predicated region
    $region38: #{tpu_custom_call.1} parent=1 // pred_check
      _
    $region39: #{tpu_custom_call.1} parent=1 // pred_check_branch
      %177 = sbr.rel (0) target = $region41
    $region40: #{tpu_custom_call.1} parent=1 // pred_region
      %s179 = ssub.s32 256, 256
      %180 = vsyncadd [#allocation15], %s179
      %s181 = sshll.u32 [#allocation16], 4
      %s182 = int_to_ptr.vmem [resolvable:$true] %s181
      %187 = dma.hbm_to_vmem [thread:$0]  %s19, 256, %s182, [#allocation15], 128, 128, 8
    $region41: #{tpu_custom_call.1} parent=1 // pred_fallthru
      _
    // Predicated region
    $region42: #{tpu_custom_call.1} parent=1 // pred_check
      _
    $region43: #{tpu_custom_call.1} parent=1 // pred_check_branch
      %189 = sbr.rel (0) target = $region45
    $region44: #{tpu_custom_call.1} parent=1 // pred_region
      %s191 = ssub.s32 256, 256
      %192 = vsyncadd [#allocation18], %s191
      %s193 = sshll.u32 [#allocation17], 4
      %s194 = int_to_ptr.vmem [resolvable:$true] %s193
      %199 = dma.hbm_to_vmem [thread:$0]  %s21, 256, %s194, [#allocation18], 128, 128, 8
    $region45: #{tpu_custom_call.1} parent=1 // pred_fallthru
      _
    // Predicated region
    $region46: #{tpu_custom_call.1} parent=1 // pred_check
      _
    $region47: #{tpu_custom_call.1} parent=1 // pred_check_branch
      %201 = sbr.rel (0) target = $region49
    $region48: #{tpu_custom_call.1} parent=1 // pred_region
      %s203 = ssub.s32 16, 16
      %204 = vsyncadd [#allocation18], %s203
      %s206 = sshll.u32 [#allocation19], 4
      %s207 = int_to_ptr.vmem [resolvable:$true] %s206
      %209 = dma.hbm_to_vmem [thread:$0]  %s23, 16, %s207, [#allocation18]
    $region49: #{tpu_custom_call.1} parent=1 // pred_fallthru
      _
    // Predicated region
    $region50: #{tpu_custom_call.1} parent=1 // pred_check
      _
    $region51: #{tpu_custom_call.1} parent=1 // pred_check_branch
      %211 = sbr.rel (0) target = $region53
    $region52: #{tpu_custom_call.1} parent=1 // pred_region
      %s213 = ssub.s32 512, 512
      %214 = vsyncadd [#allocation21], %s213
      %s215 = sshll.u32 [#allocation20], 4
      %s216 = int_to_ptr.vmem [resolvable:$true] %s215
      %221 = dma.hbm_to_vmem [thread:$0]  %s25, 512, %s216, [#allocation21], 128, 128, 8
    $region53: #{tpu_custom_call.1} parent=1 // pred_fallthru
      _
    // Predicated region
    $region54: #{tpu_custom_call.1} parent=1 // pred_check
      _
    $region55: #{tpu_custom_call.1} parent=1 // pred_check_branch
      %223 = sbr.rel (0) target = $region57
    $region56: #{tpu_custom_call.1} parent=1 // pred_region
      %s225 = ssub.s32 256, 256
      %226 = vsyncadd [#allocation21], %s225
      %s227 = sshll.u32 [#allocation22], 4
      %s228 = int_to_ptr.vmem [resolvable:$true] %s227
      %233 = dma.hbm_to_vmem [thread:$0]  %s27, 256, %s228, [#allocation21], 128, 128, 8
    $region57: #{tpu_custom_call.1} parent=1 // pred_fallthru
      _
    // Predicated region
    $region58: #{tpu_custom_call.1} parent=1 // pred_check
      _
    $region59: #{tpu_custom_call.1} parent=1 // pred_check_branch
      %235 = sbr.rel (0) target = $region61
    $region60: #{tpu_custom_call.1} parent=1 // pred_region
      %s237 = ssub.s32 256, 256
      %238 = vsyncadd [#allocation24], %s237
      %s239 = sshll.u32 [#allocation23], 4
      %s240 = int_to_ptr.vmem [resolvable:$true] %s239
      %245 = dma.hbm_to_vmem [thread:$0]  %s29, 256, %s240, [#allocation24], 128, 128, 8
    $region61: #{tpu_custom_call.1} parent=1 // pred_fallthru
      _
    // Predicated region
    $region62: #{tpu_custom_call.1} parent=1 // pred_check
      _
    $region63: #{tpu_custom_call.1} parent=1 // pred_check_branch
      %247 = sbr.rel (0) target = $region65
    $region64: #{tpu_custom_call.1} parent=1 // pred_region
      %s249 = ssub.s32 256, 256
      %250 = vsyncadd [#allocation24], %s249
      %s251 = sshll.u32 [#allocation25], 4
      %s252 = int_to_ptr.vmem [resolvable:$true] %s251
      %257 = dma.hbm_to_vmem [thread:$0]  %s31, 256, %s252, [#allocation24], 128, 128, 8
    $region65: #{tpu_custom_call.1} parent=1 // pred_fallthru
      _
    // Predicated region
    $region66: #{tpu_custom_call.1} parent=1 // pred_check
      _
    $region67: #{tpu_custom_call.1} parent=1 // pred_check_branch
      %259 = sbr.rel (0) target = $region69
    $region68: #{tpu_custom_call.1} parent=1 // pred_region
      %s261 = ssub.s32 16, 16
      %262 = vsyncadd [#allocation27], %s261
      %s264 = sshll.u32 [#allocation26], 4
      %s265 = int_to_ptr.vmem [resolvable:$true] %s264
      %267 = dma.hbm_to_vmem [thread:$0]  %s33, 16, %s265, [#allocation27]
    $region69: #{tpu_custom_call.1} parent=1 // pred_fallthru
      _
    // Predicated region
    $region70: #{tpu_custom_call.1} parent=1 // pred_check
      _
    $region71: #{tpu_custom_call.1} parent=1 // pred_check_branch
      %269 = sbr.rel (0) target = $region73
    $region72: #{tpu_custom_call.1} parent=1 // pred_region
      %s271 = ssub.s32 512, 512
      %272 = vsyncadd [#allocation27], %s271
      %s273 = sshll.u32 [#allocation28], 4
      %s274 = int_to_ptr.vmem [resolvable:$true] %s273
      %279 = dma.hbm_to_vmem [thread:$0]  %s35, 512, %s274, [#allocation27], 128, 128, 8
    $region73: #{tpu_custom_call.1} parent=1 // pred_fallthru
      _
    // Predicated region
    $region74: #{tpu_custom_call.1} parent=1 // pred_check
      _
    $region75: #{tpu_custom_call.1} parent=1 // pred_check_branch
      %281 = sbr.rel (0) target = $region77
    $region76: #{tpu_custom_call.1} parent=1 // pred_region
      %s283 = ssub.s32 256, 256
      %284 = vsyncadd [#allocation30], %s283
      %s285 = sshll.u32 [#allocation29], 4
      %s286 = int_to_ptr.vmem [resolvable:$true] %s285
      %291 = dma.hbm_to_vmem [thread:$0]  %s37, 256, %s286, [#allocation30], 128, 128, 8
    $region77: #{tpu_custom_call.1} parent=1 // pred_fallthru
      _
    // Predicated region
    $region78: #{tpu_custom_call.1} parent=1 // pred_check
      _
    $region79: #{tpu_custom_call.1} parent=1 // pred_check_branch
      %293 = sbr.rel (0) target = $region81
    $region80: #{tpu_custom_call.1} parent=1 // pred_region
      %s295 = ssub.s32 256, 256
      %296 = vsyncadd [#allocation30], %s295
      %s297 = sshll.u32 [#allocation31], 4
      %s298 = int_to_ptr.vmem [resolvable:$true] %s297
      %303 = dma.hbm_to_vmem [thread:$0]  %s39, 256, %s298, [#allocation30], 128, 128, 8
    $region81: #{tpu_custom_call.1} parent=1 // pred_fallthru
      _
    // Predicated region
    $region82: #{tpu_custom_call.1} parent=1 // pred_check
      _
    $region83: #{tpu_custom_call.1} parent=1 // pred_check_branch
      %305 = sbr.rel (0) target = $region85
    $region84: #{tpu_custom_call.1} parent=1 // pred_region
      %s307 = ssub.s32 256, 256
      %308 = vsyncadd [#allocation33], %s307
      %s309 = sshll.u32 [#allocation32], 4
      %s310 = int_to_ptr.vmem [resolvable:$true] %s309
      %315 = dma.hbm_to_vmem [thread:$0]  %s41, 256, %s310, [#allocation33], 128, 128, 8
    $region85: #{tpu_custom_call.1} parent=1 // pred_fallthru
      _
    // Predicated region
    $region86: #{tpu_custom_call.1} parent=1 // pred_check
      _
    $region87: #{tpu_custom_call.1} parent=1 // pred_check_branch
      %317 = sbr.rel (0) target = $region89
    $region88: #{tpu_custom_call.1} parent=1 // pred_region
      %s319 = ssub.s32 16, 16
      %320 = vsyncadd [#allocation33], %s319
      %s322 = sshll.u32 [#allocation34], 4
      %s323 = int_to_ptr.vmem [resolvable:$true] %s322
      %325 = dma.hbm_to_vmem [thread:$0]  %s43, 16, %s323, [#allocation33]
    $region89: #{tpu_custom_call.1} parent=1 // pred_fallthru
      _
    // Predicated region
    $region90: #{tpu_custom_call.1} parent=1 // pred_check
      _
    $region91: #{tpu_custom_call.1} parent=1 // pred_check_branch
      %327 = sbr.rel (0) target = $region93
    $region92: #{tpu_custom_call.1} parent=1 // pred_region
      %s329 = ssub.s32 512, 512
      %330 = vsyncadd [#allocation36], %s329
      %s331 = sshll.u32 [#allocation35], 4
      %s332 = int_to_ptr.vmem [resolvable:$true] %s331
      %337 = dma.hbm_to_vmem [thread:$0]  %s45, 512, %s332, [#allocation36], 128, 128, 8
    $region93: #{tpu_custom_call.1} parent=1 // pred_fallthru
      _
    // Predicated region
    $region94: #{tpu_custom_call.1} parent=1 // pred_check
      _
    $region95: #{tpu_custom_call.1} parent=1 // pred_check_branch
      %339 = sbr.rel (0) target = $region97
    $region96: #{tpu_custom_call.1} parent=1 // pred_region
      %s341 = ssub.s32 256, 256
      %342 = vsyncadd [#allocation36], %s341
      %s343 = sshll.u32 [#allocation37], 4
      %s344 = int_to_ptr.vmem [resolvable:$true] %s343
      %349 = dma.hbm_to_vmem [thread:$0]  %s47, 256, %s344, [#allocation36], 128, 128, 8
    $region97: #{tpu_custom_call.1} parent=1 // pred_fallthru
      _
    // Predicated region
    $region98: #{tpu_custom_call.1} parent=1 // pred_check
      _
    $region99: #{tpu_custom_call.1} parent=1 // pred_check_branch
      %351 = sbr.rel (0) target = $region101
    $region100: #{tpu_custom_call.1} parent=1 // pred_region
      %s353 = ssub.s32 256, 256
      %354 = vsyncadd [#allocation39], %s353
      %s355 = sshll.u32 [#allocation38], 4
      %s356 = int_to_ptr.vmem [resolvable:$true] %s355
      %361 = dma.hbm_to_vmem [thread:$0]  %s49, 256, %s356, [#allocation39], 128, 128, 8
    $region101: #{tpu_custom_call.1} parent=1 // pred_fallthru
      _
    // Predicated region
    $region102: #{tpu_custom_call.1} parent=1 // pred_check
      _
    $region103: #{tpu_custom_call.1} parent=1 // pred_check_branch
      %363 = sbr.rel (0) target = $region105
    $region104: #{tpu_custom_call.1} parent=1 // pred_region
      %s365 = ssub.s32 256, 256
      %366 = vsyncadd [#allocation39], %s365
      %s367 = sshll.u32 [#allocation40], 4
      %s368 = int_to_ptr.vmem [resolvable:$true] %s367
      %373 = dma.hbm_to_vmem [thread:$0]  %s51, 256, %s368, [#allocation39], 128, 128, 8
    $region105: #{tpu_custom_call.1} parent=1 // pred_fallthru
      _
    // Predicated region
    $region106: #{tpu_custom_call.1} parent=1 // pred_check
      _
    $region107: #{tpu_custom_call.1} parent=1 // pred_check_branch
      %375 = sbr.rel (0) target = $region109
    $region108: #{tpu_custom_call.1} parent=1 // pred_region
      %s377 = ssub.s32 16, 16
      %378 = vsyncadd [#allocation42], %s377
      %s380 = sshll.u32 [#allocation41], 4
      %s381 = int_to_ptr.vmem [resolvable:$true] %s380
      %383 = dma.hbm_to_vmem [thread:$0]  %s53, 16, %s381, [#allocation42]
    $region109: #{tpu_custom_call.1} parent=1 // pred_fallthru
      _
    // Predicated region
    $region110: #{tpu_custom_call.1} parent=1 // pred_check
      _
    $region111: #{tpu_custom_call.1} parent=1 // pred_check_branch
      %385 = sbr.rel (0) target = $region113
    $region112: #{tpu_custom_call.1} parent=1 // pred_region
      %s387 = ssub.s32 16, 16
      %388 = vsyncadd [#allocation42], %s387
      %s390 = sshll.u32 [#allocation43], 4
      %s391 = int_to_ptr.vmem [resolvable:$true] %s390
      %393 = dma.hbm_to_vmem [thread:$0]  %s55, 16, %s391, [#allocation42]
    $region113: #{tpu_custom_call.1} parent=1 // pred_fallthru
      _
    // Predicated region
    $region114: #{tpu_custom_call.1} parent=1 // pred_check
      _
    $region115: #{tpu_custom_call.1} parent=1 // pred_check_branch
      %395 = sbr.rel (0) target = $region117
    $region116: #{tpu_custom_call.1} parent=1 // pred_region
      _
    $region117: #{tpu_custom_call.1} parent=1 // pred_fallthru
      _
    // Predicated region
    $region118: #{tpu_custom_call.1} parent=1 // pred_check
      _
    $region119: #{tpu_custom_call.1} parent=1 // pred_check_branch
      %397 = sbr.rel (0) target = $region121
    $region120: #{tpu_custom_call.1} parent=1 // pred_region
      %398 = dma.done [#allocation4], 384
    $region121: #{tpu_custom_call.1} parent=1 // pred_fallthru
      _
    // Predicated region
    $region122: #{tpu_custom_call.1} parent=1 // pred_check
      _
    $region123: #{tpu_custom_call.1} parent=1 // pred_check_branch
      %400 = sbr.rel (0) target = $region125
    $region124: #{tpu_custom_call.1} parent=1 // pred_region
      %401 = dma.done [#allocation6], 32
    $region125: #{tpu_custom_call.1} parent=1 // pred_fallthru
      _
    // Predicated region
    $region126: #{tpu_custom_call.1} parent=1 // pred_check
      _
    $region127: #{tpu_custom_call.1} parent=1 // pred_check_branch
      %403 = sbr.rel (0) target = $region129
    $region128: #{tpu_custom_call.1} parent=1 // pred_region
      %404 = dma.done [#allocation6], 98304
    $region129: #{tpu_custom_call.1} parent=1 // pred_fallthru
      _
    // Predicated region
    $region130: #{tpu_custom_call.1} parent=1 // pred_check
      _
    $region131: #{tpu_custom_call.1} parent=1 // pred_check_branch
      %406 = sbr.rel (0) target = $region133
    $region132: #{tpu_custom_call.1} parent=1 // pred_region
      %407 = dma.done [#allocation9], 128
    $region133: #{tpu_custom_call.1} parent=1 // pred_fallthru
      _
    // Predicated region
    $region134: #{tpu_custom_call.1} parent=1 // pred_check
      _
    $region135: #{tpu_custom_call.1} parent=1 // pred_check_branch
      %409 = sbr.rel (0) target = $region137
    $region136: #{tpu_custom_call.1} parent=1 // pred_region
      %410 = dma.done [#allocation9], 32768
    $region137: #{tpu_custom_call.1} parent=1 // pred_fallthru
      _
    // Predicated region
    $region138: #{tpu_custom_call.1} parent=1 // pred_check
      _
    $region139: #{tpu_custom_call.1} parent=1 // pred_check_branch
      %412 = sbr.rel (0) target = $region141
    $region140: #{tpu_custom_call.1} parent=1 // pred_region
      %413 = dma.done [#allocation12], 64
    $region141: #{tpu_custom_call.1} parent=1 // pred_fallthru
      _
    // Predicated region
    $region142: #{tpu_custom_call.1} parent=1 // pred_check
      _
    $region143: #{tpu_custom_call.1} parent=1 // pred_check_branch
      %415 = sbr.rel (0) target = $region145
    $region144: #{tpu_custom_call.1} parent=1 // pred_region
      %416 = dma.done [#allocation12], 32
    $region145: #{tpu_custom_call.1} parent=1 // pred_fallthru
      _
    // Predicated region
    $region146: #{tpu_custom_call.1} parent=1 // pred_check
      _
    $region147: #{tpu_custom_call.1} parent=1 // pred_check_branch
      %418 = sbr.rel (0) target = $region149
    $region148: #{tpu_custom_call.1} parent=1 // pred_region
      %419 = dma.done [#allocation15], 256
    $region149: #{tpu_custom_call.1} parent=1 // pred_fallthru
      _
    // Predicated region
    $region150: #{tpu_custom_call.1} parent=1 // pred_check
      _
    $region151: #{tpu_custom_call.1} parent=1 // pred_check_branch
      %421 = sbr.rel (0) target = $region153
    $region152: #{tpu_custom_call.1} parent=1 // pred_region
      %422 = dma.done [#allocation15], 256
    $region153: #{tpu_custom_call.1} parent=1 // pred_fallthru
      _
    // Predicated region
    $region154: #{tpu_custom_call.1} parent=1 // pred_check
      _
    $region155: #{tpu_custom_call.1} parent=1 // pred_check_branch
      %424 = sbr.rel (0) target = $region157
    $region156: #{tpu_custom_call.1} parent=1 // pred_region
      %425 = dma.done [#allocation18], 256
    $region157: #{tpu_custom_call.1} parent=1 // pred_fallthru
      _
    // Predicated region
    $region158: #{tpu_custom_call.1} parent=1 // pred_check
      _
    $region159: #{tpu_custom_call.1} parent=1 // pred_check_branch
      %427 = sbr.rel (0) target = $region161
    $region160: #{tpu_custom_call.1} parent=1 // pred_region
      %428 = dma.done [#allocation18], 16
    $region161: #{tpu_custom_call.1} parent=1 // pred_fallthru
      _
    // Predicated region
    $region162: #{tpu_custom_call.1} parent=1 // pred_check
      _
    $region163: #{tpu_custom_call.1} parent=1 // pred_check_branch
      %430 = sbr.rel (0) target = $region165
    $region164: #{tpu_custom_call.1} parent=1 // pred_region
      %431 = dma.done [#allocation21], 512
    $region165: #{tpu_custom_call.1} parent=1 // pred_fallthru
      _
    // Predicated region
    $region166: #{tpu_custom_call.1} parent=1 // pred_check
      _
    $region167: #{tpu_custom_call.1} parent=1 // pred_check_branch
      %433 = sbr.rel (0) target = $region169
    $region168: #{tpu_custom_call.1} parent=1 // pred_region
      %434 = dma.done [#allocation21], 256
    $region169: #{tpu_custom_call.1} parent=1 // pred_fallthru
      _
    // Predicated region
    $region170: #{tpu_custom_call.1} parent=1 // pred_check
      _
    $region171: #{tpu_custom_call.1} parent=1 // pred_check_branch
      %436 = sbr.rel (0) target = $region173
    $region172: #{tpu_custom_call.1} parent=1 // pred_region
      %437 = dma.done [#allocation24], 256
    $region173: #{tpu_custom_call.1} parent=1 // pred_fallthru
      _
    // Predicated region
    $region174: #{tpu_custom_call.1} parent=1 // pred_check
      _
    $region175: #{tpu_custom_call.1} parent=1 // pred_check_branch
      %439 = sbr.rel (0) target = $region177
    $region176: #{tpu_custom_call.1} parent=1 // pred_region
      %440 = dma.done [#allocation24], 256
    $region177: #{tpu_custom_call.1} parent=1 // pred_fallthru
      _
    // Predicated region
    $region178: #{tpu_custom_call.1} parent=1 // pred_check
      _
    $region179: #{tpu_custom_call.1} parent=1 // pred_check_branch
      %442 = sbr.rel (0) target = $region181
    $region180: #{tpu_custom_call.1} parent=1 // pred_region
      %443 = dma.done [#allocation27], 16
    $region181: #{tpu_custom_call.1} parent=1 // pred_fallthru
      _
    // Predicated region
    $region182: #{tpu_custom_call.1} parent=1 // pred_check
      _
    $region183: #{tpu_custom_call.1} parent=1 // pred_check_branch
      %445 = sbr.rel (0) target = $region185
    $region184: #{tpu_custom_call.1} parent=1 // pred_region
      %446 = dma.done [#allocation27], 512
    $region185: #{tpu_custom_call.1} parent=1 // pred_fallthru
      _
    // Predicated region
    $region186: #{tpu_custom_call.1} parent=1 // pred_check
      _
    $region187: #{tpu_custom_call.1} parent=1 // pred_check_branch
      %448 = sbr.rel (0) target = $region189
    $region188: #{tpu_custom_call.1} parent=1 // pred_region
      %449 = dma.done [#allocation30], 256
    $region189: #{tpu_custom_call.1} parent=1 // pred_fallthru
      _
    // Predicated region
    $region190: #{tpu_custom_call.1} parent=1 // pred_check
      _
    $region191: #{tpu_custom_call.1} parent=1 // pred_check_branch
      %451 = sbr.rel (0) target = $region193
    $region192: #{tpu_custom_call.1} parent=1 // pred_region
      %452 = dma.done [#allocation30], 256
    $region193: #{tpu_custom_call.1} parent=1 // pred_fallthru
      _
    // Predicated region
    $region194: #{tpu_custom_call.1} parent=1 // pred_check
      _
    $region195: #{tpu_custom_call.1} parent=1 // pred_check_branch
      %454 = sbr.rel (0) target = $region197
    $region196: #{tpu_custom_call.1} parent=1 // pred_region
      %455 = dma.done [#allocation33], 256
    $region197: #{tpu_custom_call.1} parent=1 // pred_fallthru
      _
    // Predicated region
    $region198: #{tpu_custom_call.1} parent=1 // pred_check
      _
    $region199: #{tpu_custom_call.1} parent=1 // pred_check_branch
      %457 = sbr.rel (0) target = $region201
    $region200: #{tpu_custom_call.1} parent=1 // pred_region
      %458 = dma.done [#allocation33], 16
    $region201: #{tpu_custom_call.1} parent=1 // pred_fallthru
      _
    // Predicated region
    $region202: #{tpu_custom_call.1} parent=1 // pred_check
      _
    $region203: #{tpu_custom_call.1} parent=1 // pred_check_branch
      %460 = sbr.rel (0) target = $region205
    $region204: #{tpu_custom_call.1} parent=1 // pred_region
      %461 = dma.done [#allocation36], 512
    $region205: #{tpu_custom_call.1} parent=1 // pred_fallthru
      _
    // Predicated region
    $region206: #{tpu_custom_call.1} parent=1 // pred_check
      _
    $region207: #{tpu_custom_call.1} parent=1 // pred_check_branch
      %463 = sbr.rel (0) target = $region209
    $region208: #{tpu_custom_call.1} parent=1 // pred_region
      %464 = dma.done [#allocation36], 256
    $region209: #{tpu_custom_call.1} parent=1 // pred_fallthru
      _
    // Predicated region
    $region210: #{tpu_custom_call.1} parent=1 // pred_check
      _
    $region211: #{tpu_custom_call.1} parent=1 // pred_check_branch
      %466 = sbr.rel (0) target = $region213
    $region212: #{tpu_custom_call.1} parent=1 // pred_region
      %467 = dma.done [#allocation39], 256
    $region213: #{tpu_custom_call.1} parent=1 // pred_fallthru
      _
    // Predicated region
    $region214: #{tpu_custom_call.1} parent=1 // pred_check
      _
    $region215: #{tpu_custom_call.1} parent=1 // pred_check_branch
      %469 = sbr.rel (0) target = $region217
    $region216: #{tpu_custom_call.1} parent=1 // pred_region
      %470 = dma.done [#allocation39], 256
    $region217: #{tpu_custom_call.1} parent=1 // pred_fallthru
      _
    // Predicated region
    $region218: #{tpu_custom_call.1} parent=1 // pred_check
      _
    $region219: #{tpu_custom_call.1} parent=1 // pred_check_branch
      %472 = sbr.rel (0) target = $region221
    $region220: #{tpu_custom_call.1} parent=1 // pred_region
      %473 = dma.done [#allocation42], 16
    $region221: #{tpu_custom_call.1} parent=1 // pred_fallthru
      _
    // Predicated region
    $region222: #{tpu_custom_call.1} parent=1 // pred_check
      _
    $region223: #{tpu_custom_call.1} parent=1 // pred_check_branch
      %475 = sbr.rel (0) target = $region225
    $region224: #{tpu_custom_call.1} parent=1 // pred_region
      %476 = dma.done [#allocation42], 16
    $region225: #{tpu_custom_call.1} parent=1 // pred_fallthru
      _
    %v477 = vld [vmem:[#allocation3] sm:$0xff]
    %v478 = vld [vmem:[#allocation3 + $0x8] sm:$0xf]
    %v479 = vld [vmem:[#allocation7] sm:$0xff]
    %v480 = vld [vmem:[#allocation7 + $0x8] sm:$0xff]
    %v481 = vld [vmem:[#allocation7 + $0x10] sm:$0xff]
    %v482 = vld [vmem:[#allocation7 + $0x18] sm:$0xff]
    %v483 = vld [vmem:[#allocation7 + $0x20] sm:$0xff]
    %v484 = vld [vmem:[#allocation7 + $0x28] sm:$0xff]
    %v485 = vld [vmem:[#allocation7 + $0x30] sm:$0xff]
    %v486 = vld [vmem:[#allocation7 + $0x38] sm:$0xff]
    %v487 = vld [vmem:[#allocation7 + $0x40] sm:$0xff]
    %v488 = vld [vmem:[#allocation7 + $0x48] sm:$0xff]
    %v489 = vld [vmem:[#allocation7 + $0x50] sm:$0xff]
    %v490 = vld [vmem:[#allocation7 + $0x58] sm:$0xff]
    %v491 = vld [vmem:[#allocation7 + $0x60] sm:$0xff]
    %v492 = vld [vmem:[#allocation7 + $0x68] sm:$0xff]
    %v493 = vld [vmem:[#allocation7 + $0x70] sm:$0xff]
    %v494 = vld [vmem:[#allocation7 + $0x78] sm:$0xff]
    %v495 = vld [vmem:[#allocation7 + $0x80] sm:$0xff]
    %v496 = vld [vmem:[#allocation7 + $0x88] sm:$0xff]
    %v497 = vld [vmem:[#allocation7 + $0x90] sm:$0xff]
    %v498 = vld [vmem:[#allocation7 + $0x98] sm:$0xff]
    %v499 = vld [vmem:[#allocation7 + $0xa0] sm:$0xff]
    %v500 = vld [vmem:[#allocation7 + $0xa8] sm:$0xff]
    %v501 = vld [vmem:[#allocation7 + $0xb0] sm:$0xff]
    %v502 = vld [vmem:[#allocation7 + $0xb8] sm:$0xff]
    %v503 = vld [vmem:[#allocation7 + $0xc0] sm:$0xff]
    %v504 = vld [vmem:[#allocation7 + $0xc8] sm:$0xff]
    %v505 = vld [vmem:[#allocation7 + $0xd0] sm:$0xff]
    %v506 = vld [vmem:[#allocation7 + $0xd8] sm:$0xff]
    %v507 = vld [vmem:[#allocation7 + $0xe0] sm:$0xff]
    %v508 = vld [vmem:[#allocation7 + $0xe8] sm:$0xff]
    %v509 = vld [vmem:[#allocation7 + $0xf0] sm:$0xff]
    %v510 = vld [vmem:[#allocation7 + $0xf8] sm:$0xff]
    %v511 = vld [vmem:[#allocation7 + $0x100] sm:$0xff]
    %v512 = vld [vmem:[#allocation7 + $0x108] sm:$0xff]
    %v513 = vld [vmem:[#allocation7 + $0x110] sm:$0xff]
    %v514 = vld [vmem:[#allocation7 + $0x118] sm:$0xff]
    %v515 = vld [vmem:[#allocation7 + $0x120] sm:$0xff]
    %v516 = vld [vmem:[#allocation7 + $0x128] sm:$0xff]
    %v517 = vld [vmem:[#allocation7 + $0x130] sm:$0xff]
    %v518 = vld [vmem:[#allocation7 + $0x138] sm:$0xff]
    %v519 = vld [vmem:[#allocation7 + $0x140] sm:$0xff]
    %v520 = vld [vmem:[#allocation7 + $0x148] sm:$0xff]
    %v521 = vld [vmem:[#allocation7 + $0x150] sm:$0xff]
    %v522 = vld [vmem:[#allocation7 + $0x158] sm:$0xff]
    %v523 = vld [vmem:[#allocation7 + $0x160] sm:$0xff]
    %v524 = vld [vmem:[#allocation7 + $0x168] sm:$0xff]
    %v525 = vld [vmem:[#allocation7 + $0x170] sm:$0xff]
    %v526 = vld [vmem:[#allocation7 + $0x178] sm:$0xff]
    %v527 = vld [vmem:[#allocation7 + $0x180] sm:$0xff]
    %v528 = vld [vmem:[#allocation7 + $0x188] sm:$0xff]
    %v529 = vld [vmem:[#allocation7 + $0x190] sm:$0xff]
    %v530 = vld [vmem:[#allocation7 + $0x198] sm:$0xff]
    %v531 = vld [vmem:[#allocation7 + $0x1a0] sm:$0xff]
    %v532 = vld [vmem:[#allocation7 + $0x1a8] sm:$0xff]
    %v533 = vld [vmem:[#allocation7 + $0x1b0] sm:$0xff]
    %v534 = vld [vmem:[#allocation7 + $0x1b8] sm:$0xff]
    %v535 = vld [vmem:[#allocation7 + $0x1c0] sm:$0xff]
    %v536 = vld [vmem:[#allocation7 + $0x1c8] sm:$0xff]
    %v537 = vld [vmem:[#allocation7 + $0x1d0] sm:$0xff]
    %v538 = vld [vmem:[#allocation7 + $0x1d8] sm:$0xff]
    %v539 = vld [vmem:[#allocation7 + $0x1e0] sm:$0xff]
    %v540 = vld [vmem:[#allocation7 + $0x1e8] sm:$0xff]
    %v541 = vld [vmem:[#allocation7 + $0x1f0] sm:$0xff]
    %v542 = vld [vmem:[#allocation7 + $0x1f8] sm:$0xff]
    %v543 = vld [vmem:[#allocation7 + $0x200] sm:$0xff]
    %v544 = vld [vmem:[#allocation7 + $0x208] sm:$0xff]
    %v545 = vld [vmem:[#allocation7 + $0x210] sm:$0xff]
    %v546 = vld [vmem:[#allocation7 + $0x218] sm:$0xff]
    %v547 = vld [vmem:[#allocation7 + $0x220] sm:$0xff]
    %v548 = vld [vmem:[#allocation7 + $0x228] sm:$0xff]
    %v549 = vld [vmem:[#allocation7 + $0x230] sm:$0xff]
    %v550 = vld [vmem:[#allocation7 + $0x238] sm:$0xff]
    %v551 = vld [vmem:[#allocation7 + $0x240] sm:$0xff]
    %v552 = vld [vmem:[#allocation7 + $0x248] sm:$0xff]
    %v553 = vld [vmem:[#allocation7 + $0x250] sm:$0xff]
    %v554 = vld [vmem:[#allocation7 + $0x258] sm:$0xff]
    %v555 = vld [vmem:[#allocation7 + $0x260] sm:$0xff]
    %v556 = vld [vmem:[#allocation7 + $0x268] sm:$0xff]
    %v557 = vld [vmem:[#allocation7 + $0x270] sm:$0xff]
    %v558 = vld [vmem:[#allocation7 + $0x278] sm:$0xff]
    %v559 = vld [vmem:[#allocation7 + $0x280] sm:$0xff]
    %v560 = vld [vmem:[#allocation7 + $0x288] sm:$0xff]
    %v561 = vld [vmem:[#allocation7 + $0x290] sm:$0xff]
    %v562 = vld [vmem:[#allocation7 + $0x298] sm:$0xff]
    %v563 = vld [vmem:[#allocation7 + $0x2a0] sm:$0xff]
    %v564 = vld [vmem:[#allocation7 + $0x2a8] sm:$0xff]
    %v565 = vld [vmem:[#allocation7 + $0x2b0] sm:$0xff]
    %v566 = vld [vmem:[#allocation7 + $0x2b8] sm:$0xff]
    %v567 = vld [vmem:[#allocation7 + $0x2c0] sm:$0xff]
    %v568 = vld [vmem:[#allocation7 + $0x2c8] sm:$0xff]
    %v569 = vld [vmem:[#allocation7 + $0x2d0] sm:$0xff]
    %v570 = vld [vmem:[#allocation7 + $0x2d8] sm:$0xff]
    %v571 = vld [vmem:[#allocation7 + $0x2e0] sm:$0xff]
    %v572 = vld [vmem:[#allocation7 + $0x2e8] sm:$0xff]
    %v573 = vld [vmem:[#allocation7 + $0x2f0] sm:$0xff]
    %v574 = vld [vmem:[#allocation7 + $0x2f8] sm:$0xff]
    %v575 = vld [vmem:[#allocation7 + $0x300] sm:$0xff]
    %v576 = vld [vmem:[#allocation7 + $0x308] sm:$0xff]
    %v577 = vld [vmem:[#allocation7 + $0x310] sm:$0xff]
    %v578 = vld [vmem:[#allocation7 + $0x318] sm:$0xff]
    %v579 = vld [vmem:[#allocation7 + $0x320] sm:$0xff]
    %v580 = vld [vmem:[#allocation7 + $0x328] sm:$0xff]
    %v581 = vld [vmem:[#allocation7 + $0x330] sm:$0xff]
    %v582 = vld [vmem:[#allocation7 + $0x338] sm:$0xff]
    %v583 = vld [vmem:[#allocation7 + $0x340] sm:$0xff]
    %v584 = vld [vmem:[#allocation7 + $0x348] sm:$0xff]
    %v585 = vld [vmem:[#allocation7 + $0x350] sm:$0xff]
    %v586 = vld [vmem:[#allocation7 + $0x358] sm:$0xff]
    %v587 = vld [vmem:[#allocation7 + $0x360] sm:$0xff]
    %v588 = vld [vmem:[#allocation7 + $0x368] sm:$0xff]
    %v589 = vld [vmem:[#allocation7 + $0x370] sm:$0xff]
    %v590 = vld [vmem:[#allocation7 + $0x378] sm:$0xff]
    %v591 = vld [vmem:[#allocation7 + $0x380] sm:$0xff]
    %v592 = vld [vmem:[#allocation7 + $0x388] sm:$0xff]
    %v593 = vld [vmem:[#allocation7 + $0x390] sm:$0xff]
    %v594 = vld [vmem:[#allocation7 + $0x398] sm:$0xff]
    %v595 = vld [vmem:[#allocation7 + $0x3a0] sm:$0xff]
    %v596 = vld [vmem:[#allocation7 + $0x3a8] sm:$0xff]
    %v597 = vld [vmem:[#allocation7 + $0x3b0] sm:$0xff]
    %v598 = vld [vmem:[#allocation7 + $0x3b8] sm:$0xff]
    %v599 = vld [vmem:[#allocation7 + $0x3c0] sm:$0xff]
    %v600 = vld [vmem:[#allocation7 + $0x3c8] sm:$0xff]
    %v601 = vld [vmem:[#allocation7 + $0x3d0] sm:$0xff]
    %v602 = vld [vmem:[#allocation7 + $0x3d8] sm:$0xff]
    %v603 = vld [vmem:[#allocation7 + $0x3e0] sm:$0xff]
    %v604 = vld [vmem:[#allocation7 + $0x3e8] sm:$0xff]
    %v605 = vld [vmem:[#allocation7 + $0x3f0] sm:$0xff]
    %v606 = vld [vmem:[#allocation7 + $0x3f8] sm:$0xff]
    %v607 = vld [vmem:[#allocation7 + $0x400] sm:$0xff]
    %v608 = vld [vmem:[#allocation7 + $0x408] sm:$0xff]
    %v609 = vld [vmem:[#allocation7 + $0x410] sm:$0xff]
    %v610 = vld [vmem:[#allocation7 + $0x418] sm:$0xff]
    %v611 = vld [vmem:[#allocation7 + $0x420] sm:$0xff]
    %v612 = vld [vmem:[#allocation7 + $0x428] sm:$0xff]
    %v613 = vld [vmem:[#allocation7 + $0x430] sm:$0xff]
    %v614 = vld [vmem:[#allocation7 + $0x438] sm:$0xff]
    %v615 = vld [vmem:[#allocation7 + $0x440] sm:$0xff]
    %v616 = vld [vmem:[#allocation7 + $0x448] sm:$0xff]
    %v617 = vld [vmem:[#allocation7 + $0x450] sm:$0xff]
    %v618 = vld [vmem:[#allocation7 + $0x458] sm:$0xff]
    %v619 = vld [vmem:[#allocation7 + $0x460] sm:$0xff]
    %v620 = vld [vmem:[#allocation7 + $0x468] sm:$0xff]
    %v621 = vld [vmem:[#allocation7 + $0x470] sm:$0xff]
    %v622 = vld [vmem:[#allocation7 + $0x478] sm:$0xff]
    %v623 = vld [vmem:[#allocation7 + $0x480] sm:$0xff]
    %v624 = vld [vmem:[#allocation7 + $0x488] sm:$0xff]
    %v625 = vld [vmem:[#allocation7 + $0x490] sm:$0xff]
    %v626 = vld [vmem:[#allocation7 + $0x498] sm:$0xff]
    %v627 = vld [vmem:[#allocation7 + $0x4a0] sm:$0xff]
    %v628 = vld [vmem:[#allocation7 + $0x4a8] sm:$0xff]
    %v629 = vld [vmem:[#allocation7 + $0x4b0] sm:$0xff]
    %v630 = vld [vmem:[#allocation7 + $0x4b8] sm:$0xff]
    %v631 = vld [vmem:[#allocation7 + $0x4c0] sm:$0xff]
    %v632 = vld [vmem:[#allocation7 + $0x4c8] sm:$0xff]
    %v633 = vld [vmem:[#allocation7 + $0x4d0] sm:$0xff]
    %v634 = vld [vmem:[#allocation7 + $0x4d8] sm:$0xff]
    %v635 = vld [vmem:[#allocation7 + $0x4e0] sm:$0xff]
    %v636 = vld [vmem:[#allocation7 + $0x4e8] sm:$0xff]
    %v637 = vld [vmem:[#allocation7 + $0x4f0] sm:$0xff]
    %v638 = vld [vmem:[#allocation7 + $0x4f8] sm:$0xff]
    %v639 = vld [vmem:[#allocation7 + $0x500] sm:$0xff]
    %v640 = vld [vmem:[#allocation7 + $0x508] sm:$0xff]
    %v641 = vld [vmem:[#allocation7 + $0x510] sm:$0xff]
    %v642 = vld [vmem:[#allocation7 + $0x518] sm:$0xff]
    %v643 = vld [vmem:[#allocation7 + $0x520] sm:$0xff]
    %v644 = vld [vmem:[#allocation7 + $0x528] sm:$0xff]
    %v645 = vld [vmem:[#allocation7 + $0x530] sm:$0xff]
    %v646 = vld [vmem:[#allocation7 + $0x538] sm:$0xff]
    %v647 = vld [vmem:[#allocation7 + $0x540] sm:$0xff]
    %v648 = vld [vmem:[#allocation7 + $0x548] sm:$0xff]
    %v649 = vld [vmem:[#allocation7 + $0x550] sm:$0xff]
    %v650 = vld [vmem:[#allocation7 + $0x558] sm:$0xff]
    %v651 = vld [vmem:[#allocation7 + $0x560] sm:$0xff]
    %v652 = vld [vmem:[#allocation7 + $0x568] sm:$0xff]
    %v653 = vld [vmem:[#allocation7 + $0x570] sm:$0xff]
    %v654 = vld [vmem:[#allocation7 + $0x578] sm:$0xff]
    %v655 = vld [vmem:[#allocation7 + $0x580] sm:$0xff]
    %v656 = vld [vmem:[#allocation7 + $0x588] sm:$0xff]
    %v657 = vld [vmem:[#allocation7 + $0x590] sm:$0xff]
    %v658 = vld [vmem:[#allocation7 + $0x598] sm:$0xff]
    %v659 = vld [vmem:[#allocation7 + $0x5a0] sm:$0xff]
    %v660 = vld [vmem:[#allocation7 + $0x5a8] sm:$0xff]
    %v661 = vld [vmem:[#allocation7 + $0x5b0] sm:$0xff]
    %v662 = vld [vmem:[#allocation7 + $0x5b8] sm:$0xff]
    %v663 = vld [vmem:[#allocation7 + $0x5c0] sm:$0xff]
    %v664 = vld [vmem:[#allocation7 + $0x5c8] sm:$0xff]
    %v665 = vld [vmem:[#allocation7 + $0x5d0] sm:$0xff]
    %v666 = vld [vmem:[#allocation7 + $0x5d8] sm:$0xff]
    %v667 = vld [vmem:[#allocation7 + $0x5e0] sm:$0xff]
    %v668 = vld [vmem:[#allocation7 + $0x5e8] sm:$0xff]
    %v669 = vld [vmem:[#allocation7 + $0x5f0] sm:$0xff]
    %v670 = vld [vmem:[#allocation7 + $0x5f8] sm:$0xff]
    %v671 = vld [vmem:[#allocation7 + $0x600] sm:$0xff]
    %v672 = vld [vmem:[#allocation7 + $0x608] sm:$0xff]
    %v673 = vld [vmem:[#allocation7 + $0x610] sm:$0xff]
    %v674 = vld [vmem:[#allocation7 + $0x618] sm:$0xff]
    %v675 = vld [vmem:[#allocation7 + $0x620] sm:$0xff]
    %v676 = vld [vmem:[#allocation7 + $0x628] sm:$0xff]
    %v677 = vld [vmem:[#allocation7 + $0x630] sm:$0xff]
    %v678 = vld [vmem:[#allocation7 + $0x638] sm:$0xff]
    %v679 = vld [vmem:[#allocation7 + $0x640] sm:$0xff]
    %v680 = vld [vmem:[#allocation7 + $0x648] sm:$0xff]
    %v681 = vld [vmem:[#allocation7 + $0x650] sm:$0xff]
    %v682 = vld [vmem:[#allocation7 + $0x658] sm:$0xff]
    %v683 = vld [vmem:[#allocation7 + $0x660] sm:$0xff]
    %v684 = vld [vmem:[#allocation7 + $0x668] sm:$0xff]
    %v685 = vld [vmem:[#allocation7 + $0x670] sm:$0xff]
    %v686 = vld [vmem:[#allocation7 + $0x678] sm:$0xff]
    %v687 = vld [vmem:[#allocation7 + $0x680] sm:$0xff]
    %v688 = vld [vmem:[#allocation7 + $0x688] sm:$0xff]
    %v689 = vld [vmem:[#allocation7 + $0x690] sm:$0xff]
    %v690 = vld [vmem:[#allocation7 + $0x698] sm:$0xff]
    %v691 = vld [vmem:[#allocation7 + $0x6a0] sm:$0xff]
    %v692 = vld [vmem:[#allocation7 + $0x6a8] sm:$0xff]
    %v693 = vld [vmem:[#allocation7 + $0x6b0] sm:$0xff]
    %v694 = vld [vmem:[#allocation7 + $0x6b8] sm:$0xff]
    %v695 = vld [vmem:[#allocation7 + $0x6c0] sm:$0xff]
    %v696 = vld [vmem:[#allocation7 + $0x6c8] sm:$0xff]
    %v697 = vld [vmem:[#allocation7 + $0x6d0] sm:$0xff]
    %v698 = vld [vmem:[#allocation7 + $0x6d8] sm:$0xff]
    %v699 = vld [vmem:[#allocation7 + $0x6e0] sm:$0xff]
    %v700 = vld [vmem:[#allocation7 + $0x6e8] sm:$0xff]
    %v701 = vld [vmem:[#allocation7 + $0x6f0] sm:$0xff]
    %v702 = vld [vmem:[#allocation7 + $0x6f8] sm:$0xff]
    %v703 = vld [vmem:[#allocation7 + $0x700] sm:$0xff]
    %v704 = vld [vmem:[#allocation7 + $0x708] sm:$0xff]
    %v705 = vld [vmem:[#allocation7 + $0x710] sm:$0xff]
    %v706 = vld [vmem:[#allocation7 + $0x718] sm:$0xff]
    %v707 = vld [vmem:[#allocation7 + $0x720] sm:$0xff]
    %v708 = vld [vmem:[#allocation7 + $0x728] sm:$0xff]
    %v709 = vld [vmem:[#allocation7 + $0x730] sm:$0xff]
    %v710 = vld [vmem:[#allocation7 + $0x738] sm:$0xff]
    %v711 = vld [vmem:[#allocation7 + $0x740] sm:$0xff]
    %v712 = vld [vmem:[#allocation7 + $0x748] sm:$0xff]
    %v713 = vld [vmem:[#allocation7 + $0x750] sm:$0xff]
    %v714 = vld [vmem:[#allocation7 + $0x758] sm:$0xff]
    %v715 = vld [vmem:[#allocation7 + $0x760] sm:$0xff]
    %v716 = vld [vmem:[#allocation7 + $0x768] sm:$0xff]
    %v717 = vld [vmem:[#allocation7 + $0x770] sm:$0xff]
    %v718 = vld [vmem:[#allocation7 + $0x778] sm:$0xff]
    %v719 = vld [vmem:[#allocation7 + $0x780] sm:$0xff]
    %v720 = vld [vmem:[#allocation7 + $0x788] sm:$0xff]
    %v721 = vld [vmem:[#allocation7 + $0x790] sm:$0xff]
    %v722 = vld [vmem:[#allocation7 + $0x798] sm:$0xff]
    %v723 = vld [vmem:[#allocation7 + $0x7a0] sm:$0xff]
    %v724 = vld [vmem:[#allocation7 + $0x7a8] sm:$0xff]
    %v725 = vld [vmem:[#allocation7 + $0x7b0] sm:$0xff]
    %v726 = vld [vmem:[#allocation7 + $0x7b8] sm:$0xff]
    %v727 = vld [vmem:[#allocation7 + $0x7c0] sm:$0xff]
    %v728 = vld [vmem:[#allocation7 + $0x7c8] sm:$0xff]
    %v729 = vld [vmem:[#allocation7 + $0x7d0] sm:$0xff]
    %v730 = vld [vmem:[#allocation7 + $0x7d8] sm:$0xff]
    %v731 = vld [vmem:[#allocation7 + $0x7e0] sm:$0xff]
    %v732 = vld [vmem:[#allocation7 + $0x7e8] sm:$0xff]
    %v733 = vld [vmem:[#allocation7 + $0x7f0] sm:$0xff]
    %v734 = vld [vmem:[#allocation7 + $0x7f8] sm:$0xff]
    %v735 = vld [vmem:[#allocation7 + $0x800] sm:$0xff]
    %v736 = vld [vmem:[#allocation7 + $0x808] sm:$0xff]
    %v737 = vld [vmem:[#allocation7 + $0x810] sm:$0xff]
    %v738 = vld [vmem:[#allocation7 + $0x818] sm:$0xff]
    %v739 = vld [vmem:[#allocation7 + $0x820] sm:$0xff]
    %v740 = vld [vmem:[#allocation7 + $0x828] sm:$0xff]
    %v741 = vld [vmem:[#allocation7 + $0x830] sm:$0xff]
    %v742 = vld [vmem:[#allocation7 + $0x838] sm:$0xff]
    %v743 = vld [vmem:[#allocation7 + $0x840] sm:$0xff]
    %v744 = vld [vmem:[#allocation7 + $0x848] sm:$0xff]
    %v745 = vld [vmem:[#allocation7 + $0x850] sm:$0xff]
    %v746 = vld [vmem:[#allocation7 + $0x858] sm:$0xff]
    %v747 = vld [vmem:[#allocation7 + $0x860] sm:$0xff]
    %v748 = vld [vmem:[#allocation7 + $0x868] sm:$0xff]
    %v749 = vld [vmem:[#allocation7 + $0x870] sm:$0xff]
    %v750 = vld [vmem:[#allocation7 + $0x878] sm:$0xff]
    %v751 = vld [vmem:[#allocation7 + $0x880] sm:$0xff]
    %v752 = vld [vmem:[#allocation7 + $0x888] sm:$0xff]
    %v753 = vld [vmem:[#allocation7 + $0x890] sm:$0xff]
    %v754 = vld [vmem:[#allocation7 + $0x898] sm:$0xff]
    %v755 = vld [vmem:[#allocation7 + $0x8a0] sm:$0xff]
    %v756 = vld [vmem:[#allocation7 + $0x8a8] sm:$0xff]
    %v757 = vld [vmem:[#allocation7 + $0x8b0] sm:$0xff]
    %v758 = vld [vmem:[#allocation7 + $0x8b8] sm:$0xff]
    %v759 = vld [vmem:[#allocation7 + $0x8c0] sm:$0xff]
    %v760 = vld [vmem:[#allocation7 + $0x8c8] sm:$0xff]
    %v761 = vld [vmem:[#allocation7 + $0x8d0] sm:$0xff]
    %v762 = vld [vmem:[#allocation7 + $0x8d8] sm:$0xff]
    %v763 = vld [vmem:[#allocation7 + $0x8e0] sm:$0xff]
    %v764 = vld [vmem:[#allocation7 + $0x8e8] sm:$0xff]
    %v765 = vld [vmem:[#allocation7 + $0x8f0] sm:$0xff]
    %v766 = vld [vmem:[#allocation7 + $0x8f8] sm:$0xff]
    %v767 = vld [vmem:[#allocation7 + $0x900] sm:$0xff]
    %v768 = vld [vmem:[#allocation7 + $0x908] sm:$0xff]
    %v769 = vld [vmem:[#allocation7 + $0x910] sm:$0xff]
    %v770 = vld [vmem:[#allocation7 + $0x918] sm:$0xff]
    %v771 = vld [vmem:[#allocation7 + $0x920] sm:$0xff]
    %v772 = vld [vmem:[#allocation7 + $0x928] sm:$0xff]
    %v773 = vld [vmem:[#allocation7 + $0x930] sm:$0xff]
    %v774 = vld [vmem:[#allocation7 + $0x938] sm:$0xff]
    %v775 = vld [vmem:[#allocation7 + $0x940] sm:$0xff]
    %v776 = vld [vmem:[#allocation7 + $0x948] sm:$0xff]
    %v777 = vld [vmem:[#allocation7 + $0x950] sm:$0xff]
    %v778 = vld [vmem:[#allocation7 + $0x958] sm:$0xff]
    %v779 = vld [vmem:[#allocation7 + $0x960] sm:$0xff]
    %v780 = vld [vmem:[#allocation7 + $0x968] sm:$0xff]
    %v781 = vld [vmem:[#allocation7 + $0x970] sm:$0xff]
    %v782 = vld [vmem:[#allocation7 + $0x978] sm:$0xff]
    %v783 = vld [vmem:[#allocation7 + $0x980] sm:$0xff]
    %v784 = vld [vmem:[#allocation7 + $0x988] sm:$0xff]
    %v785 = vld [vmem:[#allocation7 + $0x990] sm:$0xff]
    %v786 = vld [vmem:[#allocation7 + $0x998] sm:$0xff]
    %v787 = vld [vmem:[#allocation7 + $0x9a0] sm:$0xff]
    %v788 = vld [vmem:[#allocation7 + $0x9a8] sm:$0xff]
    %v789 = vld [vmem:[#allocation7 + $0x9b0] sm:$0xff]
    %v790 = vld [vmem:[#allocation7 + $0x9b8] sm:$0xff]
    %v791 = vld [vmem:[#allocation7 + $0x9c0] sm:$0xff]
    %v792 = vld [vmem:[#allocation7 + $0x9c8] sm:$0xff]
    %v793 = vld [vmem:[#allocation7 + $0x9d0] sm:$0xff]
    %v794 = vld [vmem:[#allocation7 + $0x9d8] sm:$0xff]
    %v795 = vld [vmem:[#allocation7 + $0x9e0] sm:$0xff]
    %v796 = vld [vmem:[#allocation7 + $0x9e8] sm:$0xff]
    %v797 = vld [vmem:[#allocation7 + $0x9f0] sm:$0xff]
    %v798 = vld [vmem:[#allocation7 + $0x9f8] sm:$0xff]
    %v799 = vld [vmem:[#allocation7 + $0xa00] sm:$0xff]
    %v800 = vld [vmem:[#allocation7 + $0xa08] sm:$0xff]
    %v801 = vld [vmem:[#allocation7 + $0xa10] sm:$0xff]
    %v802 = vld [vmem:[#allocation7 + $0xa18] sm:$0xff]
    %v803 = vld [vmem:[#allocation7 + $0xa20] sm:$0xff]
    %v804 = vld [vmem:[#allocation7 + $0xa28] sm:$0xff]
    %v805 = vld [vmem:[#allocation7 + $0xa30] sm:$0xff]
    %v806 = vld [vmem:[#allocation7 + $0xa38] sm:$0xff]
    %v807 = vld [vmem:[#allocation7 + $0xa40] sm:$0xff]
    %v808 = vld [vmem:[#allocation7 + $0xa48] sm:$0xff]
    %v809 = vld [vmem:[#allocation7 + $0xa50] sm:$0xff]
    %v810 = vld [vmem:[#allocation7 + $0xa58] sm:$0xff]
    %v811 = vld [vmem:[#allocation7 + $0xa60] sm:$0xff]
    %v812 = vld [vmem:[#allocation7 + $0xa68] sm:$0xff]
    %v813 = vld [vmem:[#allocation7 + $0xa70] sm:$0xff]
    %v814 = vld [vmem:[#allocation7 + $0xa78] sm:$0xff]
    %v815 = vld [vmem:[#allocation7 + $0xa80] sm:$0xff]
    %v816 = vld [vmem:[#allocation7 + $0xa88] sm:$0xff]
    %v817 = vld [vmem:[#allocation7 + $0xa90] sm:$0xff]
    %v818 = vld [vmem:[#allocation7 + $0xa98] sm:$0xff]
    %v819 = vld [vmem:[#allocation7 + $0xaa0] sm:$0xff]
    %v820 = vld [vmem:[#allocation7 + $0xaa8] sm:$0xff]
    %v821 = vld [vmem:[#allocation7 + $0xab0] sm:$0xff]
    %v822 = vld [vmem:[#allocation7 + $0xab8] sm:$0xff]
    %v823 = vld [vmem:[#allocation7 + $0xac0] sm:$0xff]
    %v824 = vld [vmem:[#allocation7 + $0xac8] sm:$0xff]
    %v825 = vld [vmem:[#allocation7 + $0xad0] sm:$0xff]
    %v826 = vld [vmem:[#allocation7 + $0xad8] sm:$0xff]
    %v827 = vld [vmem:[#allocation7 + $0xae0] sm:$0xff]
    %v828 = vld [vmem:[#allocation7 + $0xae8] sm:$0xff]
    %v829 = vld [vmem:[#allocation7 + $0xaf0] sm:$0xff]
    %v830 = vld [vmem:[#allocation7 + $0xaf8] sm:$0xff]
    %v831 = vld [vmem:[#allocation7 + $0xb00] sm:$0xff]
    %v832 = vld [vmem:[#allocation7 + $0xb08] sm:$0xff]
    %v833 = vld [vmem:[#allocation7 + $0xb10] sm:$0xff]
    %v834 = vld [vmem:[#allocation7 + $0xb18] sm:$0xff]
    %v835 = vld [vmem:[#allocation7 + $0xb20] sm:$0xff]
    %v836 = vld [vmem:[#allocation7 + $0xb28] sm:$0xff]
    %v837 = vld [vmem:[#allocation7 + $0xb30] sm:$0xff]
    %v838 = vld [vmem:[#allocation7 + $0xb38] sm:$0xff]
    %v839 = vld [vmem:[#allocation7 + $0xb40] sm:$0xff]
    %v840 = vld [vmem:[#allocation7 + $0xb48] sm:$0xff]
    %v841 = vld [vmem:[#allocation7 + $0xb50] sm:$0xff]
    %v842 = vld [vmem:[#allocation7 + $0xb58] sm:$0xff]
    %v843 = vld [vmem:[#allocation7 + $0xb60] sm:$0xff]
    %v844 = vld [vmem:[#allocation7 + $0xb68] sm:$0xff]
    %v845 = vld [vmem:[#allocation7 + $0xb70] sm:$0xff]
    %v846 = vld [vmem:[#allocation7 + $0xb78] sm:$0xff]
    %v847 = vld [vmem:[#allocation7 + $0xb80] sm:$0xff]
    %v848 = vld [vmem:[#allocation7 + $0xb88] sm:$0xff]
    %v849 = vld [vmem:[#allocation7 + $0xb90] sm:$0xff]
    %v850 = vld [vmem:[#allocation7 + $0xb98] sm:$0xff]
    %v851 = vld [vmem:[#allocation7 + $0xba0] sm:$0xff]
    %v852 = vld [vmem:[#allocation7 + $0xba8] sm:$0xff]
    %v853 = vld [vmem:[#allocation7 + $0xbb0] sm:$0xff]
    %v854 = vld [vmem:[#allocation7 + $0xbb8] sm:$0xff]
    %v855 = vld [vmem:[#allocation7 + $0xbc0] sm:$0xff]
    %v856 = vld [vmem:[#allocation7 + $0xbc8] sm:$0xff]
    %v857 = vld [vmem:[#allocation7 + $0xbd0] sm:$0xff]
    %v858 = vld [vmem:[#allocation7 + $0xbd8] sm:$0xff]
    %v859 = vld [vmem:[#allocation7 + $0xbe0] sm:$0xff]
    %v860 = vld [vmem:[#allocation7 + $0xbe8] sm:$0xff]
    %v861 = vld [vmem:[#allocation7 + $0xbf0] sm:$0xff]
    %v862 = vld [vmem:[#allocation7 + $0xbf8] sm:$0xff]
    %v863 = vld [vmem:[#allocation8] sm:$0xf]
    %v865 = vlaneseq
    %v866 = vshrl.u32 %v865, 7
    %v867 = vsub.s32 0, %v866
    %v868 = vrot.slane %v863, %v867
    %v869 = vlaneseq
    %v870 = vshrl.u32 %v869, 7
    %v871 = vsub.s32 1, %v870
    %v872 = vrot.slane %v863, %v871
    %v873 = vlaneseq
    %v874 = vshrl.u32 %v873, 7
    %v875 = vsub.s32 2, %v874
    %v876 = vrot.slane %v863, %v875
    %v877 = vlaneseq
    %v878 = vshrl.u32 %v877, 7
    %v879 = vsub.s32 3, %v878
    %v880 = vrot.slane %v863, %v879
    %v887 = vcombine.high %v477, %v477
    %v889 = vunpack.c.l.s4 1983009808
    %v890 = vunpack.c.0.s8 %v889
    %v891 = vlaneseq
    %v892 = vshrl.u32 %v891, 7
    %v893 = vsub.s32 %v890, %v892
    %v894 = vrot.slane %v477, %v893
    %v896 = vunpack.c.l.s4 1983009808
    %v897 = vunpack.c.0.s8 %v896
    %v898 = vlaneseq
    %v899 = vshrl.u32 %v898, 7
    %v900 = vsub.s32 %v897, %v899
    %v901 = vrot.slane %v887, %v900
    %v902 = vcombine.high %v894, %v894
    %v903 = vcombine.high %v901, %v901
    %v905 = vunpack.c.l.s4 1983009808
    %v906 = vunpack.c.0.s8 %v905
    %v907 = vlaneseq
    %v908 = vshrl.u32 %v907, 7
    %v909 = vsub.s32 %v906, %v908
    %v910 = vrot.slane %v478, %v909
    %v911 = vcombine.high %v910, %v910
    %918 = vmatprep.subr.mxu0 %v480
    %919 = vmatpush1.msra.mxu0 %v479
    %920 = vmatprep.subr.mxu0 %v484
    %921 = vmatpush1.msra.mxu0 %v483
    %922 = vmatprep.subr.mxu0 %v488
    %923 = vmatpush1.msra.mxu0 %v487
    %924 = vmatprep.subr.mxu0 %v492
    %925 = vmatpush1.msra.mxu0 %v491
    %926 = vmatprep.subr.mxu0 %v496
    %927 = vmatpush1.msra.mxu0 %v495
    %928 = vmatprep.subr.mxu0 %v500
    %929 = vmatpush1.msra.mxu0 %v499
    %930 = vmatprep.subr.mxu0 %v504
    %931 = vmatpush1.msra.mxu0 %v503
    %932 = vmatprep.subr.mxu0 %v508
    %933 = vmatpush1.msra.mxu0 %v507
    %934 = vmatprep.subr.mxu0 %v512
    %935 = vmatpush1.msra.mxu0 %v511
    %936 = vmatprep.subr.mxu0 %v516
    %937 = vmatpush1.msra.mxu0 %v515
    %938 = vmatprep.subr.mxu0 %v520
    %939 = vmatpush1.msra.mxu0 %v519
    %940 = vmatprep.subr.mxu0 %v524
    %941 = vmatpush1.msra.mxu0 %v523
    %942 = vmatprep.subr.mxu0 %v528
    %943 = vmatpush1.msra.mxu0 %v527
    %944 = vmatprep.subr.mxu0 %v532
    %945 = vmatpush1.msra.mxu0 %v531
    %946 = vmatprep.subr.mxu0 %v536
    %947 = vmatpush1.msra.mxu0 %v535
    %948 = vmatprep.subr.mxu0 %v540
    %949 = vmatpush1.msra.mxu0 %v539
    %950 = vmatprep.subr.mxu0 %v544
    %951 = vmatpush1.msra.mxu0 %v543
    %952 = vmatprep.subr.mxu0 %v548
    %953 = vmatpush1.msra.mxu0 %v547
    %954 = vmatprep.subr.mxu0 %v552
    %955 = vmatpush1.msra.mxu0 %v551
    %956 = vmatprep.subr.mxu0 %v556
    %957 = vmatpush1.msra.mxu0 %v555
    %958 = vmatprep.subr.mxu0 %v560
    %959 = vmatpush1.msra.mxu0 %v559
    %960 = vmatprep.subr.mxu0 %v564
    %961 = vmatpush1.msra.mxu0 %v563
    %962 = vmatprep.subr.mxu0 %v568
    %963 = vmatpush1.msra.mxu0 %v567
    %964 = vmatprep.subr.mxu0 %v572
    %965 = vmatpush1.msra.mxu0 %v571
    %966 = vmatprep.subr.mxu0 %v576
    %967 = vmatpush1.msra.mxu0 %v575
    %968 = vmatprep.subr.mxu0 %v580
    %969 = vmatpush1.msra.mxu0 %v579
    %970 = vmatprep.subr.mxu0 %v584
    %971 = vmatpush1.msra.mxu0 %v583
    %972 = vmatprep.subr.mxu0 %v588
    %973 = vmatpush1.msra.mxu0 %v587
    %974 = vmatprep.subr.mxu0 %v592
    %975 = vmatpush1.msra.mxu0 %v591
    %976 = vmatprep.subr.mxu0 %v596
    %977 = vmatpush1.msra.mxu0 %v595
    %978 = vmatprep.subr.mxu0 %v600
    %979 = vmatpush1.msra.mxu0 %v599
    %980 = vmatprep.subr.mxu0 %v604
    %981 = vmatpush1.msra.mxu0 %v603
    %982 = vmatprep.mubr.f32.mxu0 %v902
    %983 = vmatmul.mubr.f32.gmra.mrb[0].mxu0 %v894
    %v984 = vpop.f32.mrb[0].mxu0
    %v985 = vadd.f32 %v868, %v984
    %v986 = vpop.f32.mrb[0].mxu0
    %v987 = vadd.f32 %v872, %v986
    %988 = vdwg.mxu0
    %989 = vmatprep.subr.mxu0 %v608
    %990 = vmatpush1.msra.mxu0 %v607
    %991 = vmatprep.subr.mxu0 %v612
    %992 = vmatpush1.msra.mxu0 %v611
    %993 = vmatprep.subr.mxu0 %v616
    %994 = vmatpush1.msra.mxu0 %v615
    %995 = vmatprep.subr.mxu0 %v620
    %996 = vmatpush1.msra.mxu0 %v619
    %997 = vmatprep.subr.mxu0 %v624
    %998 = vmatpush1.msra.mxu0 %v623
    %999 = vmatprep.subr.mxu0 %v628
    %1000 = vmatpush1.msra.mxu0 %v627
    %1001 = vmatprep.subr.mxu0 %v632
    %1002 = vmatpush1.msra.mxu0 %v631
    %1003 = vmatprep.subr.mxu0 %v636
    %1004 = vmatpush1.msra.mxu0 %v635
    %1005 = vmatprep.subr.mxu0 %v640
    %1006 = vmatpush1.msra.mxu0 %v639
    %1007 = vmatprep.subr.mxu0 %v644
    %1008 = vmatpush1.msra.mxu0 %v643
    %1009 = vmatprep.subr.mxu0 %v648
    %1010 = vmatpush1.msra.mxu0 %v647
    %1011 = vmatprep.subr.mxu0 %v652
    %1012 = vmatpush1.msra.mxu0 %v651
    %1013 = vmatprep.subr.mxu0 %v656
    %1014 = vmatpush1.msra.mxu0 %v655
    %1015 = vmatprep.subr.mxu0 %v660
    %1016 = vmatpush1.msra.mxu0 %v659
    %1017 = vmatprep.subr.mxu0 %v664
    %1018 = vmatpush1.msra.mxu0 %v663
    %1019 = vmatprep.subr.mxu0 %v668
    %1020 = vmatpush1.msra.mxu0 %v667
    %1021 = vmatprep.subr.mxu0 %v672
    %1022 = vmatpush1.msra.mxu0 %v671
    %1023 = vmatprep.subr.mxu0 %v676
    %1024 = vmatpush1.msra.mxu0 %v675
    %1025 = vmatprep.subr.mxu0 %v680
    %1026 = vmatpush1.msra.mxu0 %v679
    %1027 = vmatprep.subr.mxu0 %v684
    %1028 = vmatpush1.msra.mxu0 %v683
    %1029 = vmatprep.subr.mxu0 %v688
    %1030 = vmatpush1.msra.mxu0 %v687
    %1031 = vmatprep.subr.mxu0 %v692
    %1032 = vmatpush1.msra.mxu0 %v691
    %1033 = vmatprep.subr.mxu0 %v696
    %1034 = vmatpush1.msra.mxu0 %v695
    %1035 = vmatprep.subr.mxu0 %v700
    %1036 = vmatpush1.msra.mxu0 %v699
    %1037 = vmatprep.subr.mxu0 %v704
    %1038 = vmatpush1.msra.mxu0 %v703
    %1039 = vmatprep.subr.mxu0 %v708
    %1040 = vmatpush1.msra.mxu0 %v707
    %1041 = vmatprep.subr.mxu0 %v712
    %1042 = vmatpush1.msra.mxu0 %v711
    %1043 = vmatprep.subr.mxu0 %v716
    %1044 = vmatpush1.msra.mxu0 %v715
    %1045 = vmatprep.subr.mxu0 %v720
    %1046 = vmatpush1.msra.mxu0 %v719
    %1047 = vmatprep.subr.mxu0 %v724
    %1048 = vmatpush1.msra.mxu0 %v723
    %1049 = vmatprep.subr.mxu0 %v728
    %1050 = vmatpush1.msra.mxu0 %v727
    %1051 = vmatprep.subr.mxu0 %v732
    %1052 = vmatpush1.msra.mxu0 %v731
    %1053 = vmatprep.mubr.f32.mxu0 %v903
    %1054 = vmatmul.mubr.f32.gmra.mrb[0].mxu0 %v901
    %v1055 = vpop.f32.mrb[0].mxu0
    %v1056 = vadd.f32 %v985, %v1055
    %v1057 = vpop.f32.mrb[0].mxu0
    %v1058 = vadd.f32 %v987, %v1057
    %1059 = vdwg.mxu0
    %1060 = vmatprep.subr.mxu0 %v736
    %1061 = vmatpush1.msra.mxu0 %v735
    %1062 = vmatprep.subr.mxu0 %v740
    %1063 = vmatpush1.msra.mxu0 %v739
    %1064 = vmatprep.subr.mxu0 %v744
    %1065 = vmatpush1.msra.mxu0 %v743
    %1066 = vmatprep.subr.mxu0 %v748
    %1067 = vmatpush1.msra.mxu0 %v747
    %1068 = vmatprep.subr.mxu0 %v752
    %1069 = vmatpush1.msra.mxu0 %v751
    %1070 = vmatprep.subr.mxu0 %v756
    %1071 = vmatpush1.msra.mxu0 %v755
    %1072 = vmatprep.subr.mxu0 %v760
    %1073 = vmatpush1.msra.mxu0 %v759
    %1074 = vmatprep.subr.mxu0 %v764
    %1075 = vmatpush1.msra.mxu0 %v763
    %1076 = vmatprep.subr.mxu0 %v768
    %1077 = vmatpush1.msra.mxu0 %v767
    %1078 = vmatprep.subr.mxu0 %v772
    %1079 = vmatpush1.msra.mxu0 %v771
    %1080 = vmatprep.subr.mxu0 %v776
    %1081 = vmatpush1.msra.mxu0 %v775
    %1082 = vmatprep.subr.mxu0 %v780
    %1083 = vmatpush1.msra.mxu0 %v779
    %1084 = vmatprep.subr.mxu0 %v784
    %1085 = vmatpush1.msra.mxu0 %v783
    %1086 = vmatprep.subr.mxu0 %v788
    %1087 = vmatpush1.msra.mxu0 %v787
    %1088 = vmatprep.subr.mxu0 %v792
    %1089 = vmatpush1.msra.mxu0 %v791
    %1090 = vmatprep.subr.mxu0 %v796
    %1091 = vmatpush1.msra.mxu0 %v795
    %1092 = vmatprep.subr.mxu0 %v800
    %1093 = vmatpush1.msra.mxu0 %v799
    %1094 = vmatprep.subr.mxu0 %v804
    %1095 = vmatpush1.msra.mxu0 %v803
    %1096 = vmatprep.subr.mxu0 %v808
    %1097 = vmatpush1.msra.mxu0 %v807
    %1098 = vmatprep.subr.mxu0 %v812
    %1099 = vmatpush1.msra.mxu0 %v811
    %1100 = vmatprep.subr.mxu0 %v816
    %1101 = vmatpush1.msra.mxu0 %v815
    %1102 = vmatprep.subr.mxu0 %v820
    %1103 = vmatpush1.msra.mxu0 %v819
    %1104 = vmatprep.subr.mxu0 %v824
    %1105 = vmatpush1.msra.mxu0 %v823
    %1106 = vmatprep.subr.mxu0 %v828
    %1107 = vmatpush1.msra.mxu0 %v827
    %1108 = vmatprep.subr.mxu0 %v832
    %1109 = vmatpush1.msra.mxu0 %v831
    %1110 = vmatprep.subr.mxu0 %v836
    %1111 = vmatpush1.msra.mxu0 %v835
    %1112 = vmatprep.subr.mxu0 %v840
    %1113 = vmatpush1.msra.mxu0 %v839
    %1114 = vmatprep.subr.mxu0 %v844
    %1115 = vmatpush1.msra.mxu0 %v843
    %1116 = vmatprep.subr.mxu0 %v848
    %1117 = vmatpush1.msra.mxu0 %v847
    %1118 = vmatprep.subr.mxu0 %v852
    %1119 = vmatpush1.msra.mxu0 %v851
    %1120 = vmatprep.subr.mxu0 %v856
    %1121 = vmatpush1.msra.mxu0 %v855
    %1122 = vmatprep.subr.mxu0 %v860
    %1123 = vmatpush1.msra.mxu0 %v859
    %1124 = vmatprep.mubr.f32.mxu0 %v911
    %1125 = vmatmul.mubr.f32.gmra.mrb[0].mxu0 %v910
    %v1126 = vpop.f32.mrb[0].mxu0
    %v1127 = vadd.f32 %v1056, %v1126
    %v1128 = vpop.f32.mrb[0].mxu0
    %v1129 = vadd.f32 %v1058, %v1128
    %1130 = vdwg.mxu0
    %1131 = vmatprep.subr.mxu0 %v482
    %1132 = vmatpush1.msra.mxu0 %v481
    %1133 = vmatprep.subr.mxu0 %v486
    %1134 = vmatpush1.msra.mxu0 %v485
    %1135 = vmatprep.subr.mxu0 %v490
    %1136 = vmatpush1.msra.mxu0 %v489
    %1137 = vmatprep.subr.mxu0 %v494
    %1138 = vmatpush1.msra.mxu0 %v493
    %1139 = vmatprep.subr.mxu0 %v498
    %1140 = vmatpush1.msra.mxu0 %v497
    %1141 = vmatprep.subr.mxu0 %v502
    %1142 = vmatpush1.msra.mxu0 %v501
    %1143 = vmatprep.subr.mxu0 %v506
    %1144 = vmatpush1.msra.mxu0 %v505
    %1145 = vmatprep.subr.mxu0 %v510
    %1146 = vmatpush1.msra.mxu0 %v509
    %1147 = vmatprep.subr.mxu0 %v514
    %1148 = vmatpush1.msra.mxu0 %v513
    %1149 = vmatprep.subr.mxu0 %v518
    %1150 = vmatpush1.msra.mxu0 %v517
    %1151 = vmatprep.subr.mxu0 %v522
    %1152 = vmatpush1.msra.mxu0 %v521
    %1153 = vmatprep.subr.mxu0 %v526
    %1154 = vmatpush1.msra.mxu0 %v525
    %1155 = vmatprep.subr.mxu0 %v530
    %1156 = vmatpush1.msra.mxu0 %v529
    %1157 = vmatprep.subr.mxu0 %v534
    %1158 = vmatpush1.msra.mxu0 %v533
    %1159 = vmatprep.subr.mxu0 %v538
    %1160 = vmatpush1.msra.mxu0 %v537
    %1161 = vmatprep.subr.mxu0 %v542
    %1162 = vmatpush1.msra.mxu0 %v541
    %1163 = vmatprep.subr.mxu0 %v546
    %1164 = vmatpush1.msra.mxu0 %v545
    %1165 = vmatprep.subr.mxu0 %v550
    %1166 = vmatpush1.msra.mxu0 %v549
    %1167 = vmatprep.subr.mxu0 %v554
    %1168 = vmatpush1.msra.mxu0 %v553
    %1169 = vmatprep.subr.mxu0 %v558
    %1170 = vmatpush1.msra.mxu0 %v557
    %1171 = vmatprep.subr.mxu0 %v562
    %1172 = vmatpush1.msra.mxu0 %v561
    %1173 = vmatprep.subr.mxu0 %v566
    %1174 = vmatpush1.msra.mxu0 %v565
    %1175 = vmatprep.subr.mxu0 %v570
    %1176 = vmatpush1.msra.mxu0 %v569
    %1177 = vmatprep.subr.mxu0 %v574
    %1178 = vmatpush1.msra.mxu0 %v573
    %1179 = vmatprep.subr.mxu0 %v578
    %1180 = vmatpush1.msra.mxu0 %v577
    %1181 = vmatprep.subr.mxu0 %v582
    %1182 = vmatpush1.msra.mxu0 %v581
    %1183 = vmatprep.subr.mxu0 %v586
    %1184 = vmatpush1.msra.mxu0 %v585
    %1185 = vmatprep.subr.mxu0 %v590
    %1186 = vmatpush1.msra.mxu0 %v589
    %1187 = vmatprep.subr.mxu0 %v594
    %1188 = vmatpush1.msra.mxu0 %v593
    %1189 = vmatprep.subr.mxu0 %v598
    %1190 = vmatpush1.msra.mxu0 %v597
    %1191 = vmatprep.subr.mxu0 %v602
    %1192 = vmatpush1.msra.mxu0 %v601
    %1193 = vmatprep.subr.mxu0 %v606
    %1194 = vmatpush1.msra.mxu0 %v605
    %1195 = vmatprep.mubr.f32.mxu0 %v902
    %1196 = vmatmul.mubr.f32.gmra.mrb[0].mxu0 %v894
    %v1197 = vpop.f32.mrb[0].mxu0
    %v1198 = vadd.f32 %v876, %v1197
    %v1199 = vpop.f32.mrb[0].mxu0
    %v1200 = vadd.f32 %v880, %v1199
    %1201 = vdwg.mxu0
    %1202 = vmatprep.subr.mxu0 %v610
    %1203 = vmatpush1.msra.mxu0 %v609
    %1204 = vmatprep.subr.mxu0 %v614
    %1205 = vmatpush1.msra.mxu0 %v613
    %1206 = vmatprep.subr.mxu0 %v618
    %1207 = vmatpush1.msra.mxu0 %v617
    %1208 = vmatprep.subr.mxu0 %v622
    %1209 = vmatpush1.msra.mxu0 %v621
    %1210 = vmatprep.subr.mxu0 %v626
    %1211 = vmatpush1.msra.mxu0 %v625
    %1212 = vmatprep.subr.mxu0 %v630
    %1213 = vmatpush1.msra.mxu0 %v629
    %1214 = vmatprep.subr.mxu0 %v634
    %1215 = vmatpush1.msra.mxu0 %v633
    %1216 = vmatprep.subr.mxu0 %v638
    %1217 = vmatpush1.msra.mxu0 %v637
    %1218 = vmatprep.subr.mxu0 %v642
    %1219 = vmatpush1.msra.mxu0 %v641
    %1220 = vmatprep.subr.mxu0 %v646
    %1221 = vmatpush1.msra.mxu0 %v645
    %1222 = vmatprep.subr.mxu0 %v650
    %1223 = vmatpush1.msra.mxu0 %v649
    %1224 = vmatprep.subr.mxu0 %v654
    %1225 = vmatpush1.msra.mxu0 %v653
    %1226 = vmatprep.subr.mxu0 %v658
    %1227 = vmatpush1.msra.mxu0 %v657
    %1228 = vmatprep.subr.mxu0 %v662
    %1229 = vmatpush1.msra.mxu0 %v661
    %1230 = vmatprep.subr.mxu0 %v666
    %1231 = vmatpush1.msra.mxu0 %v665
    %1232 = vmatprep.subr.mxu0 %v670
    %1233 = vmatpush1.msra.mxu0 %v669
    %1234 = vmatprep.subr.mxu0 %v674
    %1235 = vmatpush1.msra.mxu0 %v673
    %1236 = vmatprep.subr.mxu0 %v678
    %1237 = vmatpush1.msra.mxu0 %v677
    %1238 = vmatprep.subr.mxu0 %v682
    %1239 = vmatpush1.msra.mxu0 %v681
    %1240 = vmatprep.subr.mxu0 %v686
    %1241 = vmatpush1.msra.mxu0 %v685
    %1242 = vmatprep.subr.mxu0 %v690
    %1243 = vmatpush1.msra.mxu0 %v689
    %1244 = vmatprep.subr.mxu0 %v694
    %1245 = vmatpush1.msra.mxu0 %v693
    %1246 = vmatprep.subr.mxu0 %v698
    %1247 = vmatpush1.msra.mxu0 %v697
    %1248 = vmatprep.subr.mxu0 %v702
    %1249 = vmatpush1.msra.mxu0 %v701
    %1250 = vmatprep.subr.mxu0 %v706
    %1251 = vmatpush1.msra.mxu0 %v705
    %1252 = vmatprep.subr.mxu0 %v710
    %1253 = vmatpush1.msra.mxu0 %v709
    %1254 = vmatprep.subr.mxu0 %v714
    %1255 = vmatpush1.msra.mxu0 %v713
    %1256 = vmatprep.subr.mxu0 %v718
    %1257 = vmatpush1.msra.mxu0 %v717
    %1258 = vmatprep.subr.mxu0 %v722
    %1259 = vmatpush1.msra.mxu0 %v721
    %1260 = vmatprep.subr.mxu0 %v726
    %1261 = vmatpush1.msra.mxu0 %v725
    %1262 = vmatprep.subr.mxu0 %v730
    %1263 = vmatpush1.msra.mxu0 %v729
    %1264 = vmatprep.subr.mxu0 %v734
    %1265 = vmatpush1.msra.mxu0 %v733
    %1266 = vmatprep.mubr.f32.mxu0 %v903
    %1267 = vmatmul.mubr.f32.gmra.mrb[0].mxu0 %v901
    %v1268 = vpop.f32.mrb[0].mxu0
    %v1269 = vadd.f32 %v1198, %v1268
    %v1270 = vpop.f32.mrb[0].mxu0
    %v1271 = vadd.f32 %v1200, %v1270
    %1272 = vdwg.mxu0
    %1273 = vmatprep.subr.mxu0 %v738
    %1274 = vmatpush1.msra.mxu0 %v737
    %1275 = vmatprep.subr.mxu0 %v742
    %1276 = vmatpush1.msra.mxu0 %v741
    %1277 = vmatprep.subr.mxu0 %v746
    %1278 = vmatpush1.msra.mxu0 %v745
    %1279 = vmatprep.subr.mxu0 %v750
    %1280 = vmatpush1.msra.mxu0 %v749
    %1281 = vmatprep.subr.mxu0 %v754
    %1282 = vmatpush1.msra.mxu0 %v753
    %1283 = vmatprep.subr.mxu0 %v758
    %1284 = vmatpush1.msra.mxu0 %v757
    %1285 = vmatprep.subr.mxu0 %v762
    %1286 = vmatpush1.msra.mxu0 %v761
    %1287 = vmatprep.subr.mxu0 %v766
    %1288 = vmatpush1.msra.mxu0 %v765
    %1289 = vmatprep.subr.mxu0 %v770
    %1290 = vmatpush1.msra.mxu0 %v769
    %1291 = vmatprep.subr.mxu0 %v774
    %1292 = vmatpush1.msra.mxu0 %v773
    %1293 = vmatprep.subr.mxu0 %v778
    %1294 = vmatpush1.msra.mxu0 %v777
    %1295 = vmatprep.subr.mxu0 %v782
    %1296 = vmatpush1.msra.mxu0 %v781
    %1297 = vmatprep.subr.mxu0 %v786
    %1298 = vmatpush1.msra.mxu0 %v785
    %1299 = vmatprep.subr.mxu0 %v790
    %1300 = vmatpush1.msra.mxu0 %v789
    %1301 = vmatprep.subr.mxu0 %v794
    %1302 = vmatpush1.msra.mxu0 %v793
    %1303 = vmatprep.subr.mxu0 %v798
    %1304 = vmatpush1.msra.mxu0 %v797
    %1305 = vmatprep.subr.mxu0 %v802
    %1306 = vmatpush1.msra.mxu0 %v801
    %1307 = vmatprep.subr.mxu0 %v806
    %1308 = vmatpush1.msra.mxu0 %v805
    %1309 = vmatprep.subr.mxu0 %v810
    %1310 = vmatpush1.msra.mxu0 %v809
    %1311 = vmatprep.subr.mxu0 %v814
    %1312 = vmatpush1.msra.mxu0 %v813
    %1313 = vmatprep.subr.mxu0 %v818
    %1314 = vmatpush1.msra.mxu0 %v817
    %1315 = vmatprep.subr.mxu0 %v822
    %1316 = vmatpush1.msra.mxu0 %v821
    %1317 = vmatprep.subr.mxu0 %v826
    %1318 = vmatpush1.msra.mxu0 %v825
    %1319 = vmatprep.subr.mxu0 %v830
    %1320 = vmatpush1.msra.mxu0 %v829
    %1321 = vmatprep.subr.mxu0 %v834
    %1322 = vmatpush1.msra.mxu0 %v833
    %1323 = vmatprep.subr.mxu0 %v838
    %1324 = vmatpush1.msra.mxu0 %v837
    %1325 = vmatprep.subr.mxu0 %v842
    %1326 = vmatpush1.msra.mxu0 %v841
    %1327 = vmatprep.subr.mxu0 %v846
    %1328 = vmatpush1.msra.mxu0 %v845
    %1329 = vmatprep.subr.mxu0 %v850
    %1330 = vmatpush1.msra.mxu0 %v849
    %1331 = vmatprep.subr.mxu0 %v854
    %1332 = vmatpush1.msra.mxu0 %v853
    %1333 = vmatprep.subr.mxu0 %v858
    %1334 = vmatpush1.msra.mxu0 %v857
    %1335 = vmatprep.subr.mxu0 %v862
    %1336 = vmatpush1.msra.mxu0 %v861
    %1337 = vmatprep.mubr.f32.mxu0 %v911
    %1338 = vmatmul.mubr.f32.gmra.mrb[0].mxu0 %v910
    %v1339 = vpop.f32.mrb[0].mxu0
    %v1340 = vadd.f32 %v1269, %v1339
    %v1341 = vpop.f32.mrb[0].mxu0
    %v1342 = vadd.f32 %v1271, %v1341
    %1343 = vdwg.mxu0
    %v1344 = vmax.f32 %v1127, 0.0
    %v1345 = vmax.f32 %v1129, 0.0
    %v1346 = vmax.f32 %v1340, 0.0
    %v1347 = vmax.f32 %v1342, 0.0
    %v1348 = vld [vmem:[#allocation10] sm:$0xff]
    %v1349 = vld [vmem:[#allocation10 + $0x8] sm:$0xff]
    %v1350 = vld [vmem:[#allocation10 + $0x10] sm:$0xff]
    %v1351 = vld [vmem:[#allocation10 + $0x18] sm:$0xff]
    %v1352 = vld [vmem:[#allocation10 + $0x20] sm:$0xff]
    %v1353 = vld [vmem:[#allocation10 + $0x28] sm:$0xff]
    %v1354 = vld [vmem:[#allocation10 + $0x30] sm:$0xff]
    %v1355 = vld [vmem:[#allocation10 + $0x38] sm:$0xff]
    %v1356 = vld [vmem:[#allocation10 + $0x40] sm:$0xff]
    %v1357 = vld [vmem:[#allocation10 + $0x48] sm:$0xff]
    %v1358 = vld [vmem:[#allocation10 + $0x50] sm:$0xff]
    %v1359 = vld [vmem:[#allocation10 + $0x58] sm:$0xff]
    %v1360 = vld [vmem:[#allocation10 + $0x60] sm:$0xff]
    %v1361 = vld [vmem:[#allocation10 + $0x68] sm:$0xff]
    %v1362 = vld [vmem:[#allocation10 + $0x70] sm:$0xff]
    %v1363 = vld [vmem:[#allocation10 + $0x78] sm:$0xff]
    %v1364 = vld [vmem:[#allocation10 + $0x80] sm:$0xff]
    %v1365 = vld [vmem:[#allocation10 + $0x88] sm:$0xff]
    %v1366 = vld [vmem:[#allocation10 + $0x90] sm:$0xff]
    %v1367 = vld [vmem:[#allocation10 + $0x98] sm:$0xff]
    %v1368 = vld [vmem:[#allocation10 + $0xa0] sm:$0xff]
    %v1369 = vld [vmem:[#allocation10 + $0xa8] sm:$0xff]
    %v1370 = vld [vmem:[#allocation10 + $0xb0] sm:$0xff]
    %v1371 = vld [vmem:[#allocation10 + $0xb8] sm:$0xff]
    %v1372 = vld [vmem:[#allocation10 + $0xc0] sm:$0xff]
    %v1373 = vld [vmem:[#allocation10 + $0xc8] sm:$0xff]
    %v1374 = vld [vmem:[#allocation10 + $0xd0] sm:$0xff]
    %v1375 = vld [vmem:[#allocation10 + $0xd8] sm:$0xff]
    %v1376 = vld [vmem:[#allocation10 + $0xe0] sm:$0xff]
    %v1377 = vld [vmem:[#allocation10 + $0xe8] sm:$0xff]
    %v1378 = vld [vmem:[#allocation10 + $0xf0] sm:$0xff]
    %v1379 = vld [vmem:[#allocation10 + $0xf8] sm:$0xff]
    %v1380 = vld [vmem:[#allocation10 + $0x100] sm:$0xff]
    %v1381 = vld [vmem:[#allocation10 + $0x108] sm:$0xff]
    %v1382 = vld [vmem:[#allocation10 + $0x110] sm:$0xff]
    %v1383 = vld [vmem:[#allocation10 + $0x118] sm:$0xff]
    %v1384 = vld [vmem:[#allocation10 + $0x120] sm:$0xff]
    %v1385 = vld [vmem:[#allocation10 + $0x128] sm:$0xff]
    %v1386 = vld [vmem:[#allocation10 + $0x130] sm:$0xff]
    %v1387 = vld [vmem:[#allocation10 + $0x138] sm:$0xff]
    %v1388 = vld [vmem:[#allocation10 + $0x140] sm:$0xff]
    %v1389 = vld [vmem:[#allocation10 + $0x148] sm:$0xff]
    %v1390 = vld [vmem:[#allocation10 + $0x150] sm:$0xff]
    %v1391 = vld [vmem:[#allocation10 + $0x158] sm:$0xff]
    %v1392 = vld [vmem:[#allocation10 + $0x160] sm:$0xff]
    %v1393 = vld [vmem:[#allocation10 + $0x168] sm:$0xff]
    %v1394 = vld [vmem:[#allocation10 + $0x170] sm:$0xff]
    %v1395 = vld [vmem:[#allocation10 + $0x178] sm:$0xff]
    %v1396 = vld [vmem:[#allocation10 + $0x180] sm:$0xff]
    %v1397 = vld [vmem:[#allocation10 + $0x188] sm:$0xff]
    %v1398 = vld [vmem:[#allocation10 + $0x190] sm:$0xff]
    %v1399 = vld [vmem:[#allocation10 + $0x198] sm:$0xff]
    %v1400 = vld [vmem:[#allocation10 + $0x1a0] sm:$0xff]
    %v1401 = vld [vmem:[#allocation10 + $0x1a8] sm:$0xff]
    %v1402 = vld [vmem:[#allocation10 + $0x1b0] sm:$0xff]
    %v1403 = vld [vmem:[#allocation10 + $0x1b8] sm:$0xff]
    %v1404 = vld [vmem:[#allocation10 + $0x1c0] sm:$0xff]
    %v1405 = vld [vmem:[#allocation10 + $0x1c8] sm:$0xff]
    %v1406 = vld [vmem:[#allocation10 + $0x1d0] sm:$0xff]
    %v1407 = vld [vmem:[#allocation10 + $0x1d8] sm:$0xff]
    %v1408 = vld [vmem:[#allocation10 + $0x1e0] sm:$0xff]
    %v1409 = vld [vmem:[#allocation10 + $0x1e8] sm:$0xff]
    %v1410 = vld [vmem:[#allocation10 + $0x1f0] sm:$0xff]
    %v1411 = vld [vmem:[#allocation10 + $0x1f8] sm:$0xff]
    %v1412 = vld [vmem:[#allocation10 + $0x200] sm:$0xff]
    %v1413 = vld [vmem:[#allocation10 + $0x208] sm:$0xff]
    %v1414 = vld [vmem:[#allocation10 + $0x210] sm:$0xff]
    %v1415 = vld [vmem:[#allocation10 + $0x218] sm:$0xff]
    %v1416 = vld [vmem:[#allocation10 + $0x220] sm:$0xff]
    %v1417 = vld [vmem:[#allocation10 + $0x228] sm:$0xff]
    %v1418 = vld [vmem:[#allocation10 + $0x230] sm:$0xff]
    %v1419 = vld [vmem:[#allocation10 + $0x238] sm:$0xff]
    %v1420 = vld [vmem:[#allocation10 + $0x240] sm:$0xff]
    %v1421 = vld [vmem:[#allocation10 + $0x248] sm:$0xff]
    %v1422 = vld [vmem:[#allocation10 + $0x250] sm:$0xff]
    %v1423 = vld [vmem:[#allocation10 + $0x258] sm:$0xff]
    %v1424 = vld [vmem:[#allocation10 + $0x260] sm:$0xff]
    %v1425 = vld [vmem:[#allocation10 + $0x268] sm:$0xff]
    %v1426 = vld [vmem:[#allocation10 + $0x270] sm:$0xff]
    %v1427 = vld [vmem:[#allocation10 + $0x278] sm:$0xff]
    %v1428 = vld [vmem:[#allocation10 + $0x280] sm:$0xff]
    %v1429 = vld [vmem:[#allocation10 + $0x288] sm:$0xff]
    %v1430 = vld [vmem:[#allocation10 + $0x290] sm:$0xff]
    %v1431 = vld [vmem:[#allocation10 + $0x298] sm:$0xff]
    %v1432 = vld [vmem:[#allocation10 + $0x2a0] sm:$0xff]
    %v1433 = vld [vmem:[#allocation10 + $0x2a8] sm:$0xff]
    %v1434 = vld [vmem:[#allocation10 + $0x2b0] sm:$0xff]
    %v1435 = vld [vmem:[#allocation10 + $0x2b8] sm:$0xff]
    %v1436 = vld [vmem:[#allocation10 + $0x2c0] sm:$0xff]
    %v1437 = vld [vmem:[#allocation10 + $0x2c8] sm:$0xff]
    %v1438 = vld [vmem:[#allocation10 + $0x2d0] sm:$0xff]
    %v1439 = vld [vmem:[#allocation10 + $0x2d8] sm:$0xff]
    %v1440 = vld [vmem:[#allocation10 + $0x2e0] sm:$0xff]
    %v1441 = vld [vmem:[#allocation10 + $0x2e8] sm:$0xff]
    %v1442 = vld [vmem:[#allocation10 + $0x2f0] sm:$0xff]
    %v1443 = vld [vmem:[#allocation10 + $0x2f8] sm:$0xff]
    %v1444 = vld [vmem:[#allocation10 + $0x300] sm:$0xff]
    %v1445 = vld [vmem:[#allocation10 + $0x308] sm:$0xff]
    %v1446 = vld [vmem:[#allocation10 + $0x310] sm:$0xff]
    %v1447 = vld [vmem:[#allocation10 + $0x318] sm:$0xff]
    %v1448 = vld [vmem:[#allocation10 + $0x320] sm:$0xff]
    %v1449 = vld [vmem:[#allocation10 + $0x328] sm:$0xff]
    %v1450 = vld [vmem:[#allocation10 + $0x330] sm:$0xff]
    %v1451 = vld [vmem:[#allocation10 + $0x338] sm:$0xff]
    %v1452 = vld [vmem:[#allocation10 + $0x340] sm:$0xff]
    %v1453 = vld [vmem:[#allocation10 + $0x348] sm:$0xff]
    %v1454 = vld [vmem:[#allocation10 + $0x350] sm:$0xff]
    %v1455 = vld [vmem:[#allocation10 + $0x358] sm:$0xff]
    %v1456 = vld [vmem:[#allocation10 + $0x360] sm:$0xff]
    %v1457 = vld [vmem:[#allocation10 + $0x368] sm:$0xff]
    %v1458 = vld [vmem:[#allocation10 + $0x370] sm:$0xff]
    %v1459 = vld [vmem:[#allocation10 + $0x378] sm:$0xff]
    %v1460 = vld [vmem:[#allocation10 + $0x380] sm:$0xff]
    %v1461 = vld [vmem:[#allocation10 + $0x388] sm:$0xff]
    %v1462 = vld [vmem:[#allocation10 + $0x390] sm:$0xff]
    %v1463 = vld [vmem:[#allocation10 + $0x398] sm:$0xff]
    %v1464 = vld [vmem:[#allocation10 + $0x3a0] sm:$0xff]
    %v1465 = vld [vmem:[#allocation10 + $0x3a8] sm:$0xff]
    %v1466 = vld [vmem:[#allocation10 + $0x3b0] sm:$0xff]
    %v1467 = vld [vmem:[#allocation10 + $0x3b8] sm:$0xff]
    %v1468 = vld [vmem:[#allocation10 + $0x3c0] sm:$0xff]
    %v1469 = vld [vmem:[#allocation10 + $0x3c8] sm:$0xff]
    %v1470 = vld [vmem:[#allocation10 + $0x3d0] sm:$0xff]
    %v1471 = vld [vmem:[#allocation10 + $0x3d8] sm:$0xff]
    %v1472 = vld [vmem:[#allocation10 + $0x3e0] sm:$0xff]
    %v1473 = vld [vmem:[#allocation10 + $0x3e8] sm:$0xff]
    %v1474 = vld [vmem:[#allocation10 + $0x3f0] sm:$0xff]
    %v1475 = vld [vmem:[#allocation10 + $0x3f8] sm:$0xff]
    %v1476 = vld [vmem:[#allocation11] sm:$0x3]
    %v1478 = vlaneseq
    %v1479 = vshrl.u32 %v1478, 7
    %v1480 = vsub.s32 0, %v1479
    %v1481 = vrot.slane %v1476, %v1480
    %v1482 = vlaneseq
    %v1483 = vshrl.u32 %v1482, 7
    %v1484 = vsub.s32 1, %v1483
    %v1485 = vrot.slane %v1476, %v1484
    %1488 = vmatprep.subr.mxu0 %v1349
    %1489 = vmatpush1.msra.mxu0 %v1348
    %1490 = vmatprep.subr.mxu0 %v1351
    %1491 = vmatpush1.msra.mxu0 %v1350
    %1492 = vmatprep.subr.mxu0 %v1353
    %1493 = vmatpush1.msra.mxu0 %v1352
    %1494 = vmatprep.subr.mxu0 %v1355
    %1495 = vmatpush1.msra.mxu0 %v1354
    %1496 = vmatprep.subr.mxu0 %v1357
    %1497 = vmatpush1.msra.mxu0 %v1356
    %1498 = vmatprep.subr.mxu0 %v1359
    %1499 = vmatpush1.msra.mxu0 %v1358
    %1500 = vmatprep.subr.mxu0 %v1361
    %1501 = vmatpush1.msra.mxu0 %v1360
    %1502 = vmatprep.subr.mxu0 %v1363
    %1503 = vmatpush1.msra.mxu0 %v1362
    %1504 = vmatprep.subr.mxu0 %v1365
    %1505 = vmatpush1.msra.mxu0 %v1364
    %1506 = vmatprep.subr.mxu0 %v1367
    %1507 = vmatpush1.msra.mxu0 %v1366
    %1508 = vmatprep.subr.mxu0 %v1369
    %1509 = vmatpush1.msra.mxu0 %v1368
    %1510 = vmatprep.subr.mxu0 %v1371
    %1511 = vmatpush1.msra.mxu0 %v1370
    %1512 = vmatprep.subr.mxu0 %v1373
    %1513 = vmatpush1.msra.mxu0 %v1372
    %1514 = vmatprep.subr.mxu0 %v1375
    %1515 = vmatpush1.msra.mxu0 %v1374
    %1516 = vmatprep.subr.mxu0 %v1377
    %1517 = vmatpush1.msra.mxu0 %v1376
    %1518 = vmatprep.subr.mxu0 %v1379
    %1519 = vmatpush1.msra.mxu0 %v1378
    %1520 = vmatprep.subr.mxu0 %v1381
    %1521 = vmatpush1.msra.mxu0 %v1380
    %1522 = vmatprep.subr.mxu0 %v1383
    %1523 = vmatpush1.msra.mxu0 %v1382
    %1524 = vmatprep.subr.mxu0 %v1385
    %1525 = vmatpush1.msra.mxu0 %v1384
    %1526 = vmatprep.subr.mxu0 %v1387
    %1527 = vmatpush1.msra.mxu0 %v1386
    %1528 = vmatprep.subr.mxu0 %v1389
    %1529 = vmatpush1.msra.mxu0 %v1388
    %1530 = vmatprep.subr.mxu0 %v1391
    %1531 = vmatpush1.msra.mxu0 %v1390
    %1532 = vmatprep.subr.mxu0 %v1393
    %1533 = vmatpush1.msra.mxu0 %v1392
    %1534 = vmatprep.subr.mxu0 %v1395
    %1535 = vmatpush1.msra.mxu0 %v1394
    %1536 = vmatprep.subr.mxu0 %v1397
    %1537 = vmatpush1.msra.mxu0 %v1396
    %1538 = vmatprep.subr.mxu0 %v1399
    %1539 = vmatpush1.msra.mxu0 %v1398
    %1540 = vmatprep.subr.mxu0 %v1401
    %1541 = vmatpush1.msra.mxu0 %v1400
    %1542 = vmatprep.subr.mxu0 %v1403
    %1543 = vmatpush1.msra.mxu0 %v1402
    %1544 = vmatprep.subr.mxu0 %v1405
    %1545 = vmatpush1.msra.mxu0 %v1404
    %1546 = vmatprep.subr.mxu0 %v1407
    %1547 = vmatpush1.msra.mxu0 %v1406
    %1548 = vmatprep.subr.mxu0 %v1409
    %1549 = vmatpush1.msra.mxu0 %v1408
    %1550 = vmatprep.subr.mxu0 %v1411
    %1551 = vmatpush1.msra.mxu0 %v1410
    %1552 = vmatprep.mubr.f32.mxu0 %v1345
    %1553 = vmatmul.mubr.f32.gmra.mrb[0].mxu0 %v1344
    %v1554 = vpop.f32.mrb[0].mxu0
    %v1555 = vadd.f32 %v1481, %v1554
    %v1556 = vpop.f32.mrb[0].mxu0
    %v1557 = vadd.f32 %v1485, %v1556
    %1558 = vdwg.mxu0
    %1559 = vmatprep.subr.mxu0 %v1413
    %1560 = vmatpush1.msra.mxu0 %v1412
    %1561 = vmatprep.subr.mxu0 %v1415
    %1562 = vmatpush1.msra.mxu0 %v1414
    %1563 = vmatprep.subr.mxu0 %v1417
    %1564 = vmatpush1.msra.mxu0 %v1416
    %1565 = vmatprep.subr.mxu0 %v1419
    %1566 = vmatpush1.msra.mxu0 %v1418
    %1567 = vmatprep.subr.mxu0 %v1421
    %1568 = vmatpush1.msra.mxu0 %v1420
    %1569 = vmatprep.subr.mxu0 %v1423
    %1570 = vmatpush1.msra.mxu0 %v1422
    %1571 = vmatprep.subr.mxu0 %v1425
    %1572 = vmatpush1.msra.mxu0 %v1424
    %1573 = vmatprep.subr.mxu0 %v1427
    %1574 = vmatpush1.msra.mxu0 %v1426
    %1575 = vmatprep.subr.mxu0 %v1429
    %1576 = vmatpush1.msra.mxu0 %v1428
    %1577 = vmatprep.subr.mxu0 %v1431
    %1578 = vmatpush1.msra.mxu0 %v1430
    %1579 = vmatprep.subr.mxu0 %v1433
    %1580 = vmatpush1.msra.mxu0 %v1432
    %1581 = vmatprep.subr.mxu0 %v1435
    %1582 = vmatpush1.msra.mxu0 %v1434
    %1583 = vmatprep.subr.mxu0 %v1437
    %1584 = vmatpush1.msra.mxu0 %v1436
    %1585 = vmatprep.subr.mxu0 %v1439
    %1586 = vmatpush1.msra.mxu0 %v1438
    %1587 = vmatprep.subr.mxu0 %v1441
    %1588 = vmatpush1.msra.mxu0 %v1440
    %1589 = vmatprep.subr.mxu0 %v1443
    %1590 = vmatpush1.msra.mxu0 %v1442
    %1591 = vmatprep.subr.mxu0 %v1445
    %1592 = vmatpush1.msra.mxu0 %v1444
    %1593 = vmatprep.subr.mxu0 %v1447
    %1594 = vmatpush1.msra.mxu0 %v1446
    %1595 = vmatprep.subr.mxu0 %v1449
    %1596 = vmatpush1.msra.mxu0 %v1448
    %1597 = vmatprep.subr.mxu0 %v1451
    %1598 = vmatpush1.msra.mxu0 %v1450
    %1599 = vmatprep.subr.mxu0 %v1453
    %1600 = vmatpush1.msra.mxu0 %v1452
    %1601 = vmatprep.subr.mxu0 %v1455
    %1602 = vmatpush1.msra.mxu0 %v1454
    %1603 = vmatprep.subr.mxu0 %v1457
    %1604 = vmatpush1.msra.mxu0 %v1456
    %1605 = vmatprep.subr.mxu0 %v1459
    %1606 = vmatpush1.msra.mxu0 %v1458
    %1607 = vmatprep.subr.mxu0 %v1461
    %1608 = vmatpush1.msra.mxu0 %v1460
    %1609 = vmatprep.subr.mxu0 %v1463
    %1610 = vmatpush1.msra.mxu0 %v1462
    %1611 = vmatprep.subr.mxu0 %v1465
    %1612 = vmatpush1.msra.mxu0 %v1464
    %1613 = vmatprep.subr.mxu0 %v1467
    %1614 = vmatpush1.msra.mxu0 %v1466
    %1615 = vmatprep.subr.mxu0 %v1469
    %1616 = vmatpush1.msra.mxu0 %v1468
    %1617 = vmatprep.subr.mxu0 %v1471
    %1618 = vmatpush1.msra.mxu0 %v1470
    %1619 = vmatprep.subr.mxu0 %v1473
    %1620 = vmatpush1.msra.mxu0 %v1472
    %1621 = vmatprep.subr.mxu0 %v1475
    %1622 = vmatpush1.msra.mxu0 %v1474
    %1623 = vmatprep.mubr.f32.mxu0 %v1347
    %1624 = vmatmul.mubr.f32.gmra.mrb[0].mxu0 %v1346
    %v1625 = vpop.f32.mrb[0].mxu0
    %v1626 = vadd.f32 %v1555, %v1625
    %v1627 = vpop.f32.mrb[0].mxu0
    %v1628 = vadd.f32 %v1557, %v1627
    %1629 = vdwg.mxu0
    %v1630 = vmax.f32 %v1626, 0.0
    %v1631 = vmax.f32 %v1628, 0.0
    %v1632 = vld [vmem:[%s13] sm:$0xff]
    %v1633 = vld [vmem:[%s13 + $0x8] sm:$0xff]
    %v1634 = vld [vmem:[%s13 + $0x10] sm:$0xff]
    %v1635 = vld [vmem:[%s13 + $0x18] sm:$0xff]
    %v1636 = vld [vmem:[%s13 + $0x20] sm:$0xff]
    %v1637 = vld [vmem:[%s13 + $0x28] sm:$0xff]
    %v1638 = vld [vmem:[%s13 + $0x30] sm:$0xff]
    %v1639 = vld [vmem:[%s13 + $0x38] sm:$0xff]
    %v1640 = vld [vmem:[%s13 + $0x40] sm:$0xff]
    %v1641 = vld [vmem:[%s13 + $0x48] sm:$0xff]
    %v1642 = vld [vmem:[%s13 + $0x50] sm:$0xff]
    %v1643 = vld [vmem:[%s13 + $0x58] sm:$0xff]
    %v1644 = vld [vmem:[%s13 + $0x60] sm:$0xff]
    %v1645 = vld [vmem:[%s13 + $0x68] sm:$0xff]
    %v1646 = vld [vmem:[%s13 + $0x70] sm:$0xff]
    %v1647 = vld [vmem:[%s13 + $0x78] sm:$0xff]
    %v1648 = vld [vmem:[%s13 + $0x80] sm:$0xff]
    %v1649 = vld [vmem:[%s13 + $0x88] sm:$0xff]
    %v1650 = vld [vmem:[%s13 + $0x90] sm:$0xff]
    %v1651 = vld [vmem:[%s13 + $0x98] sm:$0xff]
    %v1652 = vld [vmem:[%s13 + $0xa0] sm:$0xff]
    %v1653 = vld [vmem:[%s13 + $0xa8] sm:$0xff]
    %v1654 = vld [vmem:[%s13 + $0xb0] sm:$0xff]
    %v1655 = vld [vmem:[%s13 + $0xb8] sm:$0xff]
    %v1656 = vld [vmem:[%s13 + $0xc0] sm:$0xff]
    %v1657 = vld [vmem:[%s13 + $0xc8] sm:$0xff]
    %v1658 = vld [vmem:[%s13 + $0xd0] sm:$0xff]
    %v1659 = vld [vmem:[%s13 + $0xd8] sm:$0xff]
    %v1660 = vld [vmem:[%s13 + $0xe0] sm:$0xff]
    %v1661 = vld [vmem:[%s13 + $0xe8] sm:$0xff]
    %v1662 = vld [vmem:[%s13 + $0xf0] sm:$0xff]
    %v1663 = vld [vmem:[%s13 + $0xf8] sm:$0xff]
    %v1664 = vld [vmem:[#allocation13] sm:$0x1]
    %v1666 = vlaneseq
    %v1667 = vshrl.u32 %v1666, 7
    %v1668 = vsub.s32 0, %v1667
    %v1669 = vrot.slane %v1664, %v1668
    %1671 = vmatprep.subr.mxu0 0.0
    %1672 = vmatpush1.msra.mxu0 %v1632
    %1673 = vmatprep.subr.mxu0 0.0
    %1674 = vmatpush1.msra.mxu0 %v1633
    %1675 = vmatprep.subr.mxu0 0.0
    %1676 = vmatpush1.msra.mxu0 %v1634
    %1677 = vmatprep.subr.mxu0 0.0
    %1678 = vmatpush1.msra.mxu0 %v1635
    %1679 = vmatprep.subr.mxu0 0.0
    %1680 = vmatpush1.msra.mxu0 %v1636
    %1681 = vmatprep.subr.mxu0 0.0
    %1682 = vmatpush1.msra.mxu0 %v1637
    %1683 = vmatprep.subr.mxu0 0.0
    %1684 = vmatpush1.msra.mxu0 %v1638
    %1685 = vmatprep.subr.mxu0 0.0
    %1686 = vmatpush1.msra.mxu0 %v1639
    %1687 = vmatprep.subr.mxu0 0.0
    %1688 = vmatpush1.msra.mxu0 %v1640
    %1689 = vmatprep.subr.mxu0 0.0
    %1690 = vmatpush1.msra.mxu0 %v1641
    %1691 = vmatprep.subr.mxu0 0.0
    %1692 = vmatpush1.msra.mxu0 %v1642
    %1693 = vmatprep.subr.mxu0 0.0
    %1694 = vmatpush1.msra.mxu0 %v1643
    %1695 = vmatprep.subr.mxu0 0.0
    %1696 = vmatpush1.msra.mxu0 %v1644
    %1697 = vmatprep.subr.mxu0 0.0
    %1698 = vmatpush1.msra.mxu0 %v1645
    %1699 = vmatprep.subr.mxu0 0.0
    %1700 = vmatpush1.msra.mxu0 %v1646
    %1701 = vmatprep.subr.mxu0 0.0
    %1702 = vmatpush1.msra.mxu0 %v1647
    %1703 = vmatprep.subr.mxu0 0.0
    %1704 = vmatpush1.msra.mxu0 %v1648
    %1705 = vmatprep.subr.mxu0 0.0
    %1706 = vmatpush1.msra.mxu0 %v1649
    %1707 = vmatprep.subr.mxu0 0.0
    %1708 = vmatpush1.msra.mxu0 %v1650
    %1709 = vmatprep.subr.mxu0 0.0
    %1710 = vmatpush1.msra.mxu0 %v1651
    %1711 = vmatprep.subr.mxu0 0.0
    %1712 = vmatpush1.msra.mxu0 %v1652
    %1713 = vmatprep.subr.mxu0 0.0
    %1714 = vmatpush1.msra.mxu0 %v1653
    %1715 = vmatprep.subr.mxu0 0.0
    %1716 = vmatpush1.msra.mxu0 %v1654
    %1717 = vmatprep.subr.mxu0 0.0
    %1718 = vmatpush1.msra.mxu0 %v1655
    %1719 = vmatprep.subr.mxu0 0.0
    %1720 = vmatpush1.msra.mxu0 %v1656
    %1721 = vmatprep.subr.mxu0 0.0
    %1722 = vmatpush1.msra.mxu0 %v1657
    %1723 = vmatprep.subr.mxu0 0.0
    %1724 = vmatpush1.msra.mxu0 %v1658
    %1725 = vmatprep.subr.mxu0 0.0
    %1726 = vmatpush1.msra.mxu0 %v1659
    %1727 = vmatprep.subr.mxu0 0.0
    %1728 = vmatpush1.msra.mxu0 %v1660
    %1729 = vmatprep.subr.mxu0 0.0
    %1730 = vmatpush1.msra.mxu0 %v1661
    %1731 = vmatprep.subr.mxu0 0.0
    %1732 = vmatpush1.msra.mxu0 %v1662
    %1733 = vmatprep.subr.mxu0 0.0
    %1734 = vmatpush1.msra.mxu0 %v1663
    %1735 = vmatprep.mubr.f32.mxu0 %v1631
    %1736 = vmatmul.mubr.f32.gmra.mrb[0].mxu0 %v1630
    %v1737 = vpop.f32.mrb[0].mxu0
    %v1738 = vadd.f32 %v1669, %v1737
    %v1739 = vpop.f32.mrb[0].mxu0
    %1740 = vdwg.mxu0
    %v1741 = vmax.f32 %v1738, 0.0
    %s1742 = scalar_lea.vmem [#allocation3], 12
    %v1743 = vld [vmem:[%s1742] sm:$0xff]
    %v1744 = vld [vmem:[%s1742 + $0x8] sm:$0xf]
    %s1745 = scalar_lea.vmem [#allocation7], 3072
    %v1746 = vld [vmem:[%s1745] sm:$0xff]
    %v1747 = vld [vmem:[%s1745 + $0x8] sm:$0xff]
    %v1748 = vld [vmem:[%s1745 + $0x10] sm:$0xff]
    %v1749 = vld [vmem:[%s1745 + $0x18] sm:$0xff]
    %v1750 = vld [vmem:[%s1745 + $0x20] sm:$0xff]
    %v1751 = vld [vmem:[%s1745 + $0x28] sm:$0xff]
    %v1752 = vld [vmem:[%s1745 + $0x30] sm:$0xff]
    %v1753 = vld [vmem:[%s1745 + $0x38] sm:$0xff]
    %v1754 = vld [vmem:[%s1745 + $0x40] sm:$0xff]
    %v1755 = vld [vmem:[%s1745 + $0x48] sm:$0xff]
    %v1756 = vld [vmem:[%s1745 + $0x50] sm:$0xff]
    %v1757 = vld [vmem:[%s1745 + $0x58] sm:$0xff]
    %v1758 = vld [vmem:[%s1745 + $0x60] sm:$0xff]
    %v1759 = vld [vmem:[%s1745 + $0x68] sm:$0xff]
    %v1760 = vld [vmem:[%s1745 + $0x70] sm:$0xff]
    %v1761 = vld [vmem:[%s1745 + $0x78] sm:$0xff]
    %v1762 = vld [vmem:[%s1745 + $0x80] sm:$0xff]
    %v1763 = vld [vmem:[%s1745 + $0x88] sm:$0xff]
    %v1764 = vld [vmem:[%s1745 + $0x90] sm:$0xff]
    %v1765 = vld [vmem:[%s1745 + $0x98] sm:$0xff]
    %v1766 = vld [vmem:[%s1745 + $0xa0] sm:$0xff]
    %v1767 = vld [vmem:[%s1745 + $0xa8] sm:$0xff]
    %v1768 = vld [vmem:[%s1745 + $0xb0] sm:$0xff]
    %v1769 = vld [vmem:[%s1745 + $0xb8] sm:$0xff]
    %v1770 = vld [vmem:[%s1745 + $0xc0] sm:$0xff]
    %v1771 = vld [vmem:[%s1745 + $0xc8] sm:$0xff]
    %v1772 = vld [vmem:[%s1745 + $0xd0] sm:$0xff]
    %v1773 = vld [vmem:[%s1745 + $0xd8] sm:$0xff]
    %v1774 = vld [vmem:[%s1745 + $0xe0] sm:$0xff]
    %v1775 = vld [vmem:[%s1745 + $0xe8] sm:$0xff]
    %v1776 = vld [vmem:[%s1745 + $0xf0] sm:$0xff]
    %v1777 = vld [vmem:[%s1745 + $0xf8] sm:$0xff]
    %v1778 = vld [vmem:[%s1745 + $0x100] sm:$0xff]
    %v1779 = vld [vmem:[%s1745 + $0x108] sm:$0xff]
    %v1780 = vld [vmem:[%s1745 + $0x110] sm:$0xff]
    %v1781 = vld [vmem:[%s1745 + $0x118] sm:$0xff]
    %v1782 = vld [vmem:[%s1745 + $0x120] sm:$0xff]
    %v1783 = vld [vmem:[%s1745 + $0x128] sm:$0xff]
    %v1784 = vld [vmem:[%s1745 + $0x130] sm:$0xff]
    %v1785 = vld [vmem:[%s1745 + $0x138] sm:$0xff]
    %v1786 = vld [vmem:[%s1745 + $0x140] sm:$0xff]
    %v1787 = vld [vmem:[%s1745 + $0x148] sm:$0xff]
    %v1788 = vld [vmem:[%s1745 + $0x150] sm:$0xff]
    %v1789 = vld [vmem:[%s1745 + $0x158] sm:$0xff]
    %v1790 = vld [vmem:[%s1745 + $0x160] sm:$0xff]
    %v1791 = vld [vmem:[%s1745 + $0x168] sm:$0xff]
    %v1792 = vld [vmem:[%s1745 + $0x170] sm:$0xff]
    %v1793 = vld [vmem:[%s1745 + $0x178] sm:$0xff]
    %v1794 = vld [vmem:[%s1745 + $0x180] sm:$0xff]
    %v1795 = vld [vmem:[%s1745 + $0x188] sm:$0xff]
    %v1796 = vld [vmem:[%s1745 + $0x190] sm:$0xff]
    %v1797 = vld [vmem:[%s1745 + $0x198] sm:$0xff]
    %v1798 = vld [vmem:[%s1745 + $0x1a0] sm:$0xff]
    %v1799 = vld [vmem:[%s1745 + $0x1a8] sm:$0xff]
    %v1800 = vld [vmem:[%s1745 + $0x1b0] sm:$0xff]
    %v1801 = vld [vmem:[%s1745 + $0x1b8] sm:$0xff]
    %v1802 = vld [vmem:[%s1745 + $0x1c0] sm:$0xff]
    %v1803 = vld [vmem:[%s1745 + $0x1c8] sm:$0xff]
    %v1804 = vld [vmem:[%s1745 + $0x1d0] sm:$0xff]
    %v1805 = vld [vmem:[%s1745 + $0x1d8] sm:$0xff]
    %v1806 = vld [vmem:[%s1745 + $0x1e0] sm:$0xff]
    %v1807 = vld [vmem:[%s1745 + $0x1e8] sm:$0xff]
    %v1808 = vld [vmem:[%s1745 + $0x1f0] sm:$0xff]
    %v1809 = vld [vmem:[%s1745 + $0x1f8] sm:$0xff]
    %v1810 = vld [vmem:[%s1745 + $0x200] sm:$0xff]
    %v1811 = vld [vmem:[%s1745 + $0x208] sm:$0xff]
    %v1812 = vld [vmem:[%s1745 + $0x210] sm:$0xff]
    %v1813 = vld [vmem:[%s1745 + $0x218] sm:$0xff]
    %v1814 = vld [vmem:[%s1745 + $0x220] sm:$0xff]
    %v1815 = vld [vmem:[%s1745 + $0x228] sm:$0xff]
    %v1816 = vld [vmem:[%s1745 + $0x230] sm:$0xff]
    %v1817 = vld [vmem:[%s1745 + $0x238] sm:$0xff]
    %v1818 = vld [vmem:[%s1745 + $0x240] sm:$0xff]
    %v1819 = vld [vmem:[%s1745 + $0x248] sm:$0xff]
    %v1820 = vld [vmem:[%s1745 + $0x250] sm:$0xff]
    %v1821 = vld [vmem:[%s1745 + $0x258] sm:$0xff]
    %v1822 = vld [vmem:[%s1745 + $0x260] sm:$0xff]
    %v1823 = vld [vmem:[%s1745 + $0x268] sm:$0xff]
    %v1824 = vld [vmem:[%s1745 + $0x270] sm:$0xff]
    %v1825 = vld [vmem:[%s1745 + $0x278] sm:$0xff]
    %v1826 = vld [vmem:[%s1745 + $0x280] sm:$0xff]
    %v1827 = vld [vmem:[%s1745 + $0x288] sm:$0xff]
    %v1828 = vld [vmem:[%s1745 + $0x290] sm:$0xff]
    %v1829 = vld [vmem:[%s1745 + $0x298] sm:$0xff]
    %v1830 = vld [vmem:[%s1745 + $0x2a0] sm:$0xff]
    %v1831 = vld [vmem:[%s1745 + $0x2a8] sm:$0xff]
    %v1832 = vld [vmem:[%s1745 + $0x2b0] sm:$0xff]
    %v1833 = vld [vmem:[%s1745 + $0x2b8] sm:$0xff]
    %v1834 = vld [vmem:[%s1745 + $0x2c0] sm:$0xff]
    %v1835 = vld [vmem:[%s1745 + $0x2c8] sm:$0xff]
    %v1836 = vld [vmem:[%s1745 + $0x2d0] sm:$0xff]
    %v1837 = vld [vmem:[%s1745 + $0x2d8] sm:$0xff]
    %v1838 = vld [vmem:[%s1745 + $0x2e0] sm:$0xff]
    %v1839 = vld [vmem:[%s1745 + $0x2e8] sm:$0xff]
    %v1840 = vld [vmem:[%s1745 + $0x2f0] sm:$0xff]
    %v1841 = vld [vmem:[%s1745 + $0x2f8] sm:$0xff]
    %v1842 = vld [vmem:[%s1745 + $0x300] sm:$0xff]
    %v1843 = vld [vmem:[%s1745 + $0x308] sm:$0xff]
    %v1844 = vld [vmem:[%s1745 + $0x310] sm:$0xff]
    %v1845 = vld [vmem:[%s1745 + $0x318] sm:$0xff]
    %v1846 = vld [vmem:[%s1745 + $0x320] sm:$0xff]
    %v1847 = vld [vmem:[%s1745 + $0x328] sm:$0xff]
    %v1848 = vld [vmem:[%s1745 + $0x330] sm:$0xff]
    %v1849 = vld [vmem:[%s1745 + $0x338] sm:$0xff]
    %v1850 = vld [vmem:[%s1745 + $0x340] sm:$0xff]
    %v1851 = vld [vmem:[%s1745 + $0x348] sm:$0xff]
    %v1852 = vld [vmem:[%s1745 + $0x350] sm:$0xff]
    %v1853 = vld [vmem:[%s1745 + $0x358] sm:$0xff]
    %v1854 = vld [vmem:[%s1745 + $0x360] sm:$0xff]
    %v1855 = vld [vmem:[%s1745 + $0x368] sm:$0xff]
    %v1856 = vld [vmem:[%s1745 + $0x370] sm:$0xff]
    %v1857 = vld [vmem:[%s1745 + $0x378] sm:$0xff]
    %v1858 = vld [vmem:[%s1745 + $0x380] sm:$0xff]
    %v1859 = vld [vmem:[%s1745 + $0x388] sm:$0xff]
    %v1860 = vld [vmem:[%s1745 + $0x390] sm:$0xff]
    %v1861 = vld [vmem:[%s1745 + $0x398] sm:$0xff]
    %v1862 = vld [vmem:[%s1745 + $0x3a0] sm:$0xff]
    %v1863 = vld [vmem:[%s1745 + $0x3a8] sm:$0xff]
    %v1864 = vld [vmem:[%s1745 + $0x3b0] sm:$0xff]
    %v1865 = vld [vmem:[%s1745 + $0x3b8] sm:$0xff]
    %v1866 = vld [vmem:[%s1745 + $0x3c0] sm:$0xff]
    %v1867 = vld [vmem:[%s1745 + $0x3c8] sm:$0xff]
    %v1868 = vld [vmem:[%s1745 + $0x3d0] sm:$0xff]
    %v1869 = vld [vmem:[%s1745 + $0x3d8] sm:$0xff]
    %v1870 = vld [vmem:[%s1745 + $0x3e0] sm:$0xff]
    %v1871 = vld [vmem:[%s1745 + $0x3e8] sm:$0xff]
    %v1872 = vld [vmem:[%s1745 + $0x3f0] sm:$0xff]
    %v1873 = vld [vmem:[%s1745 + $0x3f8] sm:$0xff]
    %v1874 = vld [vmem:[%s1745 + $0x400] sm:$0xff]
    %v1875 = vld [vmem:[%s1745 + $0x408] sm:$0xff]
    %v1876 = vld [vmem:[%s1745 + $0x410] sm:$0xff]
    %v1877 = vld [vmem:[%s1745 + $0x418] sm:$0xff]
    %v1878 = vld [vmem:[%s1745 + $0x420] sm:$0xff]
    %v1879 = vld [vmem:[%s1745 + $0x428] sm:$0xff]
    %v1880 = vld [vmem:[%s1745 + $0x430] sm:$0xff]
    %v1881 = vld [vmem:[%s1745 + $0x438] sm:$0xff]
    %v1882 = vld [vmem:[%s1745 + $0x440] sm:$0xff]
    %v1883 = vld [vmem:[%s1745 + $0x448] sm:$0xff]
    %v1884 = vld [vmem:[%s1745 + $0x450] sm:$0xff]
    %v1885 = vld [vmem:[%s1745 + $0x458] sm:$0xff]
    %v1886 = vld [vmem:[%s1745 + $0x460] sm:$0xff]
    %v1887 = vld [vmem:[%s1745 + $0x468] sm:$0xff]
    %v1888 = vld [vmem:[%s1745 + $0x470] sm:$0xff]
    %v1889 = vld [vmem:[%s1745 + $0x478] sm:$0xff]
    %v1890 = vld [vmem:[%s1745 + $0x480] sm:$0xff]
    %v1891 = vld [vmem:[%s1745 + $0x488] sm:$0xff]
    %v1892 = vld [vmem:[%s1745 + $0x490] sm:$0xff]
    %v1893 = vld [vmem:[%s1745 + $0x498] sm:$0xff]
    %v1894 = vld [vmem:[%s1745 + $0x4a0] sm:$0xff]
    %v1895 = vld [vmem:[%s1745 + $0x4a8] sm:$0xff]
    %v1896 = vld [vmem:[%s1745 + $0x4b0] sm:$0xff]
    %v1897 = vld [vmem:[%s1745 + $0x4b8] sm:$0xff]
    %v1898 = vld [vmem:[%s1745 + $0x4c0] sm:$0xff]
    %v1899 = vld [vmem:[%s1745 + $0x4c8] sm:$0xff]
    %v1900 = vld [vmem:[%s1745 + $0x4d0] sm:$0xff]
    %v1901 = vld [vmem:[%s1745 + $0x4d8] sm:$0xff]
    %v1902 = vld [vmem:[%s1745 + $0x4e0] sm:$0xff]
    %v1903 = vld [vmem:[%s1745 + $0x4e8] sm:$0xff]
    %v1904 = vld [vmem:[%s1745 + $0x4f0] sm:$0xff]
    %v1905 = vld [vmem:[%s1745 + $0x4f8] sm:$0xff]
    %v1906 = vld [vmem:[%s1745 + $0x500] sm:$0xff]
    %v1907 = vld [vmem:[%s1745 + $0x508] sm:$0xff]
    %v1908 = vld [vmem:[%s1745 + $0x510] sm:$0xff]
    %v1909 = vld [vmem:[%s1745 + $0x518] sm:$0xff]
    %v1910 = vld [vmem:[%s1745 + $0x520] sm:$0xff]
    %v1911 = vld [vmem:[%s1745 + $0x528] sm:$0xff]
    %v1912 = vld [vmem:[%s1745 + $0x530] sm:$0xff]
    %v1913 = vld [vmem:[%s1745 + $0x538] sm:$0xff]
    %v1914 = vld [vmem:[%s1745 + $0x540] sm:$0xff]
    %v1915 = vld [vmem:[%s1745 + $0x548] sm:$0xff]
    %v1916 = vld [vmem:[%s1745 + $0x550] sm:$0xff]
    %v1917 = vld [vmem:[%s1745 + $0x558] sm:$0xff]
    %v1918 = vld [vmem:[%s1745 + $0x560] sm:$0xff]
    %v1919 = vld [vmem:[%s1745 + $0x568] sm:$0xff]
    %v1920 = vld [vmem:[%s1745 + $0x570] sm:$0xff]
    %v1921 = vld [vmem:[%s1745 + $0x578] sm:$0xff]
    %v1922 = vld [vmem:[%s1745 + $0x580] sm:$0xff]
    %v1923 = vld [vmem:[%s1745 + $0x588] sm:$0xff]
    %v1924 = vld [vmem:[%s1745 + $0x590] sm:$0xff]
    %v1925 = vld [vmem:[%s1745 + $0x598] sm:$0xff]
    %v1926 = vld [vmem:[%s1745 + $0x5a0] sm:$0xff]
    %v1927 = vld [vmem:[%s1745 + $0x5a8] sm:$0xff]
    %v1928 = vld [vmem:[%s1745 + $0x5b0] sm:$0xff]
    %v1929 = vld [vmem:[%s1745 + $0x5b8] sm:$0xff]
    %v1930 = vld [vmem:[%s1745 + $0x5c0] sm:$0xff]
    %v1931 = vld [vmem:[%s1745 + $0x5c8] sm:$0xff]
    %v1932 = vld [vmem:[%s1745 + $0x5d0] sm:$0xff]
    %v1933 = vld [vmem:[%s1745 + $0x5d8] sm:$0xff]
    %v1934 = vld [vmem:[%s1745 + $0x5e0] sm:$0xff]
    %v1935 = vld [vmem:[%s1745 + $0x5e8] sm:$0xff]
    %v1936 = vld [vmem:[%s1745 + $0x5f0] sm:$0xff]
    %v1937 = vld [vmem:[%s1745 + $0x5f8] sm:$0xff]
    %v1938 = vld [vmem:[%s1745 + $0x600] sm:$0xff]
    %v1939 = vld [vmem:[%s1745 + $0x608] sm:$0xff]
    %v1940 = vld [vmem:[%s1745 + $0x610] sm:$0xff]
    %v1941 = vld [vmem:[%s1745 + $0x618] sm:$0xff]
    %v1942 = vld [vmem:[%s1745 + $0x620] sm:$0xff]
    %v1943 = vld [vmem:[%s1745 + $0x628] sm:$0xff]
    %v1944 = vld [vmem:[%s1745 + $0x630] sm:$0xff]
    %v1945 = vld [vmem:[%s1745 + $0x638] sm:$0xff]
    %v1946 = vld [vmem:[%s1745 + $0x640] sm:$0xff]
    %v1947 = vld [vmem:[%s1745 + $0x648] sm:$0xff]
    %v1948 = vld [vmem:[%s1745 + $0x650] sm:$0xff]
    %v1949 = vld [vmem:[%s1745 + $0x658] sm:$0xff]
    %v1950 = vld [vmem:[%s1745 + $0x660] sm:$0xff]
    %v1951 = vld [vmem:[%s1745 + $0x668] sm:$0xff]
    %v1952 = vld [vmem:[%s1745 + $0x670] sm:$0xff]
    %v1953 = vld [vmem:[%s1745 + $0x678] sm:$0xff]
    %v1954 = vld [vmem:[%s1745 + $0x680] sm:$0xff]
    %v1955 = vld [vmem:[%s1745 + $0x688] sm:$0xff]
    %v1956 = vld [vmem:[%s1745 + $0x690] sm:$0xff]
    %v1957 = vld [vmem:[%s1745 + $0x698] sm:$0xff]
    %v1958 = vld [vmem:[%s1745 + $0x6a0] sm:$0xff]
    %v1959 = vld [vmem:[%s1745 + $0x6a8] sm:$0xff]
    %v1960 = vld [vmem:[%s1745 + $0x6b0] sm:$0xff]
    %v1961 = vld [vmem:[%s1745 + $0x6b8] sm:$0xff]
    %v1962 = vld [vmem:[%s1745 + $0x6c0] sm:$0xff]
    %v1963 = vld [vmem:[%s1745 + $0x6c8] sm:$0xff]
    %v1964 = vld [vmem:[%s1745 + $0x6d0] sm:$0xff]
    %v1965 = vld [vmem:[%s1745 + $0x6d8] sm:$0xff]
    %v1966 = vld [vmem:[%s1745 + $0x6e0] sm:$0xff]
    %v1967 = vld [vmem:[%s1745 + $0x6e8] sm:$0xff]
    %v1968 = vld [vmem:[%s1745 + $0x6f0] sm:$0xff]
    %v1969 = vld [vmem:[%s1745 + $0x6f8] sm:$0xff]
    %v1970 = vld [vmem:[%s1745 + $0x700] sm:$0xff]
    %v1971 = vld [vmem:[%s1745 + $0x708] sm:$0xff]
    %v1972 = vld [vmem:[%s1745 + $0x710] sm:$0xff]
    %v1973 = vld [vmem:[%s1745 + $0x718] sm:$0xff]
    %v1974 = vld [vmem:[%s1745 + $0x720] sm:$0xff]
    %v1975 = vld [vmem:[%s1745 + $0x728] sm:$0xff]
    %v1976 = vld [vmem:[%s1745 + $0x730] sm:$0xff]
    %v1977 = vld [vmem:[%s1745 + $0x738] sm:$0xff]
    %v1978 = vld [vmem:[%s1745 + $0x740] sm:$0xff]
    %v1979 = vld [vmem:[%s1745 + $0x748] sm:$0xff]
    %v1980 = vld [vmem:[%s1745 + $0x750] sm:$0xff]
    %v1981 = vld [vmem:[%s1745 + $0x758] sm:$0xff]
    %v1982 = vld [vmem:[%s1745 + $0x760] sm:$0xff]
    %v1983 = vld [vmem:[%s1745 + $0x768] sm:$0xff]
    %v1984 = vld [vmem:[%s1745 + $0x770] sm:$0xff]
    %v1985 = vld [vmem:[%s1745 + $0x778] sm:$0xff]
    %v1986 = vld [vmem:[%s1745 + $0x780] sm:$0xff]
    %v1987 = vld [vmem:[%s1745 + $0x788] sm:$0xff]
    %v1988 = vld [vmem:[%s1745 + $0x790] sm:$0xff]
    %v1989 = vld [vmem:[%s1745 + $0x798] sm:$0xff]
    %v1990 = vld [vmem:[%s1745 + $0x7a0] sm:$0xff]
    %v1991 = vld [vmem:[%s1745 + $0x7a8] sm:$0xff]
    %v1992 = vld [vmem:[%s1745 + $0x7b0] sm:$0xff]
    %v1993 = vld [vmem:[%s1745 + $0x7b8] sm:$0xff]
    %v1994 = vld [vmem:[%s1745 + $0x7c0] sm:$0xff]
    %v1995 = vld [vmem:[%s1745 + $0x7c8] sm:$0xff]
    %v1996 = vld [vmem:[%s1745 + $0x7d0] sm:$0xff]
    %v1997 = vld [vmem:[%s1745 + $0x7d8] sm:$0xff]
    %v1998 = vld [vmem:[%s1745 + $0x7e0] sm:$0xff]
    %v1999 = vld [vmem:[%s1745 + $0x7e8] sm:$0xff]
    %v2000 = vld [vmem:[%s1745 + $0x7f0] sm:$0xff]
    %v2001 = vld [vmem:[%s1745 + $0x7f8] sm:$0xff]
    %v2002 = vld [vmem:[%s1745 + $0x800] sm:$0xff]
    %v2003 = vld [vmem:[%s1745 + $0x808] sm:$0xff]
    %v2004 = vld [vmem:[%s1745 + $0x810] sm:$0xff]
    %v2005 = vld [vmem:[%s1745 + $0x818] sm:$0xff]
    %v2006 = vld [vmem:[%s1745 + $0x820] sm:$0xff]
    %v2007 = vld [vmem:[%s1745 + $0x828] sm:$0xff]
    %v2008 = vld [vmem:[%s1745 + $0x830] sm:$0xff]
    %v2009 = vld [vmem:[%s1745 + $0x838] sm:$0xff]
    %v2010 = vld [vmem:[%s1745 + $0x840] sm:$0xff]
    %v2011 = vld [vmem:[%s1745 + $0x848] sm:$0xff]
    %v2012 = vld [vmem:[%s1745 + $0x850] sm:$0xff]
    %v2013 = vld [vmem:[%s1745 + $0x858] sm:$0xff]
    %v2014 = vld [vmem:[%s1745 + $0x860] sm:$0xff]
    %v2015 = vld [vmem:[%s1745 + $0x868] sm:$0xff]
    %v2016 = vld [vmem:[%s1745 + $0x870] sm:$0xff]
    %v2017 = vld [vmem:[%s1745 + $0x878] sm:$0xff]
    %v2018 = vld [vmem:[%s1745 + $0x880] sm:$0xff]
    %v2019 = vld [vmem:[%s1745 + $0x888] sm:$0xff]
    %v2020 = vld [vmem:[%s1745 + $0x890] sm:$0xff]
    %v2021 = vld [vmem:[%s1745 + $0x898] sm:$0xff]
    %v2022 = vld [vmem:[%s1745 + $0x8a0] sm:$0xff]
    %v2023 = vld [vmem:[%s1745 + $0x8a8] sm:$0xff]
    %v2024 = vld [vmem:[%s1745 + $0x8b0] sm:$0xff]
    %v2025 = vld [vmem:[%s1745 + $0x8b8] sm:$0xff]
    %v2026 = vld [vmem:[%s1745 + $0x8c0] sm:$0xff]
    %v2027 = vld [vmem:[%s1745 + $0x8c8] sm:$0xff]
    %v2028 = vld [vmem:[%s1745 + $0x8d0] sm:$0xff]
    %v2029 = vld [vmem:[%s1745 + $0x8d8] sm:$0xff]
    %v2030 = vld [vmem:[%s1745 + $0x8e0] sm:$0xff]
    %v2031 = vld [vmem:[%s1745 + $0x8e8] sm:$0xff]
    %v2032 = vld [vmem:[%s1745 + $0x8f0] sm:$0xff]
    %v2033 = vld [vmem:[%s1745 + $0x8f8] sm:$0xff]
    %v2034 = vld [vmem:[%s1745 + $0x900] sm:$0xff]
    %v2035 = vld [vmem:[%s1745 + $0x908] sm:$0xff]
    %v2036 = vld [vmem:[%s1745 + $0x910] sm:$0xff]
    %v2037 = vld [vmem:[%s1745 + $0x918] sm:$0xff]
    %v2038 = vld [vmem:[%s1745 + $0x920] sm:$0xff]
    %v2039 = vld [vmem:[%s1745 + $0x928] sm:$0xff]
    %v2040 = vld [vmem:[%s1745 + $0x930] sm:$0xff]
    %v2041 = vld [vmem:[%s1745 + $0x938] sm:$0xff]
    %v2042 = vld [vmem:[%s1745 + $0x940] sm:$0xff]
    %v2043 = vld [vmem:[%s1745 + $0x948] sm:$0xff]
    %v2044 = vld [vmem:[%s1745 + $0x950] sm:$0xff]
    %v2045 = vld [vmem:[%s1745 + $0x958] sm:$0xff]
    %v2046 = vld [vmem:[%s1745 + $0x960] sm:$0xff]
    %v2047 = vld [vmem:[%s1745 + $0x968] sm:$0xff]
    %v2048 = vld [vmem:[%s1745 + $0x970] sm:$0xff]
    %v2049 = vld [vmem:[%s1745 + $0x978] sm:$0xff]
    %v2050 = vld [vmem:[%s1745 + $0x980] sm:$0xff]
    %v2051 = vld [vmem:[%s1745 + $0x988] sm:$0xff]
    %v2052 = vld [vmem:[%s1745 + $0x990] sm:$0xff]
    %v2053 = vld [vmem:[%s1745 + $0x998] sm:$0xff]
    %v2054 = vld [vmem:[%s1745 + $0x9a0] sm:$0xff]
    %v2055 = vld [vmem:[%s1745 + $0x9a8] sm:$0xff]
    %v2056 = vld [vmem:[%s1745 + $0x9b0] sm:$0xff]
    %v2057 = vld [vmem:[%s1745 + $0x9b8] sm:$0xff]
    %v2058 = vld [vmem:[%s1745 + $0x9c0] sm:$0xff]
    %v2059 = vld [vmem:[%s1745 + $0x9c8] sm:$0xff]
    %v2060 = vld [vmem:[%s1745 + $0x9d0] sm:$0xff]
    %v2061 = vld [vmem:[%s1745 + $0x9d8] sm:$0xff]
    %v2062 = vld [vmem:[%s1745 + $0x9e0] sm:$0xff]
    %v2063 = vld [vmem:[%s1745 + $0x9e8] sm:$0xff]
    %v2064 = vld [vmem:[%s1745 + $0x9f0] sm:$0xff]
    %v2065 = vld [vmem:[%s1745 + $0x9f8] sm:$0xff]
    %v2066 = vld [vmem:[%s1745 + $0xa00] sm:$0xff]
    %v2067 = vld [vmem:[%s1745 + $0xa08] sm:$0xff]
    %v2068 = vld [vmem:[%s1745 + $0xa10] sm:$0xff]
    %v2069 = vld [vmem:[%s1745 + $0xa18] sm:$0xff]
    %v2070 = vld [vmem:[%s1745 + $0xa20] sm:$0xff]
    %v2071 = vld [vmem:[%s1745 + $0xa28] sm:$0xff]
    %v2072 = vld [vmem:[%s1745 + $0xa30] sm:$0xff]
    %v2073 = vld [vmem:[%s1745 + $0xa38] sm:$0xff]
    %v2074 = vld [vmem:[%s1745 + $0xa40] sm:$0xff]
    %v2075 = vld [vmem:[%s1745 + $0xa48] sm:$0xff]
    %v2076 = vld [vmem:[%s1745 + $0xa50] sm:$0xff]
    %v2077 = vld [vmem:[%s1745 + $0xa58] sm:$0xff]
    %v2078 = vld [vmem:[%s1745 + $0xa60] sm:$0xff]
    %v2079 = vld [vmem:[%s1745 + $0xa68] sm:$0xff]
    %v2080 = vld [vmem:[%s1745 + $0xa70] sm:$0xff]
    %v2081 = vld [vmem:[%s1745 + $0xa78] sm:$0xff]
    %v2082 = vld [vmem:[%s1745 + $0xa80] sm:$0xff]
    %v2083 = vld [vmem:[%s1745 + $0xa88] sm:$0xff]
    %v2084 = vld [vmem:[%s1745 + $0xa90] sm:$0xff]
    %v2085 = vld [vmem:[%s1745 + $0xa98] sm:$0xff]
    %v2086 = vld [vmem:[%s1745 + $0xaa0] sm:$0xff]
    %v2087 = vld [vmem:[%s1745 + $0xaa8] sm:$0xff]
    %v2088 = vld [vmem:[%s1745 + $0xab0] sm:$0xff]
    %v2089 = vld [vmem:[%s1745 + $0xab8] sm:$0xff]
    %v2090 = vld [vmem:[%s1745 + $0xac0] sm:$0xff]
    %v2091 = vld [vmem:[%s1745 + $0xac8] sm:$0xff]
    %v2092 = vld [vmem:[%s1745 + $0xad0] sm:$0xff]
    %v2093 = vld [vmem:[%s1745 + $0xad8] sm:$0xff]
    %v2094 = vld [vmem:[%s1745 + $0xae0] sm:$0xff]
    %v2095 = vld [vmem:[%s1745 + $0xae8] sm:$0xff]
    %v2096 = vld [vmem:[%s1745 + $0xaf0] sm:$0xff]
    %v2097 = vld [vmem:[%s1745 + $0xaf8] sm:$0xff]
    %v2098 = vld [vmem:[%s1745 + $0xb00] sm:$0xff]
    %v2099 = vld [vmem:[%s1745 + $0xb08] sm:$0xff]
    %v2100 = vld [vmem:[%s1745 + $0xb10] sm:$0xff]
    %v2101 = vld [vmem:[%s1745 + $0xb18] sm:$0xff]
    %v2102 = vld [vmem:[%s1745 + $0xb20] sm:$0xff]
    %v2103 = vld [vmem:[%s1745 + $0xb28] sm:$0xff]
    %v2104 = vld [vmem:[%s1745 + $0xb30] sm:$0xff]
    %v2105 = vld [vmem:[%s1745 + $0xb38] sm:$0xff]
    %v2106 = vld [vmem:[%s1745 + $0xb40] sm:$0xff]
    %v2107 = vld [vmem:[%s1745 + $0xb48] sm:$0xff]
    %v2108 = vld [vmem:[%s1745 + $0xb50] sm:$0xff]
    %v2109 = vld [vmem:[%s1745 + $0xb58] sm:$0xff]
    %v2110 = vld [vmem:[%s1745 + $0xb60] sm:$0xff]
    %v2111 = vld [vmem:[%s1745 + $0xb68] sm:$0xff]
    %v2112 = vld [vmem:[%s1745 + $0xb70] sm:$0xff]
    %v2113 = vld [vmem:[%s1745 + $0xb78] sm:$0xff]
    %v2114 = vld [vmem:[%s1745 + $0xb80] sm:$0xff]
    %v2115 = vld [vmem:[%s1745 + $0xb88] sm:$0xff]
    %v2116 = vld [vmem:[%s1745 + $0xb90] sm:$0xff]
    %v2117 = vld [vmem:[%s1745 + $0xb98] sm:$0xff]
    %v2118 = vld [vmem:[%s1745 + $0xba0] sm:$0xff]
    %v2119 = vld [vmem:[%s1745 + $0xba8] sm:$0xff]
    %v2120 = vld [vmem:[%s1745 + $0xbb0] sm:$0xff]
    %v2121 = vld [vmem:[%s1745 + $0xbb8] sm:$0xff]
    %v2122 = vld [vmem:[%s1745 + $0xbc0] sm:$0xff]
    %v2123 = vld [vmem:[%s1745 + $0xbc8] sm:$0xff]
    %v2124 = vld [vmem:[%s1745 + $0xbd0] sm:$0xff]
    %v2125 = vld [vmem:[%s1745 + $0xbd8] sm:$0xff]
    %v2126 = vld [vmem:[%s1745 + $0xbe0] sm:$0xff]
    %v2127 = vld [vmem:[%s1745 + $0xbe8] sm:$0xff]
    %v2128 = vld [vmem:[%s1745 + $0xbf0] sm:$0xff]
    %v2129 = vld [vmem:[%s1745 + $0xbf8] sm:$0xff]
    %s2130 = scalar_lea.vmem [#allocation8], 4
    %v2131 = vld [vmem:[%s2130] sm:$0xf]
    %v2133 = vlaneseq
    %v2134 = vshrl.u32 %v2133, 7
    %v2135 = vsub.s32 0, %v2134
    %v2136 = vrot.slane %v2131, %v2135
    %v2137 = vlaneseq
    %v2138 = vshrl.u32 %v2137, 7
    %v2139 = vsub.s32 1, %v2138
    %v2140 = vrot.slane %v2131, %v2139
    %v2141 = vlaneseq
    %v2142 = vshrl.u32 %v2141, 7
    %v2143 = vsub.s32 2, %v2142
    %v2144 = vrot.slane %v2131, %v2143
    %v2145 = vlaneseq
    %v2146 = vshrl.u32 %v2145, 7
    %v2147 = vsub.s32 3, %v2146
    %v2148 = vrot.slane %v2131, %v2147
    %v2155 = vcombine.high %v1743, %v1743
    %v2157 = vunpack.c.l.s4 1983009808
    %v2158 = vunpack.c.0.s8 %v2157
    %v2159 = vlaneseq
    %v2160 = vshrl.u32 %v2159, 7
    %v2161 = vsub.s32 %v2158, %v2160
    %v2162 = vrot.slane %v1743, %v2161
    %v2164 = vunpack.c.l.s4 1983009808
    %v2165 = vunpack.c.0.s8 %v2164
    %v2166 = vlaneseq
    %v2167 = vshrl.u32 %v2166, 7
    %v2168 = vsub.s32 %v2165, %v2167
    %v2169 = vrot.slane %v2155, %v2168
    %v2170 = vcombine.high %v2162, %v2162
    %v2171 = vcombine.high %v2169, %v2169
    %v2173 = vunpack.c.l.s4 1983009808
    %v2174 = vunpack.c.0.s8 %v2173
    %v2175 = vlaneseq
    %v2176 = vshrl.u32 %v2175, 7
    %v2177 = vsub.s32 %v2174, %v2176
    %v2178 = vrot.slane %v1744, %v2177
    %v2179 = vcombine.high %v2178, %v2178
    %2186 = vmatprep.subr.mxu0 %v1747
    %2187 = vmatpush1.msra.mxu0 %v1746
    %2188 = vmatprep.subr.mxu0 %v1751
    %2189 = vmatpush1.msra.mxu0 %v1750
    %2190 = vmatprep.subr.mxu0 %v1755
    %2191 = vmatpush1.msra.mxu0 %v1754
    %2192 = vmatprep.subr.mxu0 %v1759
    %2193 = vmatpush1.msra.mxu0 %v1758
    %2194 = vmatprep.subr.mxu0 %v1763
    %2195 = vmatpush1.msra.mxu0 %v1762
    %2196 = vmatprep.subr.mxu0 %v1767
    %2197 = vmatpush1.msra.mxu0 %v1766
    %2198 = vmatprep.subr.mxu0 %v1771
    %2199 = vmatpush1.msra.mxu0 %v1770
    %2200 = vmatprep.subr.mxu0 %v1775
    %2201 = vmatpush1.msra.mxu0 %v1774
    %2202 = vmatprep.subr.mxu0 %v1779
    %2203 = vmatpush1.msra.mxu0 %v1778
    %2204 = vmatprep.subr.mxu0 %v1783
    %2205 = vmatpush1.msra.mxu0 %v1782
    %2206 = vmatprep.subr.mxu0 %v1787
    %2207 = vmatpush1.msra.mxu0 %v1786
    %2208 = vmatprep.subr.mxu0 %v1791
    %2209 = vmatpush1.msra.mxu0 %v1790
    %2210 = vmatprep.subr.mxu0 %v1795
    %2211 = vmatpush1.msra.mxu0 %v1794
    %2212 = vmatprep.subr.mxu0 %v1799
    %2213 = vmatpush1.msra.mxu0 %v1798
    %2214 = vmatprep.subr.mxu0 %v1803
    %2215 = vmatpush1.msra.mxu0 %v1802
    %2216 = vmatprep.subr.mxu0 %v1807
    %2217 = vmatpush1.msra.mxu0 %v1806
    %2218 = vmatprep.subr.mxu0 %v1811
    %2219 = vmatpush1.msra.mxu0 %v1810
    %2220 = vmatprep.subr.mxu0 %v1815
    %2221 = vmatpush1.msra.mxu0 %v1814
    %2222 = vmatprep.subr.mxu0 %v1819
    %2223 = vmatpush1.msra.mxu0 %v1818
    %2224 = vmatprep.subr.mxu0 %v1823
    %2225 = vmatpush1.msra.mxu0 %v1822
    %2226 = vmatprep.subr.mxu0 %v1827
    %2227 = vmatpush1.msra.mxu0 %v1826
    %2228 = vmatprep.subr.mxu0 %v1831
    %2229 = vmatpush1.msra.mxu0 %v1830
    %2230 = vmatprep.subr.mxu0 %v1835
    %2231 = vmatpush1.msra.mxu0 %v1834
    %2232 = vmatprep.subr.mxu0 %v1839
    %2233 = vmatpush1.msra.mxu0 %v1838
    %2234 = vmatprep.subr.mxu0 %v1843
    %2235 = vmatpush1.msra.mxu0 %v1842
    %2236 = vmatprep.subr.mxu0 %v1847
    %2237 = vmatpush1.msra.mxu0 %v1846
    %2238 = vmatprep.subr.mxu0 %v1851
    %2239 = vmatpush1.msra.mxu0 %v1850
    %2240 = vmatprep.subr.mxu0 %v1855
    %2241 = vmatpush1.msra.mxu0 %v1854
    %2242 = vmatprep.subr.mxu0 %v1859
    %2243 = vmatpush1.msra.mxu0 %v1858
    %2244 = vmatprep.subr.mxu0 %v1863
    %2245 = vmatpush1.msra.mxu0 %v1862
    %2246 = vmatprep.subr.mxu0 %v1867
    %2247 = vmatpush1.msra.mxu0 %v1866
    %2248 = vmatprep.subr.mxu0 %v1871
    %2249 = vmatpush1.msra.mxu0 %v1870
    %2250 = vmatprep.mubr.f32.mxu0 %v2170
    %2251 = vmatmul.mubr.f32.gmra.mrb[0].mxu0 %v2162
    %v2252 = vpop.f32.mrb[0].mxu0
    %v2253 = vadd.f32 %v2136, %v2252
    %v2254 = vpop.f32.mrb[0].mxu0
    %v2255 = vadd.f32 %v2140, %v2254
    %2256 = vdwg.mxu0
    %2257 = vmatprep.subr.mxu0 %v1875
    %2258 = vmatpush1.msra.mxu0 %v1874
    %2259 = vmatprep.subr.mxu0 %v1879
    %2260 = vmatpush1.msra.mxu0 %v1878
    %2261 = vmatprep.subr.mxu0 %v1883
    %2262 = vmatpush1.msra.mxu0 %v1882
    %2263 = vmatprep.subr.mxu0 %v1887
    %2264 = vmatpush1.msra.mxu0 %v1886
    %2265 = vmatprep.subr.mxu0 %v1891
    %2266 = vmatpush1.msra.mxu0 %v1890
    %2267 = vmatprep.subr.mxu0 %v1895
    %2268 = vmatpush1.msra.mxu0 %v1894
    %2269 = vmatprep.subr.mxu0 %v1899
    %2270 = vmatpush1.msra.mxu0 %v1898
    %2271 = vmatprep.subr.mxu0 %v1903
    %2272 = vmatpush1.msra.mxu0 %v1902
    %2273 = vmatprep.subr.mxu0 %v1907
    %2274 = vmatpush1.msra.mxu0 %v1906
    %2275 = vmatprep.subr.mxu0 %v1911
    %2276 = vmatpush1.msra.mxu0 %v1910
    %2277 = vmatprep.subr.mxu0 %v1915
    %2278 = vmatpush1.msra.mxu0 %v1914
    %2279 = vmatprep.subr.mxu0 %v1919
    %2280 = vmatpush1.msra.mxu0 %v1918
    %2281 = vmatprep.subr.mxu0 %v1923
    %2282 = vmatpush1.msra.mxu0 %v1922
    %2283 = vmatprep.subr.mxu0 %v1927
    %2284 = vmatpush1.msra.mxu0 %v1926
    %2285 = vmatprep.subr.mxu0 %v1931
    %2286 = vmatpush1.msra.mxu0 %v1930
    %2287 = vmatprep.subr.mxu0 %v1935
    %2288 = vmatpush1.msra.mxu0 %v1934
    %2289 = vmatprep.subr.mxu0 %v1939
    %2290 = vmatpush1.msra.mxu0 %v1938
    %2291 = vmatprep.subr.mxu0 %v1943
    %2292 = vmatpush1.msra.mxu0 %v1942
    %2293 = vmatprep.subr.mxu0 %v1947
    %2294 = vmatpush1.msra.mxu0 %v1946
    %2295 = vmatprep.subr.mxu0 %v1951
    %2296 = vmatpush1.msra.mxu0 %v1950
    %2297 = vmatprep.subr.mxu0 %v1955
    %2298 = vmatpush1.msra.mxu0 %v1954
    %2299 = vmatprep.subr.mxu0 %v1959
    %2300 = vmatpush1.msra.mxu0 %v1958
    %2301 = vmatprep.subr.mxu0 %v1963
    %2302 = vmatpush1.msra.mxu0 %v1962
    %2303 = vmatprep.subr.mxu0 %v1967
    %2304 = vmatpush1.msra.mxu0 %v1966
    %2305 = vmatprep.subr.mxu0 %v1971
    %2306 = vmatpush1.msra.mxu0 %v1970
    %2307 = vmatprep.subr.mxu0 %v1975
    %2308 = vmatpush1.msra.mxu0 %v1974
    %2309 = vmatprep.subr.mxu0 %v1979
    %2310 = vmatpush1.msra.mxu0 %v1978
    %2311 = vmatprep.subr.mxu0 %v1983
    %2312 = vmatpush1.msra.mxu0 %v1982
    %2313 = vmatprep.subr.mxu0 %v1987
    %2314 = vmatpush1.msra.mxu0 %v1986
    %2315 = vmatprep.subr.mxu0 %v1991
    %2316 = vmatpush1.msra.mxu0 %v1990
    %2317 = vmatprep.subr.mxu0 %v1995
    %2318 = vmatpush1.msra.mxu0 %v1994
    %2319 = vmatprep.subr.mxu0 %v1999
    %2320 = vmatpush1.msra.mxu0 %v1998
    %2321 = vmatprep.mubr.f32.mxu0 %v2171
    %2322 = vmatmul.mubr.f32.gmra.mrb[0].mxu0 %v2169
    %v2323 = vpop.f32.mrb[0].mxu0
    %v2324 = vadd.f32 %v2253, %v2323
    %v2325 = vpop.f32.mrb[0].mxu0
    %v2326 = vadd.f32 %v2255, %v2325
    %2327 = vdwg.mxu0
    %2328 = vmatprep.subr.mxu0 %v2003
    %2329 = vmatpush1.msra.mxu0 %v2002
    %2330 = vmatprep.subr.mxu0 %v2007
    %2331 = vmatpush1.msra.mxu0 %v2006
    %2332 = vmatprep.subr.mxu0 %v2011
    %2333 = vmatpush1.msra.mxu0 %v2010
    %2334 = vmatprep.subr.mxu0 %v2015
    %2335 = vmatpush1.msra.mxu0 %v2014
    %2336 = vmatprep.subr.mxu0 %v2019
    %2337 = vmatpush1.msra.mxu0 %v2018
    %2338 = vmatprep.subr.mxu0 %v2023
    %2339 = vmatpush1.msra.mxu0 %v2022
    %2340 = vmatprep.subr.mxu0 %v2027
    %2341 = vmatpush1.msra.mxu0 %v2026
    %2342 = vmatprep.subr.mxu0 %v2031
    %2343 = vmatpush1.msra.mxu0 %v2030
    %2344 = vmatprep.subr.mxu0 %v2035
    %2345 = vmatpush1.msra.mxu0 %v2034
    %2346 = vmatprep.subr.mxu0 %v2039
    %2347 = vmatpush1.msra.mxu0 %v2038
    %2348 = vmatprep.subr.mxu0 %v2043
    %2349 = vmatpush1.msra.mxu0 %v2042
    %2350 = vmatprep.subr.mxu0 %v2047
    %2351 = vmatpush1.msra.mxu0 %v2046
    %2352 = vmatprep.subr.mxu0 %v2051
    %2353 = vmatpush1.msra.mxu0 %v2050
    %2354 = vmatprep.subr.mxu0 %v2055
    %2355 = vmatpush1.msra.mxu0 %v2054
    %2356 = vmatprep.subr.mxu0 %v2059
    %2357 = vmatpush1.msra.mxu0 %v2058
    %2358 = vmatprep.subr.mxu0 %v2063
    %2359 = vmatpush1.msra.mxu0 %v2062
    %2360 = vmatprep.subr.mxu0 %v2067
    %2361 = vmatpush1.msra.mxu0 %v2066
    %2362 = vmatprep.subr.mxu0 %v2071
    %2363 = vmatpush1.msra.mxu0 %v2070
    %2364 = vmatprep.subr.mxu0 %v2075
    %2365 = vmatpush1.msra.mxu0 %v2074
    %2366 = vmatprep.subr.mxu0 %v2079
    %2367 = vmatpush1.msra.mxu0 %v2078
    %2368 = vmatprep.subr.mxu0 %v2083
    %2369 = vmatpush1.msra.mxu0 %v2082
    %2370 = vmatprep.subr.mxu0 %v2087
    %2371 = vmatpush1.msra.mxu0 %v2086
    %2372 = vmatprep.subr.mxu0 %v2091
    %2373 = vmatpush1.msra.mxu0 %v2090
    %2374 = vmatprep.subr.mxu0 %v2095
    %2375 = vmatpush1.msra.mxu0 %v2094
    %2376 = vmatprep.subr.mxu0 %v2099
    %2377 = vmatpush1.msra.mxu0 %v2098
    %2378 = vmatprep.subr.mxu0 %v2103
    %2379 = vmatpush1.msra.mxu0 %v2102
    %2380 = vmatprep.subr.mxu0 %v2107
    %2381 = vmatpush1.msra.mxu0 %v2106
    %2382 = vmatprep.subr.mxu0 %v2111
    %2383 = vmatpush1.msra.mxu0 %v2110
    %2384 = vmatprep.subr.mxu0 %v2115
    %2385 = vmatpush1.msra.mxu0 %v2114
    %2386 = vmatprep.subr.mxu0 %v2119
    %2387 = vmatpush1.msra.mxu0 %v2118
    %2388 = vmatprep.subr.mxu0 %v2123
    %2389 = vmatpush1.msra.mxu0 %v2122
    %2390 = vmatprep.subr.mxu0 %v2127
    %2391 = vmatpush1.msra.mxu0 %v2126
    %2392 = vmatprep.mubr.f32.mxu0 %v2179
    %2393 = vmatmul.mubr.f32.gmra.mrb[0].mxu0 %v2178
    %v2394 = vpop.f32.mrb[0].mxu0
    %v2395 = vadd.f32 %v2324, %v2394
    %v2396 = vpop.f32.mrb[0].mxu0
    %v2397 = vadd.f32 %v2326, %v2396
    %2398 = vdwg.mxu0
    %2399 = vmatprep.subr.mxu0 %v1749
    %2400 = vmatpush1.msra.mxu0 %v1748
    %2401 = vmatprep.subr.mxu0 %v1753
    %2402 = vmatpush1.msra.mxu0 %v1752
    %2403 = vmatprep.subr.mxu0 %v1757
    %2404 = vmatpush1.msra.mxu0 %v1756
    %2405 = vmatprep.subr.mxu0 %v1761
    %2406 = vmatpush1.msra.mxu0 %v1760
    %2407 = vmatprep.subr.mxu0 %v1765
    %2408 = vmatpush1.msra.mxu0 %v1764
    %2409 = vmatprep.subr.mxu0 %v1769
    %2410 = vmatpush1.msra.mxu0 %v1768
    %2411 = vmatprep.subr.mxu0 %v1773
    %2412 = vmatpush1.msra.mxu0 %v1772
    %2413 = vmatprep.subr.mxu0 %v1777
    %2414 = vmatpush1.msra.mxu0 %v1776
    %2415 = vmatprep.subr.mxu0 %v1781
    %2416 = vmatpush1.msra.mxu0 %v1780
    %2417 = vmatprep.subr.mxu0 %v1785
    %2418 = vmatpush1.msra.mxu0 %v1784
    %2419 = vmatprep.subr.mxu0 %v1789
    %2420 = vmatpush1.msra.mxu0 %v1788
    %2421 = vmatprep.subr.mxu0 %v1793
    %2422 = vmatpush1.msra.mxu0 %v1792
    %2423 = vmatprep.subr.mxu0 %v1797
    %2424 = vmatpush1.msra.mxu0 %v1796
    %2425 = vmatprep.subr.mxu0 %v1801
    %2426 = vmatpush1.msra.mxu0 %v1800
    %2427 = vmatprep.subr.mxu0 %v1805
    %2428 = vmatpush1.msra.mxu0 %v1804
    %2429 = vmatprep.subr.mxu0 %v1809
    %2430 = vmatpush1.msra.mxu0 %v1808
    %2431 = vmatprep.subr.mxu0 %v1813
    %2432 = vmatpush1.msra.mxu0 %v1812
    %2433 = vmatprep.subr.mxu0 %v1817
    %2434 = vmatpush1.msra.mxu0 %v1816
    %2435 = vmatprep.subr.mxu0 %v1821
    %2436 = vmatpush1.msra.mxu0 %v1820
    %2437 = vmatprep.subr.mxu0 %v1825
    %2438 = vmatpush1.msra.mxu0 %v1824
    %2439 = vmatprep.subr.mxu0 %v1829
    %2440 = vmatpush1.msra.mxu0 %v1828
    %2441 = vmatprep.subr.mxu0 %v1833
    %2442 = vmatpush1.msra.mxu0 %v1832
    %2443 = vmatprep.subr.mxu0 %v1837
    %2444 = vmatpush1.msra.mxu0 %v1836
    %2445 = vmatprep.subr.mxu0 %v1841
    %2446 = vmatpush1.msra.mxu0 %v1840
    %2447 = vmatprep.subr.mxu0 %v1845
    %2448 = vmatpush1.msra.mxu0 %v1844
    %2449 = vmatprep.subr.mxu0 %v1849
    %2450 = vmatpush1.msra.mxu0 %v1848
    %2451 = vmatprep.subr.mxu0 %v1853
    %2452 = vmatpush1.msra.mxu0 %v1852
    %2453 = vmatprep.subr.mxu0 %v1857
    %2454 = vmatpush1.msra.mxu0 %v1856
    %2455 = vmatprep.subr.mxu0 %v1861
    %2456 = vmatpush1.msra.mxu0 %v1860
    %2457 = vmatprep.subr.mxu0 %v1865
    %2458 = vmatpush1.msra.mxu0 %v1864
    %2459 = vmatprep.subr.mxu0 %v1869
    %2460 = vmatpush1.msra.mxu0 %v1868
    %2461 = vmatprep.subr.mxu0 %v1873
    %2462 = vmatpush1.msra.mxu0 %v1872
    %2463 = vmatprep.mubr.f32.mxu0 %v2170
    %2464 = vmatmul.mubr.f32.gmra.mrb[0].mxu0 %v2162
    %v2465 = vpop.f32.mrb[0].mxu0
    %v2466 = vadd.f32 %v2144, %v2465
    %v2467 = vpop.f32.mrb[0].mxu0
    %v2468 = vadd.f32 %v2148, %v2467
    %2469 = vdwg.mxu0
    %2470 = vmatprep.subr.mxu0 %v1877
    %2471 = vmatpush1.msra.mxu0 %v1876
    %2472 = vmatprep.subr.mxu0 %v1881
    %2473 = vmatpush1.msra.mxu0 %v1880
    %2474 = vmatprep.subr.mxu0 %v1885
    %2475 = vmatpush1.msra.mxu0 %v1884
    %2476 = vmatprep.subr.mxu0 %v1889
    %2477 = vmatpush1.msra.mxu0 %v1888
    %2478 = vmatprep.subr.mxu0 %v1893
    %2479 = vmatpush1.msra.mxu0 %v1892
    %2480 = vmatprep.subr.mxu0 %v1897
    %2481 = vmatpush1.msra.mxu0 %v1896
    %2482 = vmatprep.subr.mxu0 %v1901
    %2483 = vmatpush1.msra.mxu0 %v1900
    %2484 = vmatprep.subr.mxu0 %v1905
    %2485 = vmatpush1.msra.mxu0 %v1904
    %2486 = vmatprep.subr.mxu0 %v1909
    %2487 = vmatpush1.msra.mxu0 %v1908
    %2488 = vmatprep.subr.mxu0 %v1913
    %2489 = vmatpush1.msra.mxu0 %v1912
    %2490 = vmatprep.subr.mxu0 %v1917
    %2491 = vmatpush1.msra.mxu0 %v1916
    %2492 = vmatprep.subr.mxu0 %v1921
    %2493 = vmatpush1.msra.mxu0 %v1920
    %2494 = vmatprep.subr.mxu0 %v1925
    %2495 = vmatpush1.msra.mxu0 %v1924
    %2496 = vmatprep.subr.mxu0 %v1929
    %2497 = vmatpush1.msra.mxu0 %v1928
    %2498 = vmatprep.subr.mxu0 %v1933
    %2499 = vmatpush1.msra.mxu0 %v1932
    %2500 = vmatprep.subr.mxu0 %v1937
    %2501 = vmatpush1.msra.mxu0 %v1936
    %2502 = vmatprep.subr.mxu0 %v1941
    %2503 = vmatpush1.msra.mxu0 %v1940
    %2504 = vmatprep.subr.mxu0 %v1945
    %2505 = vmatpush1.msra.mxu0 %v1944
    %2506 = vmatprep.subr.mxu0 %v1949
    %2507 = vmatpush1.msra.mxu0 %v1948
    %2508 = vmatprep.subr.mxu0 %v1953
    %2509 = vmatpush1.msra.mxu0 %v1952
    %2510 = vmatprep.subr.mxu0 %v1957
    %2511 = vmatpush1.msra.mxu0 %v1956
    %2512 = vmatprep.subr.mxu0 %v1961
    %2513 = vmatpush1.msra.mxu0 %v1960
    %2514 = vmatprep.subr.mxu0 %v1965
    %2515 = vmatpush1.msra.mxu0 %v1964
    %2516 = vmatprep.subr.mxu0 %v1969
    %2517 = vmatpush1.msra.mxu0 %v1968
    %2518 = vmatprep.subr.mxu0 %v1973
    %2519 = vmatpush1.msra.mxu0 %v1972
    %2520 = vmatprep.subr.mxu0 %v1977
    %2521 = vmatpush1.msra.mxu0 %v1976
    %2522 = vmatprep.subr.mxu0 %v1981
    %2523 = vmatpush1.msra.mxu0 %v1980
    %2524 = vmatprep.subr.mxu0 %v1985
    %2525 = vmatpush1.msra.mxu0 %v1984
    %2526 = vmatprep.subr.mxu0 %v1989
    %2527 = vmatpush1.msra.mxu0 %v1988
    %2528 = vmatprep.subr.mxu0 %v1993
    %2529 = vmatpush1.msra.mxu0 %v1992
    %2530 = vmatprep.subr.mxu0 %v1997
    %2531 = vmatpush1.msra.mxu0 %v1996
    %2532 = vmatprep.subr.mxu0 %v2001
    %2533 = vmatpush1.msra.mxu0 %v2000
    %2534 = vmatprep.mubr.f32.mxu0 %v2171
    %2535 = vmatmul.mubr.f32.gmra.mrb[0].mxu0 %v2169
    %v2536 = vpop.f32.mrb[0].mxu0
    %v2537 = vadd.f32 %v2466, %v2536
    %v2538 = vpop.f32.mrb[0].mxu0
    %v2539 = vadd.f32 %v2468, %v2538
    %2540 = vdwg.mxu0
    %2541 = vmatprep.subr.mxu0 %v2005
    %2542 = vmatpush1.msra.mxu0 %v2004
    %2543 = vmatprep.subr.mxu0 %v2009
    %2544 = vmatpush1.msra.mxu0 %v2008
    %2545 = vmatprep.subr.mxu0 %v2013
    %2546 = vmatpush1.msra.mxu0 %v2012
    %2547 = vmatprep.subr.mxu0 %v2017
    %2548 = vmatpush1.msra.mxu0 %v2016
    %2549 = vmatprep.subr.mxu0 %v2021
    %2550 = vmatpush1.msra.mxu0 %v2020
    %2551 = vmatprep.subr.mxu0 %v2025
    %2552 = vmatpush1.msra.mxu0 %v2024
    %2553 = vmatprep.subr.mxu0 %v2029
    %2554 = vmatpush1.msra.mxu0 %v2028
    %2555 = vmatprep.subr.mxu0 %v2033
    %2556 = vmatpush1.msra.mxu0 %v2032
    %2557 = vmatprep.subr.mxu0 %v2037
    %2558 = vmatpush1.msra.mxu0 %v2036
    %2559 = vmatprep.subr.mxu0 %v2041
    %2560 = vmatpush1.msra.mxu0 %v2040
    %2561 = vmatprep.subr.mxu0 %v2045
    %2562 = vmatpush1.msra.mxu0 %v2044
    %2563 = vmatprep.subr.mxu0 %v2049
    %2564 = vmatpush1.msra.mxu0 %v2048
    %2565 = vmatprep.subr.mxu0 %v2053
    %2566 = vmatpush1.msra.mxu0 %v2052
    %2567 = vmatprep.subr.mxu0 %v2057
    %2568 = vmatpush1.msra.mxu0 %v2056
    %2569 = vmatprep.subr.mxu0 %v2061
    %2570 = vmatpush1.msra.mxu0 %v2060
    %2571 = vmatprep.subr.mxu0 %v2065
    %2572 = vmatpush1.msra.mxu0 %v2064
    %2573 = vmatprep.subr.mxu0 %v2069
    %2574 = vmatpush1.msra.mxu0 %v2068
    %2575 = vmatprep.subr.mxu0 %v2073
    %2576 = vmatpush1.msra.mxu0 %v2072
    %2577 = vmatprep.subr.mxu0 %v2077
    %2578 = vmatpush1.msra.mxu0 %v2076
    %2579 = vmatprep.subr.mxu0 %v2081
    %2580 = vmatpush1.msra.mxu0 %v2080
    %2581 = vmatprep.subr.mxu0 %v2085
    %2582 = vmatpush1.msra.mxu0 %v2084
    %2583 = vmatprep.subr.mxu0 %v2089
    %2584 = vmatpush1.msra.mxu0 %v2088
    %2585 = vmatprep.subr.mxu0 %v2093
    %2586 = vmatpush1.msra.mxu0 %v2092
    %2587 = vmatprep.subr.mxu0 %v2097
    %2588 = vmatpush1.msra.mxu0 %v2096
    %2589 = vmatprep.subr.mxu0 %v2101
    %2590 = vmatpush1.msra.mxu0 %v2100
    %2591 = vmatprep.subr.mxu0 %v2105
    %2592 = vmatpush1.msra.mxu0 %v2104
    %2593 = vmatprep.subr.mxu0 %v2109
    %2594 = vmatpush1.msra.mxu0 %v2108
    %2595 = vmatprep.subr.mxu0 %v2113
    %2596 = vmatpush1.msra.mxu0 %v2112
    %2597 = vmatprep.subr.mxu0 %v2117
    %2598 = vmatpush1.msra.mxu0 %v2116
    %2599 = vmatprep.subr.mxu0 %v2121
    %2600 = vmatpush1.msra.mxu0 %v2120
    %2601 = vmatprep.subr.mxu0 %v2125
    %2602 = vmatpush1.msra.mxu0 %v2124
    %2603 = vmatprep.subr.mxu0 %v2129
    %2604 = vmatpush1.msra.mxu0 %v2128
    %2605 = vmatprep.mubr.f32.mxu0 %v2179
    %2606 = vmatmul.mubr.f32.gmra.mrb[0].mxu0 %v2178
    %v2607 = vpop.f32.mrb[0].mxu0
    %v2608 = vadd.f32 %v2537, %v2607
    %v2609 = vpop.f32.mrb[0].mxu0
    %v2610 = vadd.f32 %v2539, %v2609
    %2611 = vdwg.mxu0
    %v2612 = vmax.f32 %v2395, 0.0
    %v2613 = vmax.f32 %v2397, 0.0
    %v2614 = vmax.f32 %v2608, 0.0
    %v2615 = vmax.f32 %v2610, 0.0
    %s2616 = scalar_lea.vmem [#allocation10], 1024
    %v2617 = vld [vmem:[%s2616] sm:$0xff]
    %v2618 = vld [vmem:[%s2616 + $0x8] sm:$0xff]
    %v2619 = vld [vmem:[%s2616 + $0x10] sm:$0xff]
    %v2620 = vld [vmem:[%s2616 + $0x18] sm:$0xff]
    %v2621 = vld [vmem:[%s2616 + $0x20] sm:$0xff]
    %v2622 = vld [vmem:[%s2616 + $0x28] sm:$0xff]
    %v2623 = vld [vmem:[%s2616 + $0x30] sm:$0xff]
    %v2624 = vld [vmem:[%s2616 + $0x38] sm:$0xff]
    %v2625 = vld [vmem:[%s2616 + $0x40] sm:$0xff]
    %v2626 = vld [vmem:[%s2616 + $0x48] sm:$0xff]
    %v2627 = vld [vmem:[%s2616 + $0x50] sm:$0xff]
    %v2628 = vld [vmem:[%s2616 + $0x58] sm:$0xff]
    %v2629 = vld [vmem:[%s2616 + $0x60] sm:$0xff]
    %v2630 = vld [vmem:[%s2616 + $0x68] sm:$0xff]
    %v2631 = vld [vmem:[%s2616 + $0x70] sm:$0xff]
    %v2632 = vld [vmem:[%s2616 + $0x78] sm:$0xff]
    %v2633 = vld [vmem:[%s2616 + $0x80] sm:$0xff]
    %v2634 = vld [vmem:[%s2616 + $0x88] sm:$0xff]
    %v2635 = vld [vmem:[%s2616 + $0x90] sm:$0xff]
    %v2636 = vld [vmem:[%s2616 + $0x98] sm:$0xff]
    %v2637 = vld [vmem:[%s2616 + $0xa0] sm:$0xff]
    %v2638 = vld [vmem:[%s2616 + $0xa8] sm:$0xff]
    %v2639 = vld [vmem:[%s2616 + $0xb0] sm:$0xff]
    %v2640 = vld [vmem:[%s2616 + $0xb8] sm:$0xff]
    %v2641 = vld [vmem:[%s2616 + $0xc0] sm:$0xff]
    %v2642 = vld [vmem:[%s2616 + $0xc8] sm:$0xff]
    %v2643 = vld [vmem:[%s2616 + $0xd0] sm:$0xff]
    %v2644 = vld [vmem:[%s2616 + $0xd8] sm:$0xff]
    %v2645 = vld [vmem:[%s2616 + $0xe0] sm:$0xff]
    %v2646 = vld [vmem:[%s2616 + $0xe8] sm:$0xff]
    %v2647 = vld [vmem:[%s2616 + $0xf0] sm:$0xff]
    %v2648 = vld [vmem:[%s2616 + $0xf8] sm:$0xff]
    %v2649 = vld [vmem:[%s2616 + $0x100] sm:$0xff]
    %v2650 = vld [vmem:[%s2616 + $0x108] sm:$0xff]
    %v2651 = vld [vmem:[%s2616 + $0x110] sm:$0xff]
    %v2652 = vld [vmem:[%s2616 + $0x118] sm:$0xff]
    %v2653 = vld [vmem:[%s2616 + $0x120] sm:$0xff]
    %v2654 = vld [vmem:[%s2616 + $0x128] sm:$0xff]
    %v2655 = vld [vmem:[%s2616 + $0x130] sm:$0xff]
    %v2656 = vld [vmem:[%s2616 + $0x138] sm:$0xff]
    %v2657 = vld [vmem:[%s2616 + $0x140] sm:$0xff]
    %v2658 = vld [vmem:[%s2616 + $0x148] sm:$0xff]
    %v2659 = vld [vmem:[%s2616 + $0x150] sm:$0xff]
    %v2660 = vld [vmem:[%s2616 + $0x158] sm:$0xff]
    %v2661 = vld [vmem:[%s2616 + $0x160] sm:$0xff]
    %v2662 = vld [vmem:[%s2616 + $0x168] sm:$0xff]
    %v2663 = vld [vmem:[%s2616 + $0x170] sm:$0xff]
    %v2664 = vld [vmem:[%s2616 + $0x178] sm:$0xff]
    %v2665 = vld [vmem:[%s2616 + $0x180] sm:$0xff]
    %v2666 = vld [vmem:[%s2616 + $0x188] sm:$0xff]
    %v2667 = vld [vmem:[%s2616 + $0x190] sm:$0xff]
    %v2668 = vld [vmem:[%s2616 + $0x198] sm:$0xff]
    %v2669 = vld [vmem:[%s2616 + $0x1a0] sm:$0xff]
    %v2670 = vld [vmem:[%s2616 + $0x1a8] sm:$0xff]
    %v2671 = vld [vmem:[%s2616 + $0x1b0] sm:$0xff]
    %v2672 = vld [vmem:[%s2616 + $0x1b8] sm:$0xff]
    %v2673 = vld [vmem:[%s2616 + $0x1c0] sm:$0xff]
    %v2674 = vld [vmem:[%s2616 + $0x1c8] sm:$0xff]
    %v2675 = vld [vmem:[%s2616 + $0x1d0] sm:$0xff]
    %v2676 = vld [vmem:[%s2616 + $0x1d8] sm:$0xff]
    %v2677 = vld [vmem:[%s2616 + $0x1e0] sm:$0xff]
    %v2678 = vld [vmem:[%s2616 + $0x1e8] sm:$0xff]
    %v2679 = vld [vmem:[%s2616 + $0x1f0] sm:$0xff]
    %v2680 = vld [vmem:[%s2616 + $0x1f8] sm:$0xff]
    %v2681 = vld [vmem:[%s2616 + $0x200] sm:$0xff]
    %v2682 = vld [vmem:[%s2616 + $0x208] sm:$0xff]
    %v2683 = vld [vmem:[%s2616 + $0x210] sm:$0xff]
    %v2684 = vld [vmem:[%s2616 + $0x218] sm:$0xff]
    %v2685 = vld [vmem:[%s2616 + $0x220] sm:$0xff]
    %v2686 = vld [vmem:[%s2616 + $0x228] sm:$0xff]
    %v2687 = vld [vmem:[%s2616 + $0x230] sm:$0xff]
    %v2688 = vld [vmem:[%s2616 + $0x238] sm:$0xff]
    %v2689 = vld [vmem:[%s2616 + $0x240] sm:$0xff]
    %v2690 = vld [vmem:[%s2616 + $0x248] sm:$0xff]
    %v2691 = vld [vmem:[%s2616 + $0x250] sm:$0xff]
    %v2692 = vld [vmem:[%s2616 + $0x258] sm:$0xff]
    %v2693 = vld [vmem:[%s2616 + $0x260] sm:$0xff]
    %v2694 = vld [vmem:[%s2616 + $0x268] sm:$0xff]
    %v2695 = vld [vmem:[%s2616 + $0x270] sm:$0xff]
    %v2696 = vld [vmem:[%s2616 + $0x278] sm:$0xff]
    %v2697 = vld [vmem:[%s2616 + $0x280] sm:$0xff]
    %v2698 = vld [vmem:[%s2616 + $0x288] sm:$0xff]
    %v2699 = vld [vmem:[%s2616 + $0x290] sm:$0xff]
    %v2700 = vld [vmem:[%s2616 + $0x298] sm:$0xff]
    %v2701 = vld [vmem:[%s2616 + $0x2a0] sm:$0xff]
    %v2702 = vld [vmem:[%s2616 + $0x2a8] sm:$0xff]
    %v2703 = vld [vmem:[%s2616 + $0x2b0] sm:$0xff]
    %v2704 = vld [vmem:[%s2616 + $0x2b8] sm:$0xff]
    %v2705 = vld [vmem:[%s2616 + $0x2c0] sm:$0xff]
    %v2706 = vld [vmem:[%s2616 + $0x2c8] sm:$0xff]
    %v2707 = vld [vmem:[%s2616 + $0x2d0] sm:$0xff]
    %v2708 = vld [vmem:[%s2616 + $0x2d8] sm:$0xff]
    %v2709 = vld [vmem:[%s2616 + $0x2e0] sm:$0xff]
    %v2710 = vld [vmem:[%s2616 + $0x2e8] sm:$0xff]
    %v2711 = vld [vmem:[%s2616 + $0x2f0] sm:$0xff]
    %v2712 = vld [vmem:[%s2616 + $0x2f8] sm:$0xff]
    %v2713 = vld [vmem:[%s2616 + $0x300] sm:$0xff]
    %v2714 = vld [vmem:[%s2616 + $0x308] sm:$0xff]
    %v2715 = vld [vmem:[%s2616 + $0x310] sm:$0xff]
    %v2716 = vld [vmem:[%s2616 + $0x318] sm:$0xff]
    %v2717 = vld [vmem:[%s2616 + $0x320] sm:$0xff]
    %v2718 = vld [vmem:[%s2616 + $0x328] sm:$0xff]
    %v2719 = vld [vmem:[%s2616 + $0x330] sm:$0xff]
    %v2720 = vld [vmem:[%s2616 + $0x338] sm:$0xff]
    %v2721 = vld [vmem:[%s2616 + $0x340] sm:$0xff]
    %v2722 = vld [vmem:[%s2616 + $0x348] sm:$0xff]
    %v2723 = vld [vmem:[%s2616 + $0x350] sm:$0xff]
    %v2724 = vld [vmem:[%s2616 + $0x358] sm:$0xff]
    %v2725 = vld [vmem:[%s2616 + $0x360] sm:$0xff]
    %v2726 = vld [vmem:[%s2616 + $0x368] sm:$0xff]
    %v2727 = vld [vmem:[%s2616 + $0x370] sm:$0xff]
    %v2728 = vld [vmem:[%s2616 + $0x378] sm:$0xff]
    %v2729 = vld [vmem:[%s2616 + $0x380] sm:$0xff]
    %v2730 = vld [vmem:[%s2616 + $0x388] sm:$0xff]
    %v2731 = vld [vmem:[%s2616 + $0x390] sm:$0xff]
    %v2732 = vld [vmem:[%s2616 + $0x398] sm:$0xff]
    %v2733 = vld [vmem:[%s2616 + $0x3a0] sm:$0xff]
    %v2734 = vld [vmem:[%s2616 + $0x3a8] sm:$0xff]
    %v2735 = vld [vmem:[%s2616 + $0x3b0] sm:$0xff]
    %v2736 = vld [vmem:[%s2616 + $0x3b8] sm:$0xff]
    %v2737 = vld [vmem:[%s2616 + $0x3c0] sm:$0xff]
    %v2738 = vld [vmem:[%s2616 + $0x3c8] sm:$0xff]
    %v2739 = vld [vmem:[%s2616 + $0x3d0] sm:$0xff]
    %v2740 = vld [vmem:[%s2616 + $0x3d8] sm:$0xff]
    %v2741 = vld [vmem:[%s2616 + $0x3e0] sm:$0xff]
    %v2742 = vld [vmem:[%s2616 + $0x3e8] sm:$0xff]
    %v2743 = vld [vmem:[%s2616 + $0x3f0] sm:$0xff]
    %v2744 = vld [vmem:[%s2616 + $0x3f8] sm:$0xff]
    %s2745 = scalar_lea.vmem [#allocation11], 2
    %v2746 = vld [vmem:[%s2745] sm:$0x3]
    %v2748 = vlaneseq
    %v2749 = vshrl.u32 %v2748, 7
    %v2750 = vsub.s32 0, %v2749
    %v2751 = vrot.slane %v2746, %v2750
    %v2752 = vlaneseq
    %v2753 = vshrl.u32 %v2752, 7
    %v2754 = vsub.s32 1, %v2753
    %v2755 = vrot.slane %v2746, %v2754
    %2758 = vmatprep.subr.mxu0 %v2618
    %2759 = vmatpush1.msra.mxu0 %v2617
    %2760 = vmatprep.subr.mxu0 %v2620
    %2761 = vmatpush1.msra.mxu0 %v2619
    %2762 = vmatprep.subr.mxu0 %v2622
    %2763 = vmatpush1.msra.mxu0 %v2621
    %2764 = vmatprep.subr.mxu0 %v2624
    %2765 = vmatpush1.msra.mxu0 %v2623
    %2766 = vmatprep.subr.mxu0 %v2626
    %2767 = vmatpush1.msra.mxu0 %v2625
    %2768 = vmatprep.subr.mxu0 %v2628
    %2769 = vmatpush1.msra.mxu0 %v2627
    %2770 = vmatprep.subr.mxu0 %v2630
    %2771 = vmatpush1.msra.mxu0 %v2629
    %2772 = vmatprep.subr.mxu0 %v2632
    %2773 = vmatpush1.msra.mxu0 %v2631
    %2774 = vmatprep.subr.mxu0 %v2634
    %2775 = vmatpush1.msra.mxu0 %v2633
    %2776 = vmatprep.subr.mxu0 %v2636
    %2777 = vmatpush1.msra.mxu0 %v2635
    %2778 = vmatprep.subr.mxu0 %v2638
    %2779 = vmatpush1.msra.mxu0 %v2637
    %2780 = vmatprep.subr.mxu0 %v2640
    %2781 = vmatpush1.msra.mxu0 %v2639
    %2782 = vmatprep.subr.mxu0 %v2642
    %2783 = vmatpush1.msra.mxu0 %v2641
    %2784 = vmatprep.subr.mxu0 %v2644
    %2785 = vmatpush1.msra.mxu0 %v2643
    %2786 = vmatprep.subr.mxu0 %v2646
    %2787 = vmatpush1.msra.mxu0 %v2645
    %2788 = vmatprep.subr.mxu0 %v2648
    %2789 = vmatpush1.msra.mxu0 %v2647
    %2790 = vmatprep.subr.mxu0 %v2650
    %2791 = vmatpush1.msra.mxu0 %v2649
    %2792 = vmatprep.subr.mxu0 %v2652
    %2793 = vmatpush1.msra.mxu0 %v2651
    %2794 = vmatprep.subr.mxu0 %v2654
    %2795 = vmatpush1.msra.mxu0 %v2653
    %2796 = vmatprep.subr.mxu0 %v2656
    %2797 = vmatpush1.msra.mxu0 %v2655
    %2798 = vmatprep.subr.mxu0 %v2658
    %2799 = vmatpush1.msra.mxu0 %v2657
    %2800 = vmatprep.subr.mxu0 %v2660
    %2801 = vmatpush1.msra.mxu0 %v2659
    %2802 = vmatprep.subr.mxu0 %v2662
    %2803 = vmatpush1.msra.mxu0 %v2661
    %2804 = vmatprep.subr.mxu0 %v2664
    %2805 = vmatpush1.msra.mxu0 %v2663
    %2806 = vmatprep.subr.mxu0 %v2666
    %2807 = vmatpush1.msra.mxu0 %v2665
    %2808 = vmatprep.subr.mxu0 %v2668
    %2809 = vmatpush1.msra.mxu0 %v2667
    %2810 = vmatprep.subr.mxu0 %v2670
    %2811 = vmatpush1.msra.mxu0 %v2669
    %2812 = vmatprep.subr.mxu0 %v2672
    %2813 = vmatpush1.msra.mxu0 %v2671
    %2814 = vmatprep.subr.mxu0 %v2674
    %2815 = vmatpush1.msra.mxu0 %v2673
    %2816 = vmatprep.subr.mxu0 %v2676
    %2817 = vmatpush1.msra.mxu0 %v2675
    %2818 = vmatprep.subr.mxu0 %v2678
    %2819 = vmatpush1.msra.mxu0 %v2677
    %2820 = vmatprep.subr.mxu0 %v2680
    %2821 = vmatpush1.msra.mxu0 %v2679
    %2822 = vmatprep.mubr.f32.mxu0 %v2613
    %2823 = vmatmul.mubr.f32.gmra.mrb[0].mxu0 %v2612
    %v2824 = vpop.f32.mrb[0].mxu0
    %v2825 = vadd.f32 %v2751, %v2824
    %v2826 = vpop.f32.mrb[0].mxu0
    %v2827 = vadd.f32 %v2755, %v2826
    %2828 = vdwg.mxu0
    %2829 = vmatprep.subr.mxu0 %v2682
    %2830 = vmatpush1.msra.mxu0 %v2681
    %2831 = vmatprep.subr.mxu0 %v2684
    %2832 = vmatpush1.msra.mxu0 %v2683
    %2833 = vmatprep.subr.mxu0 %v2686
    %2834 = vmatpush1.msra.mxu0 %v2685
    %2835 = vmatprep.subr.mxu0 %v2688
    %2836 = vmatpush1.msra.mxu0 %v2687
    %2837 = vmatprep.subr.mxu0 %v2690
    %2838 = vmatpush1.msra.mxu0 %v2689
    %2839 = vmatprep.subr.mxu0 %v2692
    %2840 = vmatpush1.msra.mxu0 %v2691
    %2841 = vmatprep.subr.mxu0 %v2694
    %2842 = vmatpush1.msra.mxu0 %v2693
    %2843 = vmatprep.subr.mxu0 %v2696
    %2844 = vmatpush1.msra.mxu0 %v2695
    %2845 = vmatprep.subr.mxu0 %v2698
    %2846 = vmatpush1.msra.mxu0 %v2697
    %2847 = vmatprep.subr.mxu0 %v2700
    %2848 = vmatpush1.msra.mxu0 %v2699
    %2849 = vmatprep.subr.mxu0 %v2702
    %2850 = vmatpush1.msra.mxu0 %v2701
    %2851 = vmatprep.subr.mxu0 %v2704
    %2852 = vmatpush1.msra.mxu0 %v2703
    %2853 = vmatprep.subr.mxu0 %v2706
    %2854 = vmatpush1.msra.mxu0 %v2705
    %2855 = vmatprep.subr.mxu0 %v2708
    %2856 = vmatpush1.msra.mxu0 %v2707
    %2857 = vmatprep.subr.mxu0 %v2710
    %2858 = vmatpush1.msra.mxu0 %v2709
    %2859 = vmatprep.subr.mxu0 %v2712
    %2860 = vmatpush1.msra.mxu0 %v2711
    %2861 = vmatprep.subr.mxu0 %v2714
    %2862 = vmatpush1.msra.mxu0 %v2713
    %2863 = vmatprep.subr.mxu0 %v2716
    %2864 = vmatpush1.msra.mxu0 %v2715
    %2865 = vmatprep.subr.mxu0 %v2718
    %2866 = vmatpush1.msra.mxu0 %v2717
    %2867 = vmatprep.subr.mxu0 %v2720
    %2868 = vmatpush1.msra.mxu0 %v2719
    %2869 = vmatprep.subr.mxu0 %v2722
    %2870 = vmatpush1.msra.mxu0 %v2721
    %2871 = vmatprep.subr.mxu0 %v2724
    %2872 = vmatpush1.msra.mxu0 %v2723
    %2873 = vmatprep.subr.mxu0 %v2726
    %2874 = vmatpush1.msra.mxu0 %v2725
    %2875 = vmatprep.subr.mxu0 %v2728
    %2876 = vmatpush1.msra.mxu0 %v2727
    %2877 = vmatprep.subr.mxu0 %v2730
    %2878 = vmatpush1.msra.mxu0 %v2729
    %2879 = vmatprep.subr.mxu0 %v2732
    %2880 = vmatpush1.msra.mxu0 %v2731
    %2881 = vmatprep.subr.mxu0 %v2734
    %2882 = vmatpush1.msra.mxu0 %v2733
    %2883 = vmatprep.subr.mxu0 %v2736
    %2884 = vmatpush1.msra.mxu0 %v2735
    %2885 = vmatprep.subr.mxu0 %v2738
    %2886 = vmatpush1.msra.mxu0 %v2737
    %2887 = vmatprep.subr.mxu0 %v2740
    %2888 = vmatpush1.msra.mxu0 %v2739
    %2889 = vmatprep.subr.mxu0 %v2742
    %2890 = vmatpush1.msra.mxu0 %v2741
    %2891 = vmatprep.subr.mxu0 %v2744
    %2892 = vmatpush1.msra.mxu0 %v2743
    %2893 = vmatprep.mubr.f32.mxu0 %v2615
    %2894 = vmatmul.mubr.f32.gmra.mrb[0].mxu0 %v2614
    %v2895 = vpop.f32.mrb[0].mxu0
    %v2896 = vadd.f32 %v2825, %v2895
    %v2897 = vpop.f32.mrb[0].mxu0
    %v2898 = vadd.f32 %v2827, %v2897
    %2899 = vdwg.mxu0
    %v2900 = vmax.f32 %v2896, 0.0
    %v2901 = vmax.f32 %v2898, 0.0
    %s2902 = scalar_lea.vmem %s13, 256
    %v2903 = vld [vmem:[%s2902] sm:$0xff]
    %v2904 = vld [vmem:[%s2902 + $0x8] sm:$0xff]
    %v2905 = vld [vmem:[%s2902 + $0x10] sm:$0xff]
    %v2906 = vld [vmem:[%s2902 + $0x18] sm:$0xff]
    %v2907 = vld [vmem:[%s2902 + $0x20] sm:$0xff]
    %v2908 = vld [vmem:[%s2902 + $0x28] sm:$0xff]
    %v2909 = vld [vmem:[%s2902 + $0x30] sm:$0xff]
    %v2910 = vld [vmem:[%s2902 + $0x38] sm:$0xff]
    %v2911 = vld [vmem:[%s2902 + $0x40] sm:$0xff]
    %v2912 = vld [vmem:[%s2902 + $0x48] sm:$0xff]
    %v2913 = vld [vmem:[%s2902 + $0x50] sm:$0xff]
    %v2914 = vld [vmem:[%s2902 + $0x58] sm:$0xff]
    %v2915 = vld [vmem:[%s2902 + $0x60] sm:$0xff]
    %v2916 = vld [vmem:[%s2902 + $0x68] sm:$0xff]
    %v2917 = vld [vmem:[%s2902 + $0x70] sm:$0xff]
    %v2918 = vld [vmem:[%s2902 + $0x78] sm:$0xff]
    %v2919 = vld [vmem:[%s2902 + $0x80] sm:$0xff]
    %v2920 = vld [vmem:[%s2902 + $0x88] sm:$0xff]
    %v2921 = vld [vmem:[%s2902 + $0x90] sm:$0xff]
    %v2922 = vld [vmem:[%s2902 + $0x98] sm:$0xff]
    %v2923 = vld [vmem:[%s2902 + $0xa0] sm:$0xff]
    %v2924 = vld [vmem:[%s2902 + $0xa8] sm:$0xff]
    %v2925 = vld [vmem:[%s2902 + $0xb0] sm:$0xff]
    %v2926 = vld [vmem:[%s2902 + $0xb8] sm:$0xff]
    %v2927 = vld [vmem:[%s2902 + $0xc0] sm:$0xff]
    %v2928 = vld [vmem:[%s2902 + $0xc8] sm:$0xff]
    %v2929 = vld [vmem:[%s2902 + $0xd0] sm:$0xff]
    %v2930 = vld [vmem:[%s2902 + $0xd8] sm:$0xff]
    %v2931 = vld [vmem:[%s2902 + $0xe0] sm:$0xff]
    %v2932 = vld [vmem:[%s2902 + $0xe8] sm:$0xff]
    %v2933 = vld [vmem:[%s2902 + $0xf0] sm:$0xff]
    %v2934 = vld [vmem:[%s2902 + $0xf8] sm:$0xff]
    %s2935 = scalar_lea.vmem [#allocation13], 1
    %v2936 = vld [vmem:[%s2935] sm:$0x1]
    %v2938 = vlaneseq
    %v2939 = vshrl.u32 %v2938, 7
    %v2940 = vsub.s32 0, %v2939
    %v2941 = vrot.slane %v2936, %v2940
    %2943 = vmatprep.subr.mxu0 0.0
    %2944 = vmatpush1.msra.mxu0 %v2903
    %2945 = vmatprep.subr.mxu0 0.0
    %2946 = vmatpush1.msra.mxu0 %v2904
    %2947 = vmatprep.subr.mxu0 0.0
    %2948 = vmatpush1.msra.mxu0 %v2905
    %2949 = vmatprep.subr.mxu0 0.0
    %2950 = vmatpush1.msra.mxu0 %v2906
    %2951 = vmatprep.subr.mxu0 0.0
    %2952 = vmatpush1.msra.mxu0 %v2907
    %2953 = vmatprep.subr.mxu0 0.0
    %2954 = vmatpush1.msra.mxu0 %v2908
    %2955 = vmatprep.subr.mxu0 0.0
    %2956 = vmatpush1.msra.mxu0 %v2909
    %2957 = vmatprep.subr.mxu0 0.0
    %2958 = vmatpush1.msra.mxu0 %v2910
    %2959 = vmatprep.subr.mxu0 0.0
    %2960 = vmatpush1.msra.mxu0 %v2911
    %2961 = vmatprep.subr.mxu0 0.0
    %2962 = vmatpush1.msra.mxu0 %v2912
    %2963 = vmatprep.subr.mxu0 0.0
    %2964 = vmatpush1.msra.mxu0 %v2913
    %2965 = vmatprep.subr.mxu0 0.0
    %2966 = vmatpush1.msra.mxu0 %v2914
    %2967 = vmatprep.subr.mxu0 0.0
    %2968 = vmatpush1.msra.mxu0 %v2915
    %2969 = vmatprep.subr.mxu0 0.0
    %2970 = vmatpush1.msra.mxu0 %v2916
    %2971 = vmatprep.subr.mxu0 0.0
    %2972 = vmatpush1.msra.mxu0 %v2917
    %2973 = vmatprep.subr.mxu0 0.0
    %2974 = vmatpush1.msra.mxu0 %v2918
    %2975 = vmatprep.subr.mxu0 0.0
    %2976 = vmatpush1.msra.mxu0 %v2919
    %2977 = vmatprep.subr.mxu0 0.0
    %2978 = vmatpush1.msra.mxu0 %v2920
    %2979 = vmatprep.subr.mxu0 0.0
    %2980 = vmatpush1.msra.mxu0 %v2921
    %2981 = vmatprep.subr.mxu0 0.0
    %2982 = vmatpush1.msra.mxu0 %v2922
    %2983 = vmatprep.subr.mxu0 0.0
    %2984 = vmatpush1.msra.mxu0 %v2923
    %2985 = vmatprep.subr.mxu0 0.0
    %2986 = vmatpush1.msra.mxu0 %v2924
    %2987 = vmatprep.subr.mxu0 0.0
    %2988 = vmatpush1.msra.mxu0 %v2925
    %2989 = vmatprep.subr.mxu0 0.0
    %2990 = vmatpush1.msra.mxu0 %v2926
    %2991 = vmatprep.subr.mxu0 0.0
    %2992 = vmatpush1.msra.mxu0 %v2927
    %2993 = vmatprep.subr.mxu0 0.0
    %2994 = vmatpush1.msra.mxu0 %v2928
    %2995 = vmatprep.subr.mxu0 0.0
    %2996 = vmatpush1.msra.mxu0 %v2929
    %2997 = vmatprep.subr.mxu0 0.0
    %2998 = vmatpush1.msra.mxu0 %v2930
    %2999 = vmatprep.subr.mxu0 0.0
    %3000 = vmatpush1.msra.mxu0 %v2931
    %3001 = vmatprep.subr.mxu0 0.0
    %3002 = vmatpush1.msra.mxu0 %v2932
    %3003 = vmatprep.subr.mxu0 0.0
    %3004 = vmatpush1.msra.mxu0 %v2933
    %3005 = vmatprep.subr.mxu0 0.0
    %3006 = vmatpush1.msra.mxu0 %v2934
    %3007 = vmatprep.mubr.f32.mxu0 %v2901
    %3008 = vmatmul.mubr.f32.gmra.mrb[0].mxu0 %v2900
    %v3009 = vpop.f32.mrb[0].mxu0
    %v3010 = vadd.f32 %v2941, %v3009
    %v3011 = vpop.f32.mrb[0].mxu0
    %3012 = vdwg.mxu0
    %v3013 = vmax.f32 %v3010, 0.0
    %v3014 = vld [vmem:[#allocation5] sm:$0x3]
    %v3015 = vld [vmem:[#allocation14] sm:$0xff]
    %v3016 = vld [vmem:[#allocation14 + $0x8] sm:$0xff]
    %v3017 = vld [vmem:[#allocation16] sm:$0xff]
    %v3018 = vld [vmem:[#allocation16 + $0x8] sm:$0xff]
    %vm3019 = vcmask 130048
    %v3021 = vsel %vm3019, %v3013, 0
    %3023 = vmatprep.subr.mxu0 0.0
    %3024 = vmatpush1.msra.mxu0 %v3017
    %3025 = vmatprep.subr.mxu0 0.0
    %3026 = vmatpush1.msra.mxu0 %v3018
    %3027 = vmatprep.subr.mxu0 0.0
    %3028 = vmatpush1.msra.mxu0 0.0
    %3029 = vmatprep.subr.mxu0 0.0
    %3030 = vmatpush1.msra.mxu0 0.0
    %3031 = vmatprep.subr.mxu0 0.0
    %3032 = vmatpush1.msra.mxu0 0.0
    %3033 = vmatprep.subr.mxu0 0.0
    %3034 = vmatpush1.msra.mxu0 0.0
    %3035 = vmatprep.subr.mxu0 0.0
    %3036 = vmatpush1.msra.mxu0 0.0
    %3037 = vmatprep.subr.mxu0 0.0
    %3038 = vmatpush1.msra.mxu0 0.0
    %3039 = vmatprep.subr.mxu0 0.0
    %3040 = vmatpush1.msra.mxu0 0.0
    %3041 = vmatprep.subr.mxu0 0.0
    %3042 = vmatpush1.msra.mxu0 0.0
    %3043 = vmatprep.subr.mxu0 0.0
    %3044 = vmatpush1.msra.mxu0 0.0
    %3045 = vmatprep.subr.mxu0 0.0
    %3046 = vmatpush1.msra.mxu0 0.0
    %3047 = vmatprep.subr.mxu0 0.0
    %3048 = vmatpush1.msra.mxu0 0.0
    %3049 = vmatprep.subr.mxu0 0.0
    %3050 = vmatpush1.msra.mxu0 0.0
    %3051 = vmatprep.subr.mxu0 0.0
    %3052 = vmatpush1.msra.mxu0 0.0
    %3053 = vmatprep.subr.mxu0 0.0
    %3054 = vmatpush1.msra.mxu0 0.0
    %3055 = vmatprep.subr.mxu0 0.0
    %3056 = vmatpush1.msra.mxu0 0.0
    %3057 = vmatprep.subr.mxu0 0.0
    %3058 = vmatpush1.msra.mxu0 0.0
    %3059 = vmatprep.subr.mxu0 0.0
    %3060 = vmatpush1.msra.mxu0 0.0
    %3061 = vmatprep.subr.mxu0 0.0
    %3062 = vmatpush1.msra.mxu0 0.0
    %3063 = vmatprep.subr.mxu0 0.0
    %3064 = vmatpush1.msra.mxu0 0.0
    %3065 = vmatprep.subr.mxu0 0.0
    %3066 = vmatpush1.msra.mxu0 0.0
    %3067 = vmatprep.subr.mxu0 0.0
    %3068 = vmatpush1.msra.mxu0 0.0
    %3069 = vmatprep.subr.mxu0 0.0
    %3070 = vmatpush1.msra.mxu0 0.0
    %3071 = vmatprep.subr.mxu0 0.0
    %3072 = vmatpush1.msra.mxu0 0.0
    %3073 = vmatprep.subr.mxu0 0.0
    %3074 = vmatpush1.msra.mxu0 0.0
    %3075 = vmatprep.subr.mxu0 0.0
    %3076 = vmatpush1.msra.mxu0 0.0
    %3077 = vmatprep.subr.mxu0 0.0
    %3078 = vmatpush1.msra.mxu0 0.0
    %3079 = vmatprep.subr.mxu0 0.0
    %3080 = vmatpush1.msra.mxu0 0.0
    %3081 = vmatprep.subr.mxu0 0.0
    %3082 = vmatpush1.msra.mxu0 0.0
    %3083 = vmatprep.subr.mxu0 0.0
    %3084 = vmatpush1.msra.mxu0 0.0
    %3085 = vmatprep.subr.mxu0 0.0
    %3086 = vmatpush1.msra.mxu0 0.0
    %3087 = vmatprep.mubr.f32.mxu0 0.0
    %3088 = vmatmul.mubr.f32.gmra.mrb[0].mxu0 %v3021
    %v3089 = vpop.f32.mrb[0].mxu0
    %v3090 = vadd.f32 0.0, %v3089
    %v3091 = vpop.f32.mrb[0].mxu0
    %3092 = vdwg.mxu0
    %v3094 = vsel %vm3019, %v1741, 0
    %3096 = vmatprep.subr.mxu0 0.0
    %3097 = vmatpush1.msra.mxu0 %v3015
    %3098 = vmatprep.subr.mxu0 0.0
    %3099 = vmatpush1.msra.mxu0 %v3016
    %3100 = vmatprep.subr.mxu0 0.0
    %3101 = vmatpush1.msra.mxu0 0.0
    %3102 = vmatprep.subr.mxu0 0.0
    %3103 = vmatpush1.msra.mxu0 0.0
    %3104 = vmatprep.subr.mxu0 0.0
    %3105 = vmatpush1.msra.mxu0 0.0
    %3106 = vmatprep.subr.mxu0 0.0
    %3107 = vmatpush1.msra.mxu0 0.0
    %3108 = vmatprep.subr.mxu0 0.0
    %3109 = vmatpush1.msra.mxu0 0.0
    %3110 = vmatprep.subr.mxu0 0.0
    %3111 = vmatpush1.msra.mxu0 0.0
    %3112 = vmatprep.subr.mxu0 0.0
    %3113 = vmatpush1.msra.mxu0 0.0
    %3114 = vmatprep.subr.mxu0 0.0
    %3115 = vmatpush1.msra.mxu0 0.0
    %3116 = vmatprep.subr.mxu0 0.0
    %3117 = vmatpush1.msra.mxu0 0.0
    %3118 = vmatprep.subr.mxu0 0.0
    %3119 = vmatpush1.msra.mxu0 0.0
    %3120 = vmatprep.subr.mxu0 0.0
    %3121 = vmatpush1.msra.mxu0 0.0
    %3122 = vmatprep.subr.mxu0 0.0
    %3123 = vmatpush1.msra.mxu0 0.0
    %3124 = vmatprep.subr.mxu0 0.0
    %3125 = vmatpush1.msra.mxu0 0.0
    %3126 = vmatprep.subr.mxu0 0.0
    %3127 = vmatpush1.msra.mxu0 0.0
    %3128 = vmatprep.subr.mxu0 0.0
    %3129 = vmatpush1.msra.mxu0 0.0
    %3130 = vmatprep.subr.mxu0 0.0
    %3131 = vmatpush1.msra.mxu0 0.0
    %3132 = vmatprep.subr.mxu0 0.0
    %3133 = vmatpush1.msra.mxu0 0.0
    %3134 = vmatprep.subr.mxu0 0.0
    %3135 = vmatpush1.msra.mxu0 0.0
    %3136 = vmatprep.subr.mxu0 0.0
    %3137 = vmatpush1.msra.mxu0 0.0
    %3138 = vmatprep.subr.mxu0 0.0
    %3139 = vmatpush1.msra.mxu0 0.0
    %3140 = vmatprep.subr.mxu0 0.0
    %3141 = vmatpush1.msra.mxu0 0.0
    %3142 = vmatprep.subr.mxu0 0.0
    %3143 = vmatpush1.msra.mxu0 0.0
    %3144 = vmatprep.subr.mxu0 0.0
    %3145 = vmatpush1.msra.mxu0 0.0
    %3146 = vmatprep.subr.mxu0 0.0
    %3147 = vmatpush1.msra.mxu0 0.0
    %3148 = vmatprep.subr.mxu0 0.0
    %3149 = vmatpush1.msra.mxu0 0.0
    %3150 = vmatprep.subr.mxu0 0.0
    %3151 = vmatpush1.msra.mxu0 0.0
    %3152 = vmatprep.subr.mxu0 0.0
    %3153 = vmatpush1.msra.mxu0 0.0
    %3154 = vmatprep.subr.mxu0 0.0
    %3155 = vmatpush1.msra.mxu0 0.0
    %3156 = vmatprep.subr.mxu0 0.0
    %3157 = vmatpush1.msra.mxu0 0.0
    %3158 = vmatprep.subr.mxu0 0.0
    %3159 = vmatpush1.msra.mxu0 0.0
    %3160 = vmatprep.mubr.f32.mxu0 0.0
    %3161 = vmatmul.mubr.f32.gmra.mrb[0].mxu0 %v3094
    %v3162 = vpop.f32.mrb[0].mxu0
    %v3163 = vadd.f32 %v3090, %v3162
    %v3164 = vpop.f32.mrb[0].mxu0
    %3165 = vdwg.mxu0
    %v3166 = vld [vmem:[#allocation17] sm:$0xff]
    %v3167 = vld [vmem:[#allocation17 + $0x8] sm:$0xff]
    %v3169 = vsel %vm3019, %v3014, 0
    %3171 = vmatprep.subr.mxu0 0.0
    %3172 = vmatpush1.msra.mxu0 %v3166
    %3173 = vmatprep.subr.mxu0 0.0
    %3174 = vmatpush1.msra.mxu0 %v3167
    %3175 = vmatprep.subr.mxu0 0.0
    %3176 = vmatpush1.msra.mxu0 0.0
    %3177 = vmatprep.subr.mxu0 0.0
    %3178 = vmatpush1.msra.mxu0 0.0
    %3179 = vmatprep.subr.mxu0 0.0
    %3180 = vmatpush1.msra.mxu0 0.0
    %3181 = vmatprep.subr.mxu0 0.0
    %3182 = vmatpush1.msra.mxu0 0.0
    %3183 = vmatprep.subr.mxu0 0.0
    %3184 = vmatpush1.msra.mxu0 0.0
    %3185 = vmatprep.subr.mxu0 0.0
    %3186 = vmatpush1.msra.mxu0 0.0
    %3187 = vmatprep.subr.mxu0 0.0
    %3188 = vmatpush1.msra.mxu0 0.0
    %3189 = vmatprep.subr.mxu0 0.0
    %3190 = vmatpush1.msra.mxu0 0.0
    %3191 = vmatprep.subr.mxu0 0.0
    %3192 = vmatpush1.msra.mxu0 0.0
    %3193 = vmatprep.subr.mxu0 0.0
    %3194 = vmatpush1.msra.mxu0 0.0
    %3195 = vmatprep.subr.mxu0 0.0
    %3196 = vmatpush1.msra.mxu0 0.0
    %3197 = vmatprep.subr.mxu0 0.0
    %3198 = vmatpush1.msra.mxu0 0.0
    %3199 = vmatprep.subr.mxu0 0.0
    %3200 = vmatpush1.msra.mxu0 0.0
    %3201 = vmatprep.subr.mxu0 0.0
    %3202 = vmatpush1.msra.mxu0 0.0
    %3203 = vmatprep.subr.mxu0 0.0
    %3204 = vmatpush1.msra.mxu0 0.0
    %3205 = vmatprep.subr.mxu0 0.0
    %3206 = vmatpush1.msra.mxu0 0.0
    %3207 = vmatprep.subr.mxu0 0.0
    %3208 = vmatpush1.msra.mxu0 0.0
    %3209 = vmatprep.subr.mxu0 0.0
    %3210 = vmatpush1.msra.mxu0 0.0
    %3211 = vmatprep.subr.mxu0 0.0
    %3212 = vmatpush1.msra.mxu0 0.0
    %3213 = vmatprep.subr.mxu0 0.0
    %3214 = vmatpush1.msra.mxu0 0.0
    %3215 = vmatprep.subr.mxu0 0.0
    %3216 = vmatpush1.msra.mxu0 0.0
    %3217 = vmatprep.subr.mxu0 0.0
    %3218 = vmatpush1.msra.mxu0 0.0
    %3219 = vmatprep.subr.mxu0 0.0
    %3220 = vmatpush1.msra.mxu0 0.0
    %3221 = vmatprep.subr.mxu0 0.0
    %3222 = vmatpush1.msra.mxu0 0.0
    %3223 = vmatprep.subr.mxu0 0.0
    %3224 = vmatpush1.msra.mxu0 0.0
    %3225 = vmatprep.subr.mxu0 0.0
    %3226 = vmatpush1.msra.mxu0 0.0
    %3227 = vmatprep.subr.mxu0 0.0
    %3228 = vmatpush1.msra.mxu0 0.0
    %3229 = vmatprep.subr.mxu0 0.0
    %3230 = vmatpush1.msra.mxu0 0.0
    %3231 = vmatprep.subr.mxu0 0.0
    %3232 = vmatpush1.msra.mxu0 0.0
    %3233 = vmatprep.subr.mxu0 0.0
    %3234 = vmatpush1.msra.mxu0 0.0
    %3235 = vmatprep.mubr.f32.mxu0 0.0
    %3236 = vmatmul.mubr.f32.gmra.mrb[0].mxu0 %v3169
    %v3237 = vpop.f32.mrb[0].mxu0
    %v3238 = vadd.f32 0.0, %v3237
    %v3239 = vpop.f32.mrb[0].mxu0
    %3240 = vdwg.mxu0
    %v3241 = vadd.f32 %v3163, %v3238
    %v3242 = vld [vmem:[#allocation19] sm:$0x1]
    %v3244 = vlaneseq
    %v3245 = vshrl.u32 %v3244, 7
    %v3246 = vsub.s32 0, %v3245
    %v3247 = vrot.slane %v3242, %v3246
    %v3249 = vadd.f32 %v3241, %v3247
    %vm3250 = vcmp.gt.f32.partialorder %v3249, 0.0
    %v3251 = vmin.f32 %v3249, 0.0
    %v3252 = vmul.f32 %v3251, 1.442695
    %v3253 = vpow.pop %v3252
    %v3254 = vsub.f32 %v3253, 1.0
    %v3255 = vsel %vm3250, %v3249, %v3254
    %v3256 = vld [vmem:[#allocation20] sm:$0xff]
    %v3257 = vld [vmem:[#allocation20 + $0x8] sm:$0xff]
    %v3258 = vld [vmem:[#allocation20 + $0x10] sm:$0xff]
    %v3259 = vld [vmem:[#allocation20 + $0x18] sm:$0xff]
    %v3260 = vld [vmem:[#allocation22] sm:$0xff]
    %v3261 = vld [vmem:[#allocation22 + $0x8] sm:$0xff]
    %v3262 = vld [vmem:[#allocation23] sm:$0xff]
    %v3263 = vld [vmem:[#allocation23 + $0x8] sm:$0xff]
    %3264 = vmatprep.subr.mxu0 0.0
    %3265 = vmatpush1.msra.mxu0 %v3262
    %3266 = vmatprep.subr.mxu0 0.0
    %3267 = vmatpush1.msra.mxu0 %v3263
    %3268 = vmatprep.subr.mxu0 0.0
    %3269 = vmatpush1.msra.mxu0 0.0
    %3270 = vmatprep.subr.mxu0 0.0
    %3271 = vmatpush1.msra.mxu0 0.0
    %3272 = vmatprep.subr.mxu0 0.0
    %3273 = vmatpush1.msra.mxu0 0.0
    %3274 = vmatprep.subr.mxu0 0.0
    %3275 = vmatpush1.msra.mxu0 0.0
    %3276 = vmatprep.subr.mxu0 0.0
    %3277 = vmatpush1.msra.mxu0 0.0
    %3278 = vmatprep.subr.mxu0 0.0
    %3279 = vmatpush1.msra.mxu0 0.0
    %3280 = vmatprep.subr.mxu0 0.0
    %3281 = vmatpush1.msra.mxu0 0.0
    %3282 = vmatprep.subr.mxu0 0.0
    %3283 = vmatpush1.msra.mxu0 0.0
    %3284 = vmatprep.subr.mxu0 0.0
    %3285 = vmatpush1.msra.mxu0 0.0
    %3286 = vmatprep.subr.mxu0 0.0
    %3287 = vmatpush1.msra.mxu0 0.0
    %3288 = vmatprep.subr.mxu0 0.0
    %3289 = vmatpush1.msra.mxu0 0.0
    %3290 = vmatprep.subr.mxu0 0.0
    %3291 = vmatpush1.msra.mxu0 0.0
    %3292 = vmatprep.subr.mxu0 0.0
    %3293 = vmatpush1.msra.mxu0 0.0
    %3294 = vmatprep.subr.mxu0 0.0
    %3295 = vmatpush1.msra.mxu0 0.0
    %3296 = vmatprep.subr.mxu0 0.0
    %3297 = vmatpush1.msra.mxu0 0.0
    %3298 = vmatprep.subr.mxu0 0.0
    %3299 = vmatpush1.msra.mxu0 0.0
    %3300 = vmatprep.subr.mxu0 0.0
    %3301 = vmatpush1.msra.mxu0 0.0
    %3302 = vmatprep.subr.mxu0 0.0
    %3303 = vmatpush1.msra.mxu0 0.0
    %3304 = vmatprep.subr.mxu0 0.0
    %3305 = vmatpush1.msra.mxu0 0.0
    %3306 = vmatprep.subr.mxu0 0.0
    %3307 = vmatpush1.msra.mxu0 0.0
    %3308 = vmatprep.subr.mxu0 0.0
    %3309 = vmatpush1.msra.mxu0 0.0
    %3310 = vmatprep.subr.mxu0 0.0
    %3311 = vmatpush1.msra.mxu0 0.0
    %3312 = vmatprep.subr.mxu0 0.0
    %3313 = vmatpush1.msra.mxu0 0.0
    %3314 = vmatprep.subr.mxu0 0.0
    %3315 = vmatpush1.msra.mxu0 0.0
    %3316 = vmatprep.subr.mxu0 0.0
    %3317 = vmatpush1.msra.mxu0 0.0
    %3318 = vmatprep.subr.mxu0 0.0
    %3319 = vmatpush1.msra.mxu0 0.0
    %3320 = vmatprep.subr.mxu0 0.0
    %3321 = vmatpush1.msra.mxu0 0.0
    %3322 = vmatprep.subr.mxu0 0.0
    %3323 = vmatpush1.msra.mxu0 0.0
    %3324 = vmatprep.subr.mxu0 0.0
    %3325 = vmatpush1.msra.mxu0 0.0
    %3326 = vmatprep.subr.mxu0 0.0
    %3327 = vmatpush1.msra.mxu0 0.0
    %3328 = vmatprep.mubr.f32.mxu0 0.0
    %3329 = vmatmul.mubr.f32.gmra.mrb[0].mxu0 %v3021
    %v3330 = vpop.f32.mrb[0].mxu0
    %v3331 = vadd.f32 0.0, %v3330
    %v3332 = vpop.f32.mrb[0].mxu0
    %3333 = vdwg.mxu0
    %3334 = vmatprep.subr.mxu0 0.0
    %3335 = vmatpush1.msra.mxu0 %v3260
    %3336 = vmatprep.subr.mxu0 0.0
    %3337 = vmatpush1.msra.mxu0 %v3261
    %3338 = vmatprep.subr.mxu0 0.0
    %3339 = vmatpush1.msra.mxu0 0.0
    %3340 = vmatprep.subr.mxu0 0.0
    %3341 = vmatpush1.msra.mxu0 0.0
    %3342 = vmatprep.subr.mxu0 0.0
    %3343 = vmatpush1.msra.mxu0 0.0
    %3344 = vmatprep.subr.mxu0 0.0
    %3345 = vmatpush1.msra.mxu0 0.0
    %3346 = vmatprep.subr.mxu0 0.0
    %3347 = vmatpush1.msra.mxu0 0.0
    %3348 = vmatprep.subr.mxu0 0.0
    %3349 = vmatpush1.msra.mxu0 0.0
    %3350 = vmatprep.subr.mxu0 0.0
    %3351 = vmatpush1.msra.mxu0 0.0
    %3352 = vmatprep.subr.mxu0 0.0
    %3353 = vmatpush1.msra.mxu0 0.0
    %3354 = vmatprep.subr.mxu0 0.0
    %3355 = vmatpush1.msra.mxu0 0.0
    %3356 = vmatprep.subr.mxu0 0.0
    %3357 = vmatpush1.msra.mxu0 0.0
    %3358 = vmatprep.subr.mxu0 0.0
    %3359 = vmatpush1.msra.mxu0 0.0
    %3360 = vmatprep.subr.mxu0 0.0
    %3361 = vmatpush1.msra.mxu0 0.0
    %3362 = vmatprep.subr.mxu0 0.0
    %3363 = vmatpush1.msra.mxu0 0.0
    %3364 = vmatprep.subr.mxu0 0.0
    %3365 = vmatpush1.msra.mxu0 0.0
    %3366 = vmatprep.subr.mxu0 0.0
    %3367 = vmatpush1.msra.mxu0 0.0
    %3368 = vmatprep.subr.mxu0 0.0
    %3369 = vmatpush1.msra.mxu0 0.0
    %3370 = vmatprep.subr.mxu0 0.0
    %3371 = vmatpush1.msra.mxu0 0.0
    %3372 = vmatprep.subr.mxu0 0.0
    %3373 = vmatpush1.msra.mxu0 0.0
    %3374 = vmatprep.subr.mxu0 0.0
    %3375 = vmatpush1.msra.mxu0 0.0
    %3376 = vmatprep.subr.mxu0 0.0
    %3377 = vmatpush1.msra.mxu0 0.0
    %3378 = vmatprep.subr.mxu0 0.0
    %3379 = vmatpush1.msra.mxu0 0.0
    %3380 = vmatprep.subr.mxu0 0.0
    %3381 = vmatpush1.msra.mxu0 0.0
    %3382 = vmatprep.subr.mxu0 0.0
    %3383 = vmatpush1.msra.mxu0 0.0
    %3384 = vmatprep.subr.mxu0 0.0
    %3385 = vmatpush1.msra.mxu0 0.0
    %3386 = vmatprep.subr.mxu0 0.0
    %3387 = vmatpush1.msra.mxu0 0.0
    %3388 = vmatprep.subr.mxu0 0.0
    %3389 = vmatpush1.msra.mxu0 0.0
    %3390 = vmatprep.subr.mxu0 0.0
    %3391 = vmatpush1.msra.mxu0 0.0
    %3392 = vmatprep.subr.mxu0 0.0
    %3393 = vmatpush1.msra.mxu0 0.0
    %3394 = vmatprep.subr.mxu0 0.0
    %3395 = vmatpush1.msra.mxu0 0.0
    %3396 = vmatprep.subr.mxu0 0.0
    %3397 = vmatpush1.msra.mxu0 0.0
    %3398 = vmatprep.mubr.f32.mxu0 0.0
    %3399 = vmatmul.mubr.f32.gmra.mrb[0].mxu0 %v3094
    %v3400 = vpop.f32.mrb[0].mxu0
    %v3401 = vadd.f32 %v3331, %v3400
    %v3402 = vpop.f32.mrb[0].mxu0
    %3403 = vdwg.mxu0
    %v3404 = vld [vmem:[#allocation25] sm:$0xff]
    %v3405 = vld [vmem:[#allocation25 + $0x8] sm:$0xff]
    %3406 = vmatprep.subr.mxu0 0.0
    %3407 = vmatpush1.msra.mxu0 %v3404
    %3408 = vmatprep.subr.mxu0 0.0
    %3409 = vmatpush1.msra.mxu0 %v3405
    %3410 = vmatprep.subr.mxu0 0.0
    %3411 = vmatpush1.msra.mxu0 0.0
    %3412 = vmatprep.subr.mxu0 0.0
    %3413 = vmatpush1.msra.mxu0 0.0
    %3414 = vmatprep.subr.mxu0 0.0
    %3415 = vmatpush1.msra.mxu0 0.0
    %3416 = vmatprep.subr.mxu0 0.0
    %3417 = vmatpush1.msra.mxu0 0.0
    %3418 = vmatprep.subr.mxu0 0.0
    %3419 = vmatpush1.msra.mxu0 0.0
    %3420 = vmatprep.subr.mxu0 0.0
    %3421 = vmatpush1.msra.mxu0 0.0
    %3422 = vmatprep.subr.mxu0 0.0
    %3423 = vmatpush1.msra.mxu0 0.0
    %3424 = vmatprep.subr.mxu0 0.0
    %3425 = vmatpush1.msra.mxu0 0.0
    %3426 = vmatprep.subr.mxu0 0.0
    %3427 = vmatpush1.msra.mxu0 0.0
    %3428 = vmatprep.subr.mxu0 0.0
    %3429 = vmatpush1.msra.mxu0 0.0
    %3430 = vmatprep.subr.mxu0 0.0
    %3431 = vmatpush1.msra.mxu0 0.0
    %3432 = vmatprep.subr.mxu0 0.0
    %3433 = vmatpush1.msra.mxu0 0.0
    %3434 = vmatprep.subr.mxu0 0.0
    %3435 = vmatpush1.msra.mxu0 0.0
    %3436 = vmatprep.subr.mxu0 0.0
    %3437 = vmatpush1.msra.mxu0 0.0
    %3438 = vmatprep.subr.mxu0 0.0
    %3439 = vmatpush1.msra.mxu0 0.0
    %3440 = vmatprep.subr.mxu0 0.0
    %3441 = vmatpush1.msra.mxu0 0.0
    %3442 = vmatprep.subr.mxu0 0.0
    %3443 = vmatpush1.msra.mxu0 0.0
    %3444 = vmatprep.subr.mxu0 0.0
    %3445 = vmatpush1.msra.mxu0 0.0
    %3446 = vmatprep.subr.mxu0 0.0
    %3447 = vmatpush1.msra.mxu0 0.0
    %3448 = vmatprep.subr.mxu0 0.0
    %3449 = vmatpush1.msra.mxu0 0.0
    %3450 = vmatprep.subr.mxu0 0.0
    %3451 = vmatpush1.msra.mxu0 0.0
    %3452 = vmatprep.subr.mxu0 0.0
    %3453 = vmatpush1.msra.mxu0 0.0
    %3454 = vmatprep.subr.mxu0 0.0
    %3455 = vmatpush1.msra.mxu0 0.0
    %3456 = vmatprep.subr.mxu0 0.0
    %3457 = vmatpush1.msra.mxu0 0.0
    %3458 = vmatprep.subr.mxu0 0.0
    %3459 = vmatpush1.msra.mxu0 0.0
    %3460 = vmatprep.subr.mxu0 0.0
    %3461 = vmatpush1.msra.mxu0 0.0
    %3462 = vmatprep.subr.mxu0 0.0
    %3463 = vmatpush1.msra.mxu0 0.0
    %3464 = vmatprep.subr.mxu0 0.0
    %3465 = vmatpush1.msra.mxu0 0.0
    %3466 = vmatprep.subr.mxu0 0.0
    %3467 = vmatpush1.msra.mxu0 0.0
    %3468 = vmatprep.subr.mxu0 0.0
    %3469 = vmatpush1.msra.mxu0 0.0
    %3470 = vmatprep.mubr.f32.mxu0 0.0
    %3471 = vmatmul.mubr.f32.gmra.mrb[0].mxu0 %v3169
    %v3472 = vpop.f32.mrb[0].mxu0
    %v3473 = vadd.f32 0.0, %v3472
    %v3474 = vpop.f32.mrb[0].mxu0
    %3475 = vdwg.mxu0
    %v3476 = vadd.f32 %v3401, %v3473
    %v3477 = vld [vmem:[#allocation26] sm:$0x1]
    %v3479 = vlaneseq
    %v3480 = vshrl.u32 %v3479, 7
    %v3481 = vsub.s32 0, %v3480
    %v3482 = vrot.slane %v3477, %v3481
    %v3484 = vadd.f32 %v3476, %v3482
    %vm3485 = vcmask 261120
    %v3487 = vsel %vm3485, %v3255, 0
    %3489 = vmatprep.subr.mxu0 0.0
    %3490 = vmatpush1.msra.mxu0 %v3256
    %3491 = vmatprep.subr.mxu0 0.0
    %3492 = vmatpush1.msra.mxu0 %v3257
    %3493 = vmatprep.subr.mxu0 0.0
    %3494 = vmatpush1.msra.mxu0 %v3258
    %3495 = vmatprep.subr.mxu0 0.0
    %3496 = vmatpush1.msra.mxu0 %v3259
    %3497 = vmatprep.subr.mxu0 0.0
    %3498 = vmatpush1.msra.mxu0 0.0
    %3499 = vmatprep.subr.mxu0 0.0
    %3500 = vmatpush1.msra.mxu0 0.0
    %3501 = vmatprep.subr.mxu0 0.0
    %3502 = vmatpush1.msra.mxu0 0.0
    %3503 = vmatprep.subr.mxu0 0.0
    %3504 = vmatpush1.msra.mxu0 0.0
    %3505 = vmatprep.subr.mxu0 0.0
    %3506 = vmatpush1.msra.mxu0 0.0
    %3507 = vmatprep.subr.mxu0 0.0
    %3508 = vmatpush1.msra.mxu0 0.0
    %3509 = vmatprep.subr.mxu0 0.0
    %3510 = vmatpush1.msra.mxu0 0.0
    %3511 = vmatprep.subr.mxu0 0.0
    %3512 = vmatpush1.msra.mxu0 0.0
    %3513 = vmatprep.subr.mxu0 0.0
    %3514 = vmatpush1.msra.mxu0 0.0
    %3515 = vmatprep.subr.mxu0 0.0
    %3516 = vmatpush1.msra.mxu0 0.0
    %3517 = vmatprep.subr.mxu0 0.0
    %3518 = vmatpush1.msra.mxu0 0.0
    %3519 = vmatprep.subr.mxu0 0.0
    %3520 = vmatpush1.msra.mxu0 0.0
    %3521 = vmatprep.subr.mxu0 0.0
    %3522 = vmatpush1.msra.mxu0 0.0
    %3523 = vmatprep.subr.mxu0 0.0
    %3524 = vmatpush1.msra.mxu0 0.0
    %3525 = vmatprep.subr.mxu0 0.0
    %3526 = vmatpush1.msra.mxu0 0.0
    %3527 = vmatprep.subr.mxu0 0.0
    %3528 = vmatpush1.msra.mxu0 0.0
    %3529 = vmatprep.subr.mxu0 0.0
    %3530 = vmatpush1.msra.mxu0 0.0
    %3531 = vmatprep.subr.mxu0 0.0
    %3532 = vmatpush1.msra.mxu0 0.0
    %3533 = vmatprep.subr.mxu0 0.0
    %3534 = vmatpush1.msra.mxu0 0.0
    %3535 = vmatprep.subr.mxu0 0.0
    %3536 = vmatpush1.msra.mxu0 0.0
    %3537 = vmatprep.subr.mxu0 0.0
    %3538 = vmatpush1.msra.mxu0 0.0
    %3539 = vmatprep.subr.mxu0 0.0
    %3540 = vmatpush1.msra.mxu0 0.0
    %3541 = vmatprep.subr.mxu0 0.0
    %3542 = vmatpush1.msra.mxu0 0.0
    %3543 = vmatprep.subr.mxu0 0.0
    %3544 = vmatpush1.msra.mxu0 0.0
    %3545 = vmatprep.subr.mxu0 0.0
    %3546 = vmatpush1.msra.mxu0 0.0
    %3547 = vmatprep.subr.mxu0 0.0
    %3548 = vmatpush1.msra.mxu0 0.0
    %3549 = vmatprep.subr.mxu0 0.0
    %3550 = vmatpush1.msra.mxu0 0.0
    %3551 = vmatprep.subr.mxu0 0.0
    %3552 = vmatpush1.msra.mxu0 0.0
    %3553 = vmatprep.mubr.f32.mxu0 0.0
    %3554 = vmatmul.mubr.f32.gmra.mrb[0].mxu0 %v3487
    %v3555 = vpop.f32.mrb[0].mxu0
    %v3556 = vadd.f32 %v3484, %v3555
    %v3557 = vpop.f32.mrb[0].mxu0
    %3558 = vdwg.mxu0
    %vm3559 = vcmp.gt.f32.partialorder %v3556, 0.0
    %v3560 = vmin.f32 %v3556, 0.0
    %v3561 = vmul.f32 %v3560, 1.442695
    %v3562 = vpow.pop %v3561
    %v3563 = vsub.f32 %v3562, 1.0
    %v3564 = vsel %vm3559, %v3556, %v3563
    %v3565 = vld [vmem:[#allocation28] sm:$0xff]
    %v3566 = vld [vmem:[#allocation28 + $0x8] sm:$0xff]
    %v3567 = vld [vmem:[#allocation28 + $0x10] sm:$0xff]
    %v3568 = vld [vmem:[#allocation28 + $0x18] sm:$0xff]
    %v3569 = vld [vmem:[#allocation29] sm:$0xff]
    %v3570 = vld [vmem:[#allocation29 + $0x8] sm:$0xff]
    %v3571 = vld [vmem:[#allocation31] sm:$0xff]
    %v3572 = vld [vmem:[#allocation31 + $0x8] sm:$0xff]
    %3573 = vmatprep.subr.mxu0 0.0
    %3574 = vmatpush1.msra.mxu0 %v3571
    %3575 = vmatprep.subr.mxu0 0.0
    %3576 = vmatpush1.msra.mxu0 %v3572
    %3577 = vmatprep.subr.mxu0 0.0
    %3578 = vmatpush1.msra.mxu0 0.0
    %3579 = vmatprep.subr.mxu0 0.0
    %3580 = vmatpush1.msra.mxu0 0.0
    %3581 = vmatprep.subr.mxu0 0.0
    %3582 = vmatpush1.msra.mxu0 0.0
    %3583 = vmatprep.subr.mxu0 0.0
    %3584 = vmatpush1.msra.mxu0 0.0
    %3585 = vmatprep.subr.mxu0 0.0
    %3586 = vmatpush1.msra.mxu0 0.0
    %3587 = vmatprep.subr.mxu0 0.0
    %3588 = vmatpush1.msra.mxu0 0.0
    %3589 = vmatprep.subr.mxu0 0.0
    %3590 = vmatpush1.msra.mxu0 0.0
    %3591 = vmatprep.subr.mxu0 0.0
    %3592 = vmatpush1.msra.mxu0 0.0
    %3593 = vmatprep.subr.mxu0 0.0
    %3594 = vmatpush1.msra.mxu0 0.0
    %3595 = vmatprep.subr.mxu0 0.0
    %3596 = vmatpush1.msra.mxu0 0.0
    %3597 = vmatprep.subr.mxu0 0.0
    %3598 = vmatpush1.msra.mxu0 0.0
    %3599 = vmatprep.subr.mxu0 0.0
    %3600 = vmatpush1.msra.mxu0 0.0
    %3601 = vmatprep.subr.mxu0 0.0
    %3602 = vmatpush1.msra.mxu0 0.0
    %3603 = vmatprep.subr.mxu0 0.0
    %3604 = vmatpush1.msra.mxu0 0.0
    %3605 = vmatprep.subr.mxu0 0.0
    %3606 = vmatpush1.msra.mxu0 0.0
    %3607 = vmatprep.subr.mxu0 0.0
    %3608 = vmatpush1.msra.mxu0 0.0
    %3609 = vmatprep.subr.mxu0 0.0
    %3610 = vmatpush1.msra.mxu0 0.0
    %3611 = vmatprep.subr.mxu0 0.0
    %3612 = vmatpush1.msra.mxu0 0.0
    %3613 = vmatprep.subr.mxu0 0.0
    %3614 = vmatpush1.msra.mxu0 0.0
    %3615 = vmatprep.subr.mxu0 0.0
    %3616 = vmatpush1.msra.mxu0 0.0
    %3617 = vmatprep.subr.mxu0 0.0
    %3618 = vmatpush1.msra.mxu0 0.0
    %3619 = vmatprep.subr.mxu0 0.0
    %3620 = vmatpush1.msra.mxu0 0.0
    %3621 = vmatprep.subr.mxu0 0.0
    %3622 = vmatpush1.msra.mxu0 0.0
    %3623 = vmatprep.subr.mxu0 0.0
    %3624 = vmatpush1.msra.mxu0 0.0
    %3625 = vmatprep.subr.mxu0 0.0
    %3626 = vmatpush1.msra.mxu0 0.0
    %3627 = vmatprep.subr.mxu0 0.0
    %3628 = vmatpush1.msra.mxu0 0.0
    %3629 = vmatprep.subr.mxu0 0.0
    %3630 = vmatpush1.msra.mxu0 0.0
    %3631 = vmatprep.subr.mxu0 0.0
    %3632 = vmatpush1.msra.mxu0 0.0
    %3633 = vmatprep.subr.mxu0 0.0
    %3634 = vmatpush1.msra.mxu0 0.0
    %3635 = vmatprep.subr.mxu0 0.0
    %3636 = vmatpush1.msra.mxu0 0.0
    %3637 = vmatprep.mubr.f32.mxu0 0.0
    %3638 = vmatmul.mubr.f32.gmra.mrb[0].mxu0 %v3021
    %v3639 = vpop.f32.mrb[0].mxu0
    %v3640 = vadd.f32 0.0, %v3639
    %v3641 = vpop.f32.mrb[0].mxu0
    %3642 = vdwg.mxu0
    %3643 = vmatprep.subr.mxu0 0.0
    %3644 = vmatpush1.msra.mxu0 %v3569
    %3645 = vmatprep.subr.mxu0 0.0
    %3646 = vmatpush1.msra.mxu0 %v3570
    %3647 = vmatprep.subr.mxu0 0.0
    %3648 = vmatpush1.msra.mxu0 0.0
    %3649 = vmatprep.subr.mxu0 0.0
    %3650 = vmatpush1.msra.mxu0 0.0
    %3651 = vmatprep.subr.mxu0 0.0
    %3652 = vmatpush1.msra.mxu0 0.0
    %3653 = vmatprep.subr.mxu0 0.0
    %3654 = vmatpush1.msra.mxu0 0.0
    %3655 = vmatprep.subr.mxu0 0.0
    %3656 = vmatpush1.msra.mxu0 0.0
    %3657 = vmatprep.subr.mxu0 0.0
    %3658 = vmatpush1.msra.mxu0 0.0
    %3659 = vmatprep.subr.mxu0 0.0
    %3660 = vmatpush1.msra.mxu0 0.0
    %3661 = vmatprep.subr.mxu0 0.0
    %3662 = vmatpush1.msra.mxu0 0.0
    %3663 = vmatprep.subr.mxu0 0.0
    %3664 = vmatpush1.msra.mxu0 0.0
    %3665 = vmatprep.subr.mxu0 0.0
    %3666 = vmatpush1.msra.mxu0 0.0
    %3667 = vmatprep.subr.mxu0 0.0
    %3668 = vmatpush1.msra.mxu0 0.0
    %3669 = vmatprep.subr.mxu0 0.0
    %3670 = vmatpush1.msra.mxu0 0.0
    %3671 = vmatprep.subr.mxu0 0.0
    %3672 = vmatpush1.msra.mxu0 0.0
    %3673 = vmatprep.subr.mxu0 0.0
    %3674 = vmatpush1.msra.mxu0 0.0
    %3675 = vmatprep.subr.mxu0 0.0
    %3676 = vmatpush1.msra.mxu0 0.0
    %3677 = vmatprep.subr.mxu0 0.0
    %3678 = vmatpush1.msra.mxu0 0.0
    %3679 = vmatprep.subr.mxu0 0.0
    %3680 = vmatpush1.msra.mxu0 0.0
    %3681 = vmatprep.subr.mxu0 0.0
    %3682 = vmatpush1.msra.mxu0 0.0
    %3683 = vmatprep.subr.mxu0 0.0
    %3684 = vmatpush1.msra.mxu0 0.0
    %3685 = vmatprep.subr.mxu0 0.0
    %3686 = vmatpush1.msra.mxu0 0.0
    %3687 = vmatprep.subr.mxu0 0.0
    %3688 = vmatpush1.msra.mxu0 0.0
    %3689 = vmatprep.subr.mxu0 0.0
    %3690 = vmatpush1.msra.mxu0 0.0
    %3691 = vmatprep.subr.mxu0 0.0
    %3692 = vmatpush1.msra.mxu0 0.0
    %3693 = vmatprep.subr.mxu0 0.0
    %3694 = vmatpush1.msra.mxu0 0.0
    %3695 = vmatprep.subr.mxu0 0.0
    %3696 = vmatpush1.msra.mxu0 0.0
    %3697 = vmatprep.subr.mxu0 0.0
    %3698 = vmatpush1.msra.mxu0 0.0
    %3699 = vmatprep.subr.mxu0 0.0
    %3700 = vmatpush1.msra.mxu0 0.0
    %3701 = vmatprep.subr.mxu0 0.0
    %3702 = vmatpush1.msra.mxu0 0.0
    %3703 = vmatprep.subr.mxu0 0.0
    %3704 = vmatpush1.msra.mxu0 0.0
    %3705 = vmatprep.subr.mxu0 0.0
    %3706 = vmatpush1.msra.mxu0 0.0
    %3707 = vmatprep.mubr.f32.mxu0 0.0
    %3708 = vmatmul.mubr.f32.gmra.mrb[0].mxu0 %v3094
    %v3709 = vpop.f32.mrb[0].mxu0
    %v3710 = vadd.f32 %v3640, %v3709
    %v3711 = vpop.f32.mrb[0].mxu0
    %3712 = vdwg.mxu0
    %v3713 = vld [vmem:[#allocation32] sm:$0xff]
    %v3714 = vld [vmem:[#allocation32 + $0x8] sm:$0xff]
    %3715 = vmatprep.subr.mxu0 0.0
    %3716 = vmatpush1.msra.mxu0 %v3713
    %3717 = vmatprep.subr.mxu0 0.0
    %3718 = vmatpush1.msra.mxu0 %v3714
    %3719 = vmatprep.subr.mxu0 0.0
    %3720 = vmatpush1.msra.mxu0 0.0
    %3721 = vmatprep.subr.mxu0 0.0
    %3722 = vmatpush1.msra.mxu0 0.0
    %3723 = vmatprep.subr.mxu0 0.0
    %3724 = vmatpush1.msra.mxu0 0.0
    %3725 = vmatprep.subr.mxu0 0.0
    %3726 = vmatpush1.msra.mxu0 0.0
    %3727 = vmatprep.subr.mxu0 0.0
    %3728 = vmatpush1.msra.mxu0 0.0
    %3729 = vmatprep.subr.mxu0 0.0
    %3730 = vmatpush1.msra.mxu0 0.0
    %3731 = vmatprep.subr.mxu0 0.0
    %3732 = vmatpush1.msra.mxu0 0.0
    %3733 = vmatprep.subr.mxu0 0.0
    %3734 = vmatpush1.msra.mxu0 0.0
    %3735 = vmatprep.subr.mxu0 0.0
    %3736 = vmatpush1.msra.mxu0 0.0
    %3737 = vmatprep.subr.mxu0 0.0
    %3738 = vmatpush1.msra.mxu0 0.0
    %3739 = vmatprep.subr.mxu0 0.0
    %3740 = vmatpush1.msra.mxu0 0.0
    %3741 = vmatprep.subr.mxu0 0.0
    %3742 = vmatpush1.msra.mxu0 0.0
    %3743 = vmatprep.subr.mxu0 0.0
    %3744 = vmatpush1.msra.mxu0 0.0
    %3745 = vmatprep.subr.mxu0 0.0
    %3746 = vmatpush1.msra.mxu0 0.0
    %3747 = vmatprep.subr.mxu0 0.0
    %3748 = vmatpush1.msra.mxu0 0.0
    %3749 = vmatprep.subr.mxu0 0.0
    %3750 = vmatpush1.msra.mxu0 0.0
    %3751 = vmatprep.subr.mxu0 0.0
    %3752 = vmatpush1.msra.mxu0 0.0
    %3753 = vmatprep.subr.mxu0 0.0
    %3754 = vmatpush1.msra.mxu0 0.0
    %3755 = vmatprep.subr.mxu0 0.0
    %3756 = vmatpush1.msra.mxu0 0.0
    %3757 = vmatprep.subr.mxu0 0.0
    %3758 = vmatpush1.msra.mxu0 0.0
    %3759 = vmatprep.subr.mxu0 0.0
    %3760 = vmatpush1.msra.mxu0 0.0
    %3761 = vmatprep.subr.mxu0 0.0
    %3762 = vmatpush1.msra.mxu0 0.0
    %3763 = vmatprep.subr.mxu0 0.0
    %3764 = vmatpush1.msra.mxu0 0.0
    %3765 = vmatprep.subr.mxu0 0.0
    %3766 = vmatpush1.msra.mxu0 0.0
    %3767 = vmatprep.subr.mxu0 0.0
    %3768 = vmatpush1.msra.mxu0 0.0
    %3769 = vmatprep.subr.mxu0 0.0
    %3770 = vmatpush1.msra.mxu0 0.0
    %3771 = vmatprep.subr.mxu0 0.0
    %3772 = vmatpush1.msra.mxu0 0.0
    %3773 = vmatprep.subr.mxu0 0.0
    %3774 = vmatpush1.msra.mxu0 0.0
    %3775 = vmatprep.subr.mxu0 0.0
    %3776 = vmatpush1.msra.mxu0 0.0
    %3777 = vmatprep.subr.mxu0 0.0
    %3778 = vmatpush1.msra.mxu0 0.0
    %3779 = vmatprep.mubr.f32.mxu0 0.0
    %3780 = vmatmul.mubr.f32.gmra.mrb[0].mxu0 %v3169
    %v3781 = vpop.f32.mrb[0].mxu0
    %v3782 = vadd.f32 0.0, %v3781
    %v3783 = vpop.f32.mrb[0].mxu0
    %3784 = vdwg.mxu0
    %v3785 = vadd.f32 %v3710, %v3782
    %v3786 = vld [vmem:[#allocation34] sm:$0x1]
    %v3788 = vlaneseq
    %v3789 = vshrl.u32 %v3788, 7
    %v3790 = vsub.s32 0, %v3789
    %v3791 = vrot.slane %v3786, %v3790
    %v3793 = vadd.f32 %v3785, %v3791
    %v3795 = vsel %vm3485, %v3564, 0
    %3797 = vmatprep.subr.mxu0 0.0
    %3798 = vmatpush1.msra.mxu0 %v3565
    %3799 = vmatprep.subr.mxu0 0.0
    %3800 = vmatpush1.msra.mxu0 %v3566
    %3801 = vmatprep.subr.mxu0 0.0
    %3802 = vmatpush1.msra.mxu0 %v3567
    %3803 = vmatprep.subr.mxu0 0.0
    %3804 = vmatpush1.msra.mxu0 %v3568
    %3805 = vmatprep.subr.mxu0 0.0
    %3806 = vmatpush1.msra.mxu0 0.0
    %3807 = vmatprep.subr.mxu0 0.0
    %3808 = vmatpush1.msra.mxu0 0.0
    %3809 = vmatprep.subr.mxu0 0.0
    %3810 = vmatpush1.msra.mxu0 0.0
    %3811 = vmatprep.subr.mxu0 0.0
    %3812 = vmatpush1.msra.mxu0 0.0
    %3813 = vmatprep.subr.mxu0 0.0
    %3814 = vmatpush1.msra.mxu0 0.0
    %3815 = vmatprep.subr.mxu0 0.0
    %3816 = vmatpush1.msra.mxu0 0.0
    %3817 = vmatprep.subr.mxu0 0.0
    %3818 = vmatpush1.msra.mxu0 0.0
    %3819 = vmatprep.subr.mxu0 0.0
    %3820 = vmatpush1.msra.mxu0 0.0
    %3821 = vmatprep.subr.mxu0 0.0
    %3822 = vmatpush1.msra.mxu0 0.0
    %3823 = vmatprep.subr.mxu0 0.0
    %3824 = vmatpush1.msra.mxu0 0.0
    %3825 = vmatprep.subr.mxu0 0.0
    %3826 = vmatpush1.msra.mxu0 0.0
    %3827 = vmatprep.subr.mxu0 0.0
    %3828 = vmatpush1.msra.mxu0 0.0
    %3829 = vmatprep.subr.mxu0 0.0
    %3830 = vmatpush1.msra.mxu0 0.0
    %3831 = vmatprep.subr.mxu0 0.0
    %3832 = vmatpush1.msra.mxu0 0.0
    %3833 = vmatprep.subr.mxu0 0.0
    %3834 = vmatpush1.msra.mxu0 0.0
    %3835 = vmatprep.subr.mxu0 0.0
    %3836 = vmatpush1.msra.mxu0 0.0
    %3837 = vmatprep.subr.mxu0 0.0
    %3838 = vmatpush1.msra.mxu0 0.0
    %3839 = vmatprep.subr.mxu0 0.0
    %3840 = vmatpush1.msra.mxu0 0.0
    %3841 = vmatprep.subr.mxu0 0.0
    %3842 = vmatpush1.msra.mxu0 0.0
    %3843 = vmatprep.subr.mxu0 0.0
    %3844 = vmatpush1.msra.mxu0 0.0
    %3845 = vmatprep.subr.mxu0 0.0
    %3846 = vmatpush1.msra.mxu0 0.0
    %3847 = vmatprep.subr.mxu0 0.0
    %3848 = vmatpush1.msra.mxu0 0.0
    %3849 = vmatprep.subr.mxu0 0.0
    %3850 = vmatpush1.msra.mxu0 0.0
    %3851 = vmatprep.subr.mxu0 0.0
    %3852 = vmatpush1.msra.mxu0 0.0
    %3853 = vmatprep.subr.mxu0 0.0
    %3854 = vmatpush1.msra.mxu0 0.0
    %3855 = vmatprep.subr.mxu0 0.0
    %3856 = vmatpush1.msra.mxu0 0.0
    %3857 = vmatprep.subr.mxu0 0.0
    %3858 = vmatpush1.msra.mxu0 0.0
    %3859 = vmatprep.subr.mxu0 0.0
    %3860 = vmatpush1.msra.mxu0 0.0
    %3861 = vmatprep.mubr.f32.mxu0 0.0
    %3862 = vmatmul.mubr.f32.gmra.mrb[0].mxu0 %v3795
    %v3863 = vpop.f32.mrb[0].mxu0
    %v3864 = vadd.f32 %v3793, %v3863
    %v3865 = vpop.f32.mrb[0].mxu0
    %3866 = vdwg.mxu0
    %vm3867 = vcmp.gt.f32.partialorder %v3864, 0.0
    %v3868 = vmin.f32 %v3864, 0.0
    %v3869 = vmul.f32 %v3868, 1.442695
    %v3870 = vpow.pop %v3869
    %v3871 = vsub.f32 %v3870, 1.0
    %v3872 = vsel %vm3867, %v3864, %v3871
    %v3873 = vld [vmem:[#allocation35] sm:$0xff]
    %v3874 = vld [vmem:[#allocation35 + $0x8] sm:$0xff]
    %v3875 = vld [vmem:[#allocation35 + $0x10] sm:$0xff]
    %v3876 = vld [vmem:[#allocation35 + $0x18] sm:$0xff]
    %v3877 = vld [vmem:[#allocation37] sm:$0xff]
    %v3878 = vld [vmem:[#allocation37 + $0x8] sm:$0xff]
    %v3879 = vld [vmem:[#allocation38] sm:$0xff]
    %v3880 = vld [vmem:[#allocation38 + $0x8] sm:$0xff]
    %3881 = vmatprep.subr.mxu0 0.0
    %3882 = vmatpush1.msra.mxu0 %v3879
    %3883 = vmatprep.subr.mxu0 0.0
    %3884 = vmatpush1.msra.mxu0 %v3880
    %3885 = vmatprep.subr.mxu0 0.0
    %3886 = vmatpush1.msra.mxu0 0.0
    %3887 = vmatprep.subr.mxu0 0.0
    %3888 = vmatpush1.msra.mxu0 0.0
    %3889 = vmatprep.subr.mxu0 0.0
    %3890 = vmatpush1.msra.mxu0 0.0
    %3891 = vmatprep.subr.mxu0 0.0
    %3892 = vmatpush1.msra.mxu0 0.0
    %3893 = vmatprep.subr.mxu0 0.0
    %3894 = vmatpush1.msra.mxu0 0.0
    %3895 = vmatprep.subr.mxu0 0.0
    %3896 = vmatpush1.msra.mxu0 0.0
    %3897 = vmatprep.subr.mxu0 0.0
    %3898 = vmatpush1.msra.mxu0 0.0
    %3899 = vmatprep.subr.mxu0 0.0
    %3900 = vmatpush1.msra.mxu0 0.0
    %3901 = vmatprep.subr.mxu0 0.0
    %3902 = vmatpush1.msra.mxu0 0.0
    %3903 = vmatprep.subr.mxu0 0.0
    %3904 = vmatpush1.msra.mxu0 0.0
    %3905 = vmatprep.subr.mxu0 0.0
    %3906 = vmatpush1.msra.mxu0 0.0
    %3907 = vmatprep.subr.mxu0 0.0
    %3908 = vmatpush1.msra.mxu0 0.0
    %3909 = vmatprep.subr.mxu0 0.0
    %3910 = vmatpush1.msra.mxu0 0.0
    %3911 = vmatprep.subr.mxu0 0.0
    %3912 = vmatpush1.msra.mxu0 0.0
    %3913 = vmatprep.subr.mxu0 0.0
    %3914 = vmatpush1.msra.mxu0 0.0
    %3915 = vmatprep.subr.mxu0 0.0
    %3916 = vmatpush1.msra.mxu0 0.0
    %3917 = vmatprep.subr.mxu0 0.0
    %3918 = vmatpush1.msra.mxu0 0.0
    %3919 = vmatprep.subr.mxu0 0.0
    %3920 = vmatpush1.msra.mxu0 0.0
    %3921 = vmatprep.subr.mxu0 0.0
    %3922 = vmatpush1.msra.mxu0 0.0
    %3923 = vmatprep.subr.mxu0 0.0
    %3924 = vmatpush1.msra.mxu0 0.0
    %3925 = vmatprep.subr.mxu0 0.0
    %3926 = vmatpush1.msra.mxu0 0.0
    %3927 = vmatprep.subr.mxu0 0.0
    %3928 = vmatpush1.msra.mxu0 0.0
    %3929 = vmatprep.subr.mxu0 0.0
    %3930 = vmatpush1.msra.mxu0 0.0
    %3931 = vmatprep.subr.mxu0 0.0
    %3932 = vmatpush1.msra.mxu0 0.0
    %3933 = vmatprep.subr.mxu0 0.0
    %3934 = vmatpush1.msra.mxu0 0.0
    %3935 = vmatprep.subr.mxu0 0.0
    %3936 = vmatpush1.msra.mxu0 0.0
    %3937 = vmatprep.subr.mxu0 0.0
    %3938 = vmatpush1.msra.mxu0 0.0
    %3939 = vmatprep.subr.mxu0 0.0
    %3940 = vmatpush1.msra.mxu0 0.0
    %3941 = vmatprep.subr.mxu0 0.0
    %3942 = vmatpush1.msra.mxu0 0.0
    %3943 = vmatprep.subr.mxu0 0.0
    %3944 = vmatpush1.msra.mxu0 0.0
    %3945 = vmatprep.mubr.f32.mxu0 0.0
    %3946 = vmatmul.mubr.f32.gmra.mrb[0].mxu0 %v3021
    %v3947 = vpop.f32.mrb[0].mxu0
    %v3948 = vadd.f32 0.0, %v3947
    %v3949 = vpop.f32.mrb[0].mxu0
    %3950 = vdwg.mxu0
    %3951 = vmatprep.subr.mxu0 0.0
    %3952 = vmatpush1.msra.mxu0 %v3877
    %3953 = vmatprep.subr.mxu0 0.0
    %3954 = vmatpush1.msra.mxu0 %v3878
    %3955 = vmatprep.subr.mxu0 0.0
    %3956 = vmatpush1.msra.mxu0 0.0
    %3957 = vmatprep.subr.mxu0 0.0
    %3958 = vmatpush1.msra.mxu0 0.0
    %3959 = vmatprep.subr.mxu0 0.0
    %3960 = vmatpush1.msra.mxu0 0.0
    %3961 = vmatprep.subr.mxu0 0.0
    %3962 = vmatpush1.msra.mxu0 0.0
    %3963 = vmatprep.subr.mxu0 0.0
    %3964 = vmatpush1.msra.mxu0 0.0
    %3965 = vmatprep.subr.mxu0 0.0
    %3966 = vmatpush1.msra.mxu0 0.0
    %3967 = vmatprep.subr.mxu0 0.0
    %3968 = vmatpush1.msra.mxu0 0.0
    %3969 = vmatprep.subr.mxu0 0.0
    %3970 = vmatpush1.msra.mxu0 0.0
    %3971 = vmatprep.subr.mxu0 0.0
    %3972 = vmatpush1.msra.mxu0 0.0
    %3973 = vmatprep.subr.mxu0 0.0
    %3974 = vmatpush1.msra.mxu0 0.0
    %3975 = vmatprep.subr.mxu0 0.0
    %3976 = vmatpush1.msra.mxu0 0.0
    %3977 = vmatprep.subr.mxu0 0.0
    %3978 = vmatpush1.msra.mxu0 0.0
    %3979 = vmatprep.subr.mxu0 0.0
    %3980 = vmatpush1.msra.mxu0 0.0
    %3981 = vmatprep.subr.mxu0 0.0
    %3982 = vmatpush1.msra.mxu0 0.0
    %3983 = vmatprep.subr.mxu0 0.0
    %3984 = vmatpush1.msra.mxu0 0.0
    %3985 = vmatprep.subr.mxu0 0.0
    %3986 = vmatpush1.msra.mxu0 0.0
    %3987 = vmatprep.subr.mxu0 0.0
    %3988 = vmatpush1.msra.mxu0 0.0
    %3989 = vmatprep.subr.mxu0 0.0
    %3990 = vmatpush1.msra.mxu0 0.0
    %3991 = vmatprep.subr.mxu0 0.0
    %3992 = vmatpush1.msra.mxu0 0.0
    %3993 = vmatprep.subr.mxu0 0.0
    %3994 = vmatpush1.msra.mxu0 0.0
    %3995 = vmatprep.subr.mxu0 0.0
    %3996 = vmatpush1.msra.mxu0 0.0
    %3997 = vmatprep.subr.mxu0 0.0
    %3998 = vmatpush1.msra.mxu0 0.0
    %3999 = vmatprep.subr.mxu0 0.0
    %4000 = vmatpush1.msra.mxu0 0.0
    %4001 = vmatprep.subr.mxu0 0.0
    %4002 = vmatpush1.msra.mxu0 0.0
    %4003 = vmatprep.subr.mxu0 0.0
    %4004 = vmatpush1.msra.mxu0 0.0
    %4005 = vmatprep.subr.mxu0 0.0
    %4006 = vmatpush1.msra.mxu0 0.0
    %4007 = vmatprep.subr.mxu0 0.0
    %4008 = vmatpush1.msra.mxu0 0.0
    %4009 = vmatprep.subr.mxu0 0.0
    %4010 = vmatpush1.msra.mxu0 0.0
    %4011 = vmatprep.subr.mxu0 0.0
    %4012 = vmatpush1.msra.mxu0 0.0
    %4013 = vmatprep.subr.mxu0 0.0
    %4014 = vmatpush1.msra.mxu0 0.0
    %4015 = vmatprep.mubr.f32.mxu0 0.0
    %4016 = vmatmul.mubr.f32.gmra.mrb[0].mxu0 %v3094
    %v4017 = vpop.f32.mrb[0].mxu0
    %v4018 = vadd.f32 %v3948, %v4017
    %v4019 = vpop.f32.mrb[0].mxu0
    %4020 = vdwg.mxu0
    %v4021 = vld [vmem:[#allocation40] sm:$0xff]
    %v4022 = vld [vmem:[#allocation40 + $0x8] sm:$0xff]
    %4023 = vmatprep.subr.mxu0 0.0
    %4024 = vmatpush1.msra.mxu0 %v4021
    %4025 = vmatprep.subr.mxu0 0.0
    %4026 = vmatpush1.msra.mxu0 %v4022
    %4027 = vmatprep.subr.mxu0 0.0
    %4028 = vmatpush1.msra.mxu0 0.0
    %4029 = vmatprep.subr.mxu0 0.0
    %4030 = vmatpush1.msra.mxu0 0.0
    %4031 = vmatprep.subr.mxu0 0.0
    %4032 = vmatpush1.msra.mxu0 0.0
    %4033 = vmatprep.subr.mxu0 0.0
    %4034 = vmatpush1.msra.mxu0 0.0
    %4035 = vmatprep.subr.mxu0 0.0
    %4036 = vmatpush1.msra.mxu0 0.0
    %4037 = vmatprep.subr.mxu0 0.0
    %4038 = vmatpush1.msra.mxu0 0.0
    %4039 = vmatprep.subr.mxu0 0.0
    %4040 = vmatpush1.msra.mxu0 0.0
    %4041 = vmatprep.subr.mxu0 0.0
    %4042 = vmatpush1.msra.mxu0 0.0
    %4043 = vmatprep.subr.mxu0 0.0
    %4044 = vmatpush1.msra.mxu0 0.0
    %4045 = vmatprep.subr.mxu0 0.0
    %4046 = vmatpush1.msra.mxu0 0.0
    %4047 = vmatprep.subr.mxu0 0.0
    %4048 = vmatpush1.msra.mxu0 0.0
    %4049 = vmatprep.subr.mxu0 0.0
    %4050 = vmatpush1.msra.mxu0 0.0
    %4051 = vmatprep.subr.mxu0 0.0
    %4052 = vmatpush1.msra.mxu0 0.0
    %4053 = vmatprep.subr.mxu0 0.0
    %4054 = vmatpush1.msra.mxu0 0.0
    %4055 = vmatprep.subr.mxu0 0.0
    %4056 = vmatpush1.msra.mxu0 0.0
    %4057 = vmatprep.subr.mxu0 0.0
    %4058 = vmatpush1.msra.mxu0 0.0
    %4059 = vmatprep.subr.mxu0 0.0
    %4060 = vmatpush1.msra.mxu0 0.0
    %4061 = vmatprep.subr.mxu0 0.0
    %4062 = vmatpush1.msra.mxu0 0.0
    %4063 = vmatprep.subr.mxu0 0.0
    %4064 = vmatpush1.msra.mxu0 0.0
    %4065 = vmatprep.subr.mxu0 0.0
    %4066 = vmatpush1.msra.mxu0 0.0
    %4067 = vmatprep.subr.mxu0 0.0
    %4068 = vmatpush1.msra.mxu0 0.0
    %4069 = vmatprep.subr.mxu0 0.0
    %4070 = vmatpush1.msra.mxu0 0.0
    %4071 = vmatprep.subr.mxu0 0.0
    %4072 = vmatpush1.msra.mxu0 0.0
    %4073 = vmatprep.subr.mxu0 0.0
    %4074 = vmatpush1.msra.mxu0 0.0
    %4075 = vmatprep.subr.mxu0 0.0
    %4076 = vmatpush1.msra.mxu0 0.0
    %4077 = vmatprep.subr.mxu0 0.0
    %4078 = vmatpush1.msra.mxu0 0.0
    %4079 = vmatprep.subr.mxu0 0.0
    %4080 = vmatpush1.msra.mxu0 0.0
    %4081 = vmatprep.subr.mxu0 0.0
    %4082 = vmatpush1.msra.mxu0 0.0
    %4083 = vmatprep.subr.mxu0 0.0
    %4084 = vmatpush1.msra.mxu0 0.0
    %4085 = vmatprep.subr.mxu0 0.0
    %4086 = vmatpush1.msra.mxu0 0.0
    %4087 = vmatprep.mubr.f32.mxu0 0.0
    %4088 = vmatmul.mubr.f32.gmra.mrb[0].mxu0 %v3169
    %v4089 = vpop.f32.mrb[0].mxu0
    %v4090 = vadd.f32 0.0, %v4089
    %v4091 = vpop.f32.mrb[0].mxu0
    %4092 = vdwg.mxu0
    %v4093 = vadd.f32 %v4018, %v4090
    %v4094 = vld [vmem:[#allocation41] sm:$0x1]
    %v4096 = vlaneseq
    %v4097 = vshrl.u32 %v4096, 7
    %v4098 = vsub.s32 0, %v4097
    %v4099 = vrot.slane %v4094, %v4098
    %v4101 = vadd.f32 %v4093, %v4099
    %v4103 = vsel %vm3485, %v3872, 0
    %4105 = vmatprep.subr.mxu0 0.0
    %4106 = vmatpush1.msra.mxu0 %v3873
    %4107 = vmatprep.subr.mxu0 0.0
    %4108 = vmatpush1.msra.mxu0 %v3874
    %4109 = vmatprep.subr.mxu0 0.0
    %4110 = vmatpush1.msra.mxu0 %v3875
    %4111 = vmatprep.subr.mxu0 0.0
    %4112 = vmatpush1.msra.mxu0 %v3876
    %4113 = vmatprep.subr.mxu0 0.0
    %4114 = vmatpush1.msra.mxu0 0.0
    %4115 = vmatprep.subr.mxu0 0.0
    %4116 = vmatpush1.msra.mxu0 0.0
    %4117 = vmatprep.subr.mxu0 0.0
    %4118 = vmatpush1.msra.mxu0 0.0
    %4119 = vmatprep.subr.mxu0 0.0
    %4120 = vmatpush1.msra.mxu0 0.0
    %4121 = vmatprep.subr.mxu0 0.0
    %4122 = vmatpush1.msra.mxu0 0.0
    %4123 = vmatprep.subr.mxu0 0.0
    %4124 = vmatpush1.msra.mxu0 0.0
    %4125 = vmatprep.subr.mxu0 0.0
    %4126 = vmatpush1.msra.mxu0 0.0
    %4127 = vmatprep.subr.mxu0 0.0
    %4128 = vmatpush1.msra.mxu0 0.0
    %4129 = vmatprep.subr.mxu0 0.0
    %4130 = vmatpush1.msra.mxu0 0.0
    %4131 = vmatprep.subr.mxu0 0.0
    %4132 = vmatpush1.msra.mxu0 0.0
    %4133 = vmatprep.subr.mxu0 0.0
    %4134 = vmatpush1.msra.mxu0 0.0
    %4135 = vmatprep.subr.mxu0 0.0
    %4136 = vmatpush1.msra.mxu0 0.0
    %4137 = vmatprep.subr.mxu0 0.0
    %4138 = vmatpush1.msra.mxu0 0.0
    %4139 = vmatprep.subr.mxu0 0.0
    %4140 = vmatpush1.msra.mxu0 0.0
    %4141 = vmatprep.subr.mxu0 0.0
    %4142 = vmatpush1.msra.mxu0 0.0
    %4143 = vmatprep.subr.mxu0 0.0
    %4144 = vmatpush1.msra.mxu0 0.0
    %4145 = vmatprep.subr.mxu0 0.0
    %4146 = vmatpush1.msra.mxu0 0.0
    %4147 = vmatprep.subr.mxu0 0.0
    %4148 = vmatpush1.msra.mxu0 0.0
    %4149 = vmatprep.subr.mxu0 0.0
    %4150 = vmatpush1.msra.mxu0 0.0
    %4151 = vmatprep.subr.mxu0 0.0
    %4152 = vmatpush1.msra.mxu0 0.0
    %4153 = vmatprep.subr.mxu0 0.0
    %4154 = vmatpush1.msra.mxu0 0.0
    %4155 = vmatprep.subr.mxu0 0.0
    %4156 = vmatpush1.msra.mxu0 0.0
    %4157 = vmatprep.subr.mxu0 0.0
    %4158 = vmatpush1.msra.mxu0 0.0
    %4159 = vmatprep.subr.mxu0 0.0
    %4160 = vmatpush1.msra.mxu0 0.0
    %4161 = vmatprep.subr.mxu0 0.0
    %4162 = vmatpush1.msra.mxu0 0.0
    %4163 = vmatprep.subr.mxu0 0.0
    %4164 = vmatpush1.msra.mxu0 0.0
    %4165 = vmatprep.subr.mxu0 0.0
    %4166 = vmatpush1.msra.mxu0 0.0
    %4167 = vmatprep.subr.mxu0 0.0
    %4168 = vmatpush1.msra.mxu0 0.0
    %4169 = vmatprep.mubr.f32.mxu0 0.0
    %4170 = vmatmul.mubr.f32.gmra.mrb[0].mxu0 %v4103
    %v4171 = vpop.f32.mrb[0].mxu0
    %v4172 = vadd.f32 %v4101, %v4171
    %v4173 = vpop.f32.mrb[0].mxu0
    %4174 = vdwg.mxu0
    %vm4175 = vcmp.gt.f32.partialorder %v4172, 0.0
    %v4176 = vmin.f32 %v4172, 0.0
    %v4177 = vmul.f32 %v4176, 1.442695
    %v4178 = vpow.pop %v4177
    %v4179 = vsub.f32 %v4178, 1.0
    %v4180 = vsel %vm4175, %v4172, %v4179
    %v4181 = vld [vmem:[#allocation43] sm:$0x1]
    %v4183 = vlaneseq
    %v4184 = vshrl.u32 %v4183, 7
    %v4185 = vsub.s32 0, %v4184
    %v4186 = vrot.slane %v4181, %v4185
    %v4188 = vmul.f32 %v4180, %v4186
    %vm4189 = vcmask 254976
    %v4190 = vsel %vm4189, %v4188, 0.0
    %4191 = vadd.xlane.f32.xlu0 %v4190
    %v4192 = vpop.xlane.xlu0 %4191
    %v4193 = vld [vmem:[#allocation2] sm:$0x1]
    %v4195 = vlaneseq
    %v4196 = vshrl.u32 %v4195, 7
    %v4197 = vsub.s32 0, %v4196
    %v4198 = vrot.slane %v4193, %v4197
    %v4200 = vadd.f32 %v4192, %v4198
    %vm4201 = vcmask 1024
    %4202 = vst.msk [vmem:[%s59] sm:$0x3] %vm4201, %v4200
    // Predicated region
    $region226: #{tpu_custom_call.1} parent=1 // pred_check
      _
    $region227: #{tpu_custom_call.1} parent=1 // pred_check_branch
      %4204 = sbr.rel (0) target = $region229
    $region228: #{tpu_custom_call.1} parent=1 // pred_region
      _
    $region229: #{tpu_custom_call.1} parent=1 // pred_fallthru
      _
    // Predicated region
    $region230: #{tpu_custom_call.1} parent=1 // pred_check
      _
    $region231: #{tpu_custom_call.1} parent=1 // pred_check_branch
      %4206 = sbr.rel (0) target = $region233
    $region232: #{tpu_custom_call.1} parent=1 // pred_region
      _
    $region233: #{tpu_custom_call.1} parent=1 // pred_fallthru
      _
    %4207 = vsyncpa [#allocation4], 1
    %4208 = vsyncpa [#allocation6], 1
    %4209 = vsyncpa [#allocation9], 1
    %4210 = vsyncpa [#allocation12], 1
    %4211 = vsyncpa [#allocation15], 1
    %4212 = vsyncpa [#allocation18], 1
    %4213 = vsyncpa [#allocation21], 1
    %4214 = vsyncpa [#allocation24], 1
    %4215 = vsyncpa [#allocation27], 1
    %4216 = vsyncpa [#allocation30], 1
    %4217 = vsyncpa [#allocation33], 1
    %4218 = vsyncpa [#allocation36], 1
    %4219 = vsyncpa [#allocation39], 1
    %4220 = vsyncpa [#allocation42], 1

</llo_original>
